<compile_context>
chip_gen: v7x
topology: tpu7x:2x2x1
jax: 0.10.0
libtpu: 0.0.40
codegen_flags: <defaults>
</compile_context>

<pallas_src>
import functools

import jax
import jax.numpy as jnp
import numpy as np
from jax import lax
from jax.experimental import pallas as pl
from jax.experimental.pallas import tpu as pltpu

BN_EPS = 1e-5


def _vmem_limit_bytes():
  """Generation-aware scoped-VMEM limit (~85% of capacity), safe fallback."""
  try:
    cap = int(pltpu.get_tpu_info().vmem_capacity_bytes)
  except Exception:
    cap = 0
  if cap <= 0:
    return 48 * 1024 * 1024          # conservative default (fits every gen)
  return min(int(cap * 0.85), 110 * 1024 * 1024)


def _residual_block_kernel(
    x_ref,      # (C, M)    f32  input, M = N*H*W on lanes
    mask_ref,   # (4, M)    bf16 edge validity: [top, bottom, left, right]
    w1_ref,     # (9, C, C) bf16 conv1 weight, per-tap (C_out, C_in)
    g1_ref,     # (C, 1)    f32  bn1 gamma
    be1_ref,    # (C, 1)    f32  bn1 beta
    a_ref,      # (1,)      f32  PReLU alpha (SMEM)
    w2_ref,     # (9, C, C) bf16 conv2 weight
    g2_ref,     # (C, 1)    f32  bn2 gamma
    be2_ref,    # (C, 1)    f32  bn2 beta
    out_ref,    # (C, M)    f32  output (lane-dense)
    pad_scr,    # (C, P)    bf16 scratch: flat conv input with a 1-px halo
    *, width, lpad):
  C, M = x_ref.shape
  P = pad_scr.shape[1]
  inv_m = 1.0 / M

  # Per-tap boundary masks (exact 0/1 in bf16), combined once, reused by both
  # convs.  None == all-valid (center tap, no multiply).
  m = mask_ref[...]                                      # (4, M) bf16
  top, bot, left, right = m[0:1, :], m[1:2, :], m[2:3, :], m[3:4, :]
  tap_masks = [top * left, top,  top * right,
               left,       None, right,
               bot * left, bot,  bot * right]

  def conv3x3(w_ref):
    # pad_scr[:, lpad:lpad+M] already holds the conv input (bf16); halo lanes
    # are zero.  Nine accumulating (C,C)@(C,M) MXU matmuls straight from
    # shifted lane-offset views — no im2col buffer; the 0/1 mask is fused
    # with the bf16 operand (bit-exact).
    acc = None
    for t in range(9):
      dy, dx = t // 3 - 1, t % 3 - 1
      start = lpad + dy * width + dx                     # static lane offset
      patch = pad_scr[:, start:start + M]                # (C, M) bf16
      if tap_masks[t] is not None:
        patch = patch * tap_masks[t]
      part = jnp.dot(w_ref[t], patch,                    # (C, C) @ (C, M)
                     preferred_element_type=jnp.float32)
      acc = part if acc is None else acc + part
    return acc                                           # (C, M) f32

  def batchnorm(y, g_ref, be_ref):
    # Training-mode BatchNorm2d, single-pass biased batch statistics:
    # var = E[y^2] - mean^2 (f32 accumulation; activations are O(1), well
    # inside tolerance), folded into one per-channel scale/shift.
    s1 = jnp.sum(y, axis=1, keepdims=True) * inv_m                 # mean
    s2 = jnp.sum(y * y, axis=1, keepdims=True) * inv_m             # E[y^2]
    var = jnp.maximum(s2 - s1 * s1, 0.0)
    scale = g_ref[...] * lax.rsqrt(var + BN_EPS)
    shift = be_ref[...] - s1 * scale
    return y * scale + shift

  # Zero only the halo borders (once, aligned 128-lane stores); the interior
  # is written exactly once per conv below.
  pad_scr[:, :lpad] = jnp.zeros((C, lpad), jnp.bfloat16)
  pad_scr[:, lpad + M:] = jnp.zeros((C, P - lpad - M), jnp.bfloat16)

  # conv1 -> bn1 -> PReLU   (conv bias omitted: cancelled exactly by BN mean)
  x = x_ref[...]
  pad_scr[:, lpad:lpad + M] = x.astype(jnp.bfloat16)
  y = batchnorm(conv3x3(w1_ref), g1_ref, be1_ref)
  alpha = a_ref[0]                                       # scalar from SMEM
  y = jnp.where(y >= 0, y, alpha * y)

  # conv2 -> bn2
  pad_scr[:, lpad:lpad + M] = y.astype(jnp.bfloat16)
  y = batchnorm(conv3x3(w2_ref), g2_ref, be2_ref)

  # skip connection (lane-dense store, M a multiple of 128)
  out_ref[...] = x + y


def _edge_masks(N, H, W):
  """(4, N*H*W) bf16 validity masks [y>0, y<H-1, x>0, x<W-1], exact 0/1."""
  yy = np.broadcast_to(np.arange(H).reshape(1, H, 1), (N, H, W)).reshape(-1)
  xx = np.broadcast_to(np.arange(W).reshape(1, 1, W), (N, H, W)).reshape(-1)
  m = np.stack([yy > 0, yy < H - 1, xx > 0, xx < W - 1]).astype(np.float32)
  return jnp.asarray(m, dtype=jnp.bfloat16)


def residual_block(x_nchw, params):
  """Fused ResidualBlock forward. Input/output are NCHW (PyTorch layout)."""
  (w1, b1, g1, be1, a, w2, b2, g2, be2) = params
  del b1, b2  # conv biases are mathematically dead under training-mode BN
  N, C, H, W = x_nchw.shape
  M = N * H * W
  lpad = ((W + 1 + 127) // 128) * 128      # aligned left halo (>= W+1)
  rpad = lpad                              # aligned right halo
  P = lpad + M + rpad

  vmem_limit = _vmem_limit_bytes()

  # VMEM budget guard for the single fused pass (BN needs the whole batch):
  # f32 activation temporaries, bf16 halo + masks + weights, plus headroom
  # for Mosaic internal scratch.
  est_bytes = (4 * C * M * 6          # x, out, conv acc / BN temporaries (f32)
               + 2 * C * P            # bf16 halo scratch
               + 2 * M * 12           # bf16 edge + combined tap masks
               + 2 * 2 * 9 * C * C    # bf16 per-tap weights
               + (4 << 20))           # Mosaic internal / pipelining headroom
  if est_bytes > vmem_limit:
    # TODO(synk): switch to the row-tiled multi-pass grid described above.
    raise NotImplementedError(
        "activation working set too large for the single fused-pass kernel")

  # NCHW -> (C, M): channels on sublanes, flattened N*H*W on lanes.
  # (In an NHWC / channel-major-resident model these transposes disappear.)
  x_cm = jnp.transpose(x_nchw, (1, 0, 2, 3)).reshape(C, M).astype(jnp.float32)

  # 3x3 HWIO weights -> (9, C_out, C_in) per-tap matmul form, bf16 for MXU.
  w1_taps = jnp.transpose(w1, (0, 1, 3, 2)).reshape(9, C, C).astype(jnp.bfloat16)
  w2_taps = jnp.transpose(w2, (0, 1, 3, 2)).reshape(9, C, C).astype(jnp.bfloat16)

  masks = _edge_masks(N, H, W)
  g1c, be1c = g1.reshape(C, 1), be1.reshape(C, 1)
  g2c, be2c = g2.reshape(C, 1), be2.reshape(C, 1)
  alpha = a.reshape(1).astype(jnp.float32)

  vmem = pl.BlockSpec(memory_space=pltpu.MemorySpace.VMEM)
  smem = pl.BlockSpec(memory_space=pltpu.MemorySpace.SMEM)

  kernel = functools.partial(_residual_block_kernel, width=W, lpad=lpad)
  out_cm = pl.pallas_call(
      kernel,
      out_shape=jax.ShapeDtypeStruct((C, M), jnp.float32),
      in_specs=[vmem, vmem, vmem, vmem, vmem, smem, vmem, vmem, vmem],
      out_specs=vmem,
      scratch_shapes=[pltpu.VMEM((C, P), jnp.bfloat16)],   # flat halo buffer
      compiler_params=pltpu.CompilerParams(vmem_limit_bytes=vmem_limit),
  )(x_cm, masks, w1_taps, g1c, be1c, alpha, w2_taps, g2c, be2c)

  return jnp.transpose(out_cm.reshape(C, N, H, W), (1, 0, 2, 3))


def make_params(key, channels):
  """Deterministic synthetic parameters (shapes match the PyTorch module)."""
  ks = jax.random.split(key, 8)
  C = channels
  w1 = 0.1 * jax.random.normal(ks[0], (3, 3, C, C), jnp.float32)   # HWIO
  b1 = 0.05 * jax.random.normal(ks[1], (C,), jnp.float32)
  g1 = 1.0 + 0.1 * jax.random.normal(ks[2], (C,), jnp.float32)
  be1 = 0.1 * jax.random.normal(ks[3], (C,), jnp.float32)
  a = jnp.full((1,), 0.25, jnp.float32)                            # nn.PReLU()
  w2 = 0.1 * jax.random.normal(ks[4], (3, 3, C, C), jnp.float32)
  b2 = 0.05 * jax.random.normal(ks[5], (C,), jnp.float32)
  g2 = 1.0 + 0.1 * jax.random.normal(ks[6], (C,), jnp.float32)
  be2 = 0.1 * jax.random.normal(ks[7], (C,), jnp.float32)
  return (w1, b1, g1, be1, a, w2, b2, g2, be2)


def reference_forward(x_nchw, params):
  """Pure-JAX reference (same math; convs also use bf16 MXU inputs)."""
  (w1, b1, g1, be1, a, w2, b2, g2, be2) = params
  x = jnp.transpose(x_nchw, (0, 2, 3, 1)).astype(jnp.float32)      # NHWC

  def conv(y, w, b):
    out = lax.conv_general_dilated(
        y.astype(jnp.bfloat16), w.astype(jnp.bfloat16),
        window_strides=(1, 1), padding="SAME",
        dimension_numbers=("NHWC", "HWIO", "NHWC"),
        preferred_element_type=jnp.float32)
    return out + b.reshape(1, 1, 1, -1)

  def bn(y, g, be):
    mean = jnp.mean(y, axis=(0, 1, 2), keepdims=True)
    var = jnp.mean(jnp.square(y - mean), axis=(0, 1, 2), keepdims=True)
    return (y - mean) * lax.rsqrt(var + BN_EPS) * g.reshape(1, 1, 1, -1) \
        + be.reshape(1, 1, 1, -1)

  r = conv(x, w1, b1)
  r = bn(r, g1, be1)
  r = jnp.where(r >= 0, r, a[0] * r)
  r = conv(r, w2, b2)
  r = bn(r, g2, be2)
  return jnp.transpose(x + r, (0, 3, 1, 2))


if __name__ == "__main__":
  key = jax.random.PRNGKey(0)
  kx, kp = jax.random.split(key)

  # TODO(synk): benchmark/tune at the production C=64 shape; the C=4 test
  # shape is correctness-only (per-call overhead dominates, sublanes padded).
  N, C, H, W = 2, 4, 16, 16
  x = jax.random.normal(kx, (N, C, H, W), jnp.float32)   # NCHW, PyTorch-style
  params = make_params(kp, C)

  out = jax.block_until_ready(residual_block(x, params))
  ref = jax.block_until_ready(reference_forward(x, params))

  # Tolerance covers bf16 MXU inputs (f32 accumulation); real bugs are O(1).
  np.testing.assert_allclose(np.asarray(out), np.asarray(ref),
                             atol=5e-3, rtol=5e-3)
  assert out.shape == (N, C, H, W)
  print("KERNEL_OK")
</pallas_src>

<mosaic_0001>
module attributes {stable_mosaic.version = 11 : i64} {
  func.func @_residual_block_kernel(%arg0: memref<4x512xf32, #tpu.memory_space<vmem>>, %arg1: memref<4x512xbf16, #tpu.memory_space<vmem>>, %arg2: memref<9x4x4xbf16, #tpu.memory_space<vmem>>, %arg3: memref<4x1xf32, #tpu.memory_space<vmem>>, %arg4: memref<4x1xf32, #tpu.memory_space<vmem>>, %arg5: memref<1xf32, #tpu.memory_space<smem>>, %arg6: memref<9x4x4xbf16, #tpu.memory_space<vmem>>, %arg7: memref<4x1xf32, #tpu.memory_space<vmem>>, %arg8: memref<4x1xf32, #tpu.memory_space<vmem>>, %arg9: memref<4x512xf32, #tpu.memory_space<vmem>>, %arg10: memref<4x768xbf16, #tpu.memory_space<vmem>>) attributes {dimension_semantics = [], scalar_prefetch = 0 : i64, scratch_operands = 1 : i64, tpu.core_type = #tpu.core_type<tc>} {
    %c0 = arith.constant 0 : index
    %c0_0 = arith.constant 0 : index
    %0 = vector.load %arg1[%c0, %c0_0] : memref<4x512xbf16, #tpu.memory_space<vmem>>, vector<4x512xbf16>
    %1 = vector.extract_strided_slice %0 {offsets = [0, 0], sizes = [1, 512], strides = [1, 1]} : vector<4x512xbf16> to vector<1x512xbf16>
    %2 = vector.extract_strided_slice %0 {offsets = [1, 0], sizes = [1, 512], strides = [1, 1]} : vector<4x512xbf16> to vector<1x512xbf16>
    %3 = vector.extract_strided_slice %0 {offsets = [2, 0], sizes = [1, 512], strides = [1, 1]} : vector<4x512xbf16> to vector<1x512xbf16>
    %4 = vector.extract_strided_slice %0 {offsets = [3, 0], sizes = [1, 512], strides = [1, 1]} : vector<4x512xbf16> to vector<1x512xbf16>
    %5 = arith.mulf %1, %3 : vector<1x512xbf16>
    %6 = arith.mulf %1, %4 : vector<1x512xbf16>
    %7 = arith.mulf %2, %3 : vector<1x512xbf16>
    %8 = arith.mulf %2, %4 : vector<1x512xbf16>
    %cst = arith.constant 0.000000e+00 : bf16
    %9 = vector.broadcast %cst : bf16 to vector<4x128xbf16>
    %c0_1 = arith.constant 0 : index
    %c0_2 = arith.constant 0 : index
    %10 = vector.load %arg10[%c0_1, %c0_2] : memref<4x768xbf16, #tpu.memory_space<vmem>>, vector<4x128xbf16>
    tpu.vector_store %arg10[%c0_1, %c0_2], %9 {strides = array<i32>} : memref<4x768xbf16, #tpu.memory_space<vmem>>, vector<4x128xbf16>,
    %cst_3 = arith.constant 0.000000e+00 : bf16
    %11 = vector.broadcast %cst_3 : bf16 to vector<4x128xbf16>
    %c0_4 = arith.constant 0 : index
    %c640 = arith.constant 640 : index
    %12 = vector.load %arg10[%c0_4, %c640] : memref<4x768xbf16, #tpu.memory_space<vmem>>, vector<4x128xbf16>
    tpu.vector_store %arg10[%c0_4, %c640], %11 {strides = array<i32>} : memref<4x768xbf16, #tpu.memory_space<vmem>>, vector<4x128xbf16>,
    %c0_5 = arith.constant 0 : index
    %c0_6 = arith.constant 0 : index
    %13 = vector.load %arg0[%c0_5, %c0_6] : memref<4x512xf32, #tpu.memory_space<vmem>>, vector<4x512xf32>
    %14 = arith.truncf %13 : vector<4x512xf32> to vector<4x512xbf16>
    %c0_7 = arith.constant 0 : index
    %c128 = arith.constant 128 : index
    %15 = vector.load %arg10[%c0_7, %c128] : memref<4x768xbf16, #tpu.memory_space<vmem>>, vector<4x512xbf16>
    tpu.vector_store %arg10[%c0_7, %c128], %14 {strides = array<i32>} : memref<4x768xbf16, #tpu.memory_space<vmem>>, vector<4x512xbf16>,
    %c0_8 = arith.constant 0 : index
    %c111 = arith.constant 111 : index
    %16 = vector.load %arg10[%c0_8, %c111] : memref<4x768xbf16, #tpu.memory_space<vmem>>, vector<4x512xbf16>
    %17 = vector.broadcast %5 : vector<1x512xbf16> to vector<4x512xbf16>
    %18 = arith.mulf %16, %17 : vector<4x512xbf16>
    %c0_9 = arith.constant 0 : index
    %c0_10 = arith.constant 0 : index
    %c0_11 = arith.constant 0 : index
    %19 = vector.load %arg2[%c0_9, %c0_10, %c0_11] : memref<9x4x4xbf16, #tpu.memory_space<vmem>>, vector<1x4x4xbf16>
    %20 = vector.shape_cast %19 : vector<1x4x4xbf16> to vector<4x4xbf16>
    %cst_12 = arith.constant dense<0.000000e+00> : vector<4x512xf32>
    %21 = tpu.matmul %20, %18, %cst_12 {dimension_numbers = #tpu.dot_dimension_numbers<[1], [0], [0], [1], [0, 0, 1, 1], [], []>} : vector<4x4xbf16>, vector<4x512xbf16>, vector<4x512xf32> -> vector<4x512xf32>
    %c0_13 = arith.constant 0 : index
    %c112 = arith.constant 112 : index
    %22 = vector.load %arg10[%c0_13, %c112] : memref<4x768xbf16, #tpu.memory_space<vmem>>, vector<4x512xbf16>
    %23 = vector.broadcast %1 : vector<1x512xbf16> to vector<4x512xbf16>
    %24 = arith.mulf %22, %23 : vector<4x512xbf16>
    %c1 = arith.constant 1 : index
    %c0_14 = arith.constant 0 : index
    %c0_15 = arith.constant 0 : index
    %25 = vector.load %arg2[%c1, %c0_14, %c0_15] : memref<9x4x4xbf16, #tpu.memory_space<vmem>>, vector<1x4x4xbf16>
    %26 = vector.shape_cast %25 : vector<1x4x4xbf16> to vector<4x4xbf16>
    %cst_16 = arith.constant dense<0.000000e+00> : vector<4x512xf32>
    %27 = tpu.matmul %26, %24, %cst_16 {dimension_numbers = #tpu.dot_dimension_numbers<[1], [0], [0], [1], [0, 0, 1, 1], [], []>} : vector<4x4xbf16>, vector<4x512xbf16>, vector<4x512xf32> -> vector<4x512xf32>
    %28 = arith.addf %21, %27 : vector<4x512xf32>
    %c0_17 = arith.constant 0 : index
    %c113 = arith.constant 113 : index
    %29 = vector.load %arg10[%c0_17, %c113] : memref<4x768xbf16, #tpu.memory_space<vmem>>, vector<4x512xbf16>
    %30 = vector.broadcast %6 : vector<1x512xbf16> to vector<4x512xbf16>
    %31 = arith.mulf %29, %30 : vector<4x512xbf16>
    %c2 = arith.constant 2 : index
    %c0_18 = arith.constant 0 : index
    %c0_19 = arith.constant 0 : index
    %32 = vector.load %arg2[%c2, %c0_18, %c0_19] : memref<9x4x4xbf16, #tpu.memory_space<vmem>>, vector<1x4x4xbf16>
    %33 = vector.shape_cast %32 : vector<1x4x4xbf16> to vector<4x4xbf16>
    %cst_20 = arith.constant dense<0.000000e+00> : vector<4x512xf32>
    %34 = tpu.matmul %33, %31, %cst_20 {dimension_numbers = #tpu.dot_dimension_numbers<[1], [0], [0], [1], [0, 0, 1, 1], [], []>} : vector<4x4xbf16>, vector<4x512xbf16>, vector<4x512xf32> -> vector<4x512xf32>
    %35 = arith.addf %28, %34 : vector<4x512xf32>
    %c0_21 = arith.constant 0 : index
    %c127 = arith.constant 127 : index
    %36 = vector.load %arg10[%c0_21, %c127] : memref<4x768xbf16, #tpu.memory_space<vmem>>, vector<4x512xbf16>
    %37 = vector.broadcast %3 : vector<1x512xbf16> to vector<4x512xbf16>
    %38 = arith.mulf %36, %37 : vector<4x512xbf16>
    %c3 = arith.constant 3 : index
    %c0_22 = arith.constant 0 : index
    %c0_23 = arith.constant 0 : index
    %39 = vector.load %arg2[%c3, %c0_22, %c0_23] : memref<9x4x4xbf16, #tpu.memory_space<vmem>>, vector<1x4x4xbf16>
    %40 = vector.shape_cast %39 : vector<1x4x4xbf16> to vector<4x4xbf16>
    %cst_24 = arith.constant dense<0.000000e+00> : vector<4x512xf32>
    %41 = tpu.matmul %40, %38, %cst_24 {dimension_numbers = #tpu.dot_dimension_numbers<[1], [0], [0], [1], [0, 0, 1, 1], [], []>} : vector<4x4xbf16>, vector<4x512xbf16>, vector<4x512xf32> -> vector<4x512xf32>
    %42 = arith.addf %35, %41 : vector<4x512xf32>
    %c0_25 = arith.constant 0 : index
    %c128_26 = arith.constant 128 : index
    %43 = vector.load %arg10[%c0_25, %c128_26] : memref<4x768xbf16, #tpu.memory_space<vmem>>, vector<4x512xbf16>
    %c4 = arith.constant 4 : index
    %c0_27 = arith.constant 0 : index
    %c0_28 = arith.constant 0 : index
    %44 = vector.load %arg2[%c4, %c0_27, %c0_28] : memref<9x4x4xbf16, #tpu.memory_space<vmem>>, vector<1x4x4xbf16>
    %45 = vector.shape_cast %44 : vector<1x4x4xbf16> to vector<4x4xbf16>
    %cst_29 = arith.constant dense<0.000000e+00> : vector<4x512xf32>
    %46 = tpu.matmul %45, %43, %cst_29 {dimension_numbers = #tpu.dot_dimension_numbers<[1], [0], [0], [1], [0, 0, 1, 1], [], []>} : vector<4x4xbf16>, vector<4x512xbf16>, vector<4x512xf32> -> vector<4x512xf32>
    %47 = arith.addf %42, %46 : vector<4x512xf32>
    %c0_30 = arith.constant 0 : index
    %c129 = arith.constant 129 : index
    %48 = vector.load %arg10[%c0_30, %c129] : memref<4x768xbf16, #tpu.memory_space<vmem>>, vector<4x512xbf16>
    %49 = vector.broadcast %4 : vector<1x512xbf16> to vector<4x512xbf16>
    %50 = arith.mulf %48, %49 : vector<4x512xbf16>
    %c5 = arith.constant 5 : index
    %c0_31 = arith.constant 0 : index
    %c0_32 = arith.constant 0 : index
    %51 = vector.load %arg2[%c5, %c0_31, %c0_32] : memref<9x4x4xbf16, #tpu.memory_space<vmem>>, vector<1x4x4xbf16>
    %52 = vector.shape_cast %51 : vector<1x4x4xbf16> to vector<4x4xbf16>
    %cst_33 = arith.constant dense<0.000000e+00> : vector<4x512xf32>
    %53 = tpu.matmul %52, %50, %cst_33 {dimension_numbers = #tpu.dot_dimension_numbers<[1], [0], [0], [1], [0, 0, 1, 1], [], []>} : vector<4x4xbf16>, vector<4x512xbf16>, vector<4x512xf32> -> vector<4x512xf32>
    %54 = arith.addf %47, %53 : vector<4x512xf32>
    %c0_34 = arith.constant 0 : index
    %c143 = arith.constant 143 : index
    %55 = vector.load %arg10[%c0_34, %c143] : memref<4x768xbf16, #tpu.memory_space<vmem>>, vector<4x512xbf16>
    %56 = vector.broadcast %7 : vector<1x512xbf16> to vector<4x512xbf16>
    %57 = arith.mulf %55, %56 : vector<4x512xbf16>
    %c6 = arith.constant 6 : index
    %c0_35 = arith.constant 0 : index
    %c0_36 = arith.constant 0 : index
    %58 = vector.load %arg2[%c6, %c0_35, %c0_36] : memref<9x4x4xbf16, #tpu.memory_space<vmem>>, vector<1x4x4xbf16>
    %59 = vector.shape_cast %58 : vector<1x4x4xbf16> to vector<4x4xbf16>
    %cst_37 = arith.constant dense<0.000000e+00> : vector<4x512xf32>
    %60 = tpu.matmul %59, %57, %cst_37 {dimension_numbers = #tpu.dot_dimension_numbers<[1], [0], [0], [1], [0, 0, 1, 1], [], []>} : vector<4x4xbf16>, vector<4x512xbf16>, vector<4x512xf32> -> vector<4x512xf32>
    %61 = arith.addf %54, %60 : vector<4x512xf32>
    %c0_38 = arith.constant 0 : index
    %c144 = arith.constant 144 : index
    %62 = vector.load %arg10[%c0_38, %c144] : memref<4x768xbf16, #tpu.memory_space<vmem>>, vector<4x512xbf16>
    %63 = vector.broadcast %2 : vector<1x512xbf16> to vector<4x512xbf16>
    %64 = arith.mulf %62, %63 : vector<4x512xbf16>
    %c7 = arith.constant 7 : index
    %c0_39 = arith.constant 0 : index
    %c0_40 = arith.constant 0 : index
    %65 = vector.load %arg2[%c7, %c0_39, %c0_40] : memref<9x4x4xbf16, #tpu.memory_space<vmem>>, vector<1x4x4xbf16>
    %66 = vector.shape_cast %65 : vector<1x4x4xbf16> to vector<4x4xbf16>
    %cst_41 = arith.constant dense<0.000000e+00> : vector<4x512xf32>
    %67 = tpu.matmul %66, %64, %cst_41 {dimension_numbers = #tpu.dot_dimension_numbers<[1], [0], [0], [1], [0, 0, 1, 1], [], []>} : vector<4x4xbf16>, vector<4x512xbf16>, vector<4x512xf32> -> vector<4x512xf32>
    %68 = arith.addf %61, %67 : vector<4x512xf32>
    %c0_42 = arith.constant 0 : index
    %c145 = arith.constant 145 : index
    %69 = vector.load %arg10[%c0_42, %c145] : memref<4x768xbf16, #tpu.memory_space<vmem>>, vector<4x512xbf16>
    %70 = vector.broadcast %8 : vector<1x512xbf16> to vector<4x512xbf16>
    %71 = arith.mulf %69, %70 : vector<4x512xbf16>
    %c8 = arith.constant 8 : index
    %c0_43 = arith.constant 0 : index
    %c0_44 = arith.constant 0 : index
    %72 = vector.load %arg2[%c8, %c0_43, %c0_44] : memref<9x4x4xbf16, #tpu.memory_space<vmem>>, vector<1x4x4xbf16>
    %73 = vector.shape_cast %72 : vector<1x4x4xbf16> to vector<4x4xbf16>
    %cst_45 = arith.constant dense<0.000000e+00> : vector<4x512xf32>
    %74 = tpu.matmul %73, %71, %cst_45 {dimension_numbers = #tpu.dot_dimension_numbers<[1], [0], [0], [1], [0, 0, 1, 1], [], []>} : vector<4x4xbf16>, vector<4x512xbf16>, vector<4x512xf32> -> vector<4x512xf32>
    %75 = arith.addf %68, %74 : vector<4x512xf32>
    %cst_46 = arith.constant dense<0.000000e+00> : vector<4xf32>
    %76 = vector.multi_reduction <add>, %75, %cst_46 [1] : vector<4x512xf32> to vector<4xf32>
    %77 = vector.shape_cast %76 : vector<4xf32> to vector<4x1xf32>
    %cst_47 = arith.constant 0.001953125 : f32
    %78 = vector.broadcast %cst_47 : f32 to vector<4x1xf32>
    %79 = arith.mulf %77, %78 : vector<4x1xf32>
    %80 = arith.mulf %75, %75 : vector<4x512xf32>
    %cst_48 = arith.constant dense<0.000000e+00> : vector<4xf32>
    %81 = vector.multi_reduction <add>, %80, %cst_48 [1] : vector<4x512xf32> to vector<4xf32>
    %82 = vector.shape_cast %81 : vector<4xf32> to vector<4x1xf32>
    %cst_49 = arith.constant 0.001953125 : f32
    %83 = vector.broadcast %cst_49 : f32 to vector<4x1xf32>
    %84 = arith.mulf %82, %83 : vector<4x1xf32>
    %85 = arith.mulf %79, %79 : vector<4x1xf32>
    %86 = arith.subf %84, %85 : vector<4x1xf32>
    %cst_50 = arith.constant 0.000000e+00 : f32
    %87 = vector.broadcast %cst_50 : f32 to vector<4x1xf32>
    %88 = arith.maximumf %86, %87 : vector<4x1xf32>
    %c0_51 = arith.constant 0 : index
    %c0_52 = arith.constant 0 : index
    %89 = vector.load %arg3[%c0_51, %c0_52] : memref<4x1xf32, #tpu.memory_space<vmem>>, vector<4x1xf32>
    %cst_53 = arith.constant 9.99999974E-6 : f32
    %90 = vector.broadcast %cst_53 : f32 to vector<4x1xf32>
    %91 = arith.addf %88, %90 : vector<4x1xf32>
    %92 = math.rsqrt %91 : vector<4x1xf32>
    %93 = arith.mulf %89, %92 : vector<4x1xf32>
    %c0_54 = arith.constant 0 : index
    %c0_55 = arith.constant 0 : index
    %94 = vector.load %arg4[%c0_54, %c0_55] : memref<4x1xf32, #tpu.memory_space<vmem>>, vector<4x1xf32>
    %95 = arith.mulf %79, %93 : vector<4x1xf32>
    %96 = arith.subf %94, %95 : vector<4x1xf32>
    %97 = vector.broadcast %93 : vector<4x1xf32> to vector<4x512xf32>
    %98 = arith.mulf %75, %97 : vector<4x512xf32>
    %99 = vector.broadcast %96 : vector<4x1xf32> to vector<4x512xf32>
    %100 = arith.addf %98, %99 : vector<4x512xf32>
    %c0_56 = arith.constant 0 : index
    %101 = memref.load %arg5[%c0_56] : memref<1xf32, #tpu.memory_space<smem>>
    %cst_57 = arith.constant 0.000000e+00 : f32
    %102 = vector.broadcast %cst_57 : f32 to vector<4x512xf32>
    %103 = arith.cmpf oge, %100, %102 : vector<4x512xf32>
    %104 = vector.broadcast %101 : f32 to vector<4x512xf32>
    %105 = arith.mulf %104, %100 : vector<4x512xf32>
    %106 = arith.select %103, %100, %105 : vector<4x512xi1>, vector<4x512xf32>
    %107 = arith.truncf %106 : vector<4x512xf32> to vector<4x512xbf16>
    %c0_58 = arith.constant 0 : index
    %c128_59 = arith.constant 128 : index
    %108 = vector.load %arg10[%c0_58, %c128_59] : memref<4x768xbf16, #tpu.memory_space<vmem>>, vector<4x512xbf16>
    tpu.vector_store %arg10[%c0_58, %c128_59], %107 {strides = array<i32>} : memref<4x768xbf16, #tpu.memory_space<vmem>>, vector<4x512xbf16>,
    %c0_60 = arith.constant 0 : index
    %c111_61 = arith.constant 111 : index
    %109 = vector.load %arg10[%c0_60, %c111_61] : memref<4x768xbf16, #tpu.memory_space<vmem>>, vector<4x512xbf16>
    %110 = vector.broadcast %5 : vector<1x512xbf16> to vector<4x512xbf16>
    %111 = arith.mulf %109, %110 : vector<4x512xbf16>
    %c0_62 = arith.constant 0 : index
    %c0_63 = arith.constant 0 : index
    %c0_64 = arith.constant 0 : index
    %112 = vector.load %arg6[%c0_62, %c0_63, %c0_64] : memref<9x4x4xbf16, #tpu.memory_space<vmem>>, vector<1x4x4xbf16>
    %113 = vector.shape_cast %112 : vector<1x4x4xbf16> to vector<4x4xbf16>
    %cst_65 = arith.constant dense<0.000000e+00> : vector<4x512xf32>
    %114 = tpu.matmul %113, %111, %cst_65 {dimension_numbers = #tpu.dot_dimension_numbers<[1], [0], [0], [1], [0, 0, 1, 1], [], []>} : vector<4x4xbf16>, vector<4x512xbf16>, vector<4x512xf32> -> vector<4x512xf32>
    %c0_66 = arith.constant 0 : index
    %c112_67 = arith.constant 112 : index
    %115 = vector.load %arg10[%c0_66, %c112_67] : memref<4x768xbf16, #tpu.memory_space<vmem>>, vector<4x512xbf16>
    %116 = vector.broadcast %1 : vector<1x512xbf16> to vector<4x512xbf16>
    %117 = arith.mulf %115, %116 : vector<4x512xbf16>
    %c1_68 = arith.constant 1 : index
    %c0_69 = arith.constant 0 : index
    %c0_70 = arith.constant 0 : index
    %118 = vector.load %arg6[%c1_68, %c0_69, %c0_70] : memref<9x4x4xbf16, #tpu.memory_space<vmem>>, vector<1x4x4xbf16>
    %119 = vector.shape_cast %118 : vector<1x4x4xbf16> to vector<4x4xbf16>
    %cst_71 = arith.constant dense<0.000000e+00> : vector<4x512xf32>
    %120 = tpu.matmul %119, %117, %cst_71 {dimension_numbers = #tpu.dot_dimension_numbers<[1], [0], [0], [1], [0, 0, 1, 1], [], []>} : vector<4x4xbf16>, vector<4x512xbf16>, vector<4x512xf32> -> vector<4x512xf32>
    %121 = arith.addf %114, %120 : vector<4x512xf32>
    %c0_72 = arith.constant 0 : index
    %c113_73 = arith.constant 113 : index
    %122 = vector.load %arg10[%c0_72, %c113_73] : memref<4x768xbf16, #tpu.memory_space<vmem>>, vector<4x512xbf16>
    %123 = vector.broadcast %6 : vector<1x512xbf16> to vector<4x512xbf16>
    %124 = arith.mulf %122, %123 : vector<4x512xbf16>
    %c2_74 = arith.constant 2 : index
    %c0_75 = arith.constant 0 : index
    %c0_76 = arith.constant 0 : index
    %125 = vector.load %arg6[%c2_74, %c0_75, %c0_76] : memref<9x4x4xbf16, #tpu.memory_space<vmem>>, vector<1x4x4xbf16>
    %126 = vector.shape_cast %125 : vector<1x4x4xbf16> to vector<4x4xbf16>
    %cst_77 = arith.constant dense<0.000000e+00> : vector<4x512xf32>
    %127 = tpu.matmul %126, %124, %cst_77 {dimension_numbers = #tpu.dot_dimension_numbers<[1], [0], [0], [1], [0, 0, 1, 1], [], []>} : vector<4x4xbf16>, vector<4x512xbf16>, vector<4x512xf32> -> vector<4x512xf32>
    %128 = arith.addf %121, %127 : vector<4x512xf32>
    %c0_78 = arith.constant 0 : index
    %c127_79 = arith.constant 127 : index
    %129 = vector.load %arg10[%c0_78, %c127_79] : memref<4x768xbf16, #tpu.memory_space<vmem>>, vector<4x512xbf16>
    %130 = vector.broadcast %3 : vector<1x512xbf16> to vector<4x512xbf16>
    %131 = arith.mulf %129, %130 : vector<4x512xbf16>
    %c3_80 = arith.constant 3 : index
    %c0_81 = arith.constant 0 : index
    %c0_82 = arith.constant 0 : index
    %132 = vector.load %arg6[%c3_80, %c0_81, %c0_82] : memref<9x4x4xbf16, #tpu.memory_space<vmem>>, vector<1x4x4xbf16>
    %133 = vector.shape_cast %132 : vector<1x4x4xbf16> to vector<4x4xbf16>
    %cst_83 = arith.constant dense<0.000000e+00> : vector<4x512xf32>
    %134 = tpu.matmul %133, %131, %cst_83 {dimension_numbers = #tpu.dot_dimension_numbers<[1], [0], [0], [1], [0, 0, 1, 1], [], []>} : vector<4x4xbf16>, vector<4x512xbf16>, vector<4x512xf32> -> vector<4x512xf32>
    %135 = arith.addf %128, %134 : vector<4x512xf32>
    %c0_84 = arith.constant 0 : index
    %c128_85 = arith.constant 128 : index
    %136 = vector.load %arg10[%c0_84, %c128_85] : memref<4x768xbf16, #tpu.memory_space<vmem>>, vector<4x512xbf16>
    %c4_86 = arith.constant 4 : index
    %c0_87 = arith.constant 0 : index
    %c0_88 = arith.constant 0 : index
    %137 = vector.load %arg6[%c4_86, %c0_87, %c0_88] : memref<9x4x4xbf16, #tpu.memory_space<vmem>>, vector<1x4x4xbf16>
    %138 = vector.shape_cast %137 : vector<1x4x4xbf16> to vector<4x4xbf16>
    %cst_89 = arith.constant dense<0.000000e+00> : vector<4x512xf32>
    %139 = tpu.matmul %138, %136, %cst_89 {dimension_numbers = #tpu.dot_dimension_numbers<[1], [0], [0], [1], [0, 0, 1, 1], [], []>} : vector<4x4xbf16>, vector<4x512xbf16>, vector<4x512xf32> -> vector<4x512xf32>
    %140 = arith.addf %135, %139 : vector<4x512xf32>
    %c0_90 = arith.constant 0 : index
    %c129_91 = arith.constant 129 : index
    %141 = vector.load %arg10[%c0_90, %c129_91] : memref<4x768xbf16, #tpu.memory_space<vmem>>, vector<4x512xbf16>
    %142 = vector.broadcast %4 : vector<1x512xbf16> to vector<4x512xbf16>
    %143 = arith.mulf %141, %142 : vector<4x512xbf16>
    %c5_92 = arith.constant 5 : index
    %c0_93 = arith.constant 0 : index
    %c0_94 = arith.constant 0 : index
    %144 = vector.load %arg6[%c5_92, %c0_93, %c0_94] : memref<9x4x4xbf16, #tpu.memory_space<vmem>>, vector<1x4x4xbf16>
    %145 = vector.shape_cast %144 : vector<1x4x4xbf16> to vector<4x4xbf16>
    %cst_95 = arith.constant dense<0.000000e+00> : vector<4x512xf32>
    %146 = tpu.matmul %145, %143, %cst_95 {dimension_numbers = #tpu.dot_dimension_numbers<[1], [0], [0], [1], [0, 0, 1, 1], [], []>} : vector<4x4xbf16>, vector<4x512xbf16>, vector<4x512xf32> -> vector<4x512xf32>
    %147 = arith.addf %140, %146 : vector<4x512xf32>
    %c0_96 = arith.constant 0 : index
    %c143_97 = arith.constant 143 : index
    %148 = vector.load %arg10[%c0_96, %c143_97] : memref<4x768xbf16, #tpu.memory_space<vmem>>, vector<4x512xbf16>
    %149 = vector.broadcast %7 : vector<1x512xbf16> to vector<4x512xbf16>
    %150 = arith.mulf %148, %149 : vector<4x512xbf16>
    %c6_98 = arith.constant 6 : index
    %c0_99 = arith.constant 0 : index
    %c0_100 = arith.constant 0 : index
    %151 = vector.load %arg6[%c6_98, %c0_99, %c0_100] : memref<9x4x4xbf16, #tpu.memory_space<vmem>>, vector<1x4x4xbf16>
    %152 = vector.shape_cast %151 : vector<1x4x4xbf16> to vector<4x4xbf16>
    %cst_101 = arith.constant dense<0.000000e+00> : vector<4x512xf32>
    %153 = tpu.matmul %152, %150, %cst_101 {dimension_numbers = #tpu.dot_dimension_numbers<[1], [0], [0], [1], [0, 0, 1, 1], [], []>} : vector<4x4xbf16>, vector<4x512xbf16>, vector<4x512xf32> -> vector<4x512xf32>
    %154 = arith.addf %147, %153 : vector<4x512xf32>
    %c0_102 = arith.constant 0 : index
    %c144_103 = arith.constant 144 : index
    %155 = vector.load %arg10[%c0_102, %c144_103] : memref<4x768xbf16, #tpu.memory_space<vmem>>, vector<4x512xbf16>
    %156 = vector.broadcast %2 : vector<1x512xbf16> to vector<4x512xbf16>
    %157 = arith.mulf %155, %156 : vector<4x512xbf16>
    %c7_104 = arith.constant 7 : index
    %c0_105 = arith.constant 0 : index
    %c0_106 = arith.constant 0 : index
    %158 = vector.load %arg6[%c7_104, %c0_105, %c0_106] : memref<9x4x4xbf16, #tpu.memory_space<vmem>>, vector<1x4x4xbf16>
    %159 = vector.shape_cast %158 : vector<1x4x4xbf16> to vector<4x4xbf16>
    %cst_107 = arith.constant dense<0.000000e+00> : vector<4x512xf32>
    %160 = tpu.matmul %159, %157, %cst_107 {dimension_numbers = #tpu.dot_dimension_numbers<[1], [0], [0], [1], [0, 0, 1, 1], [], []>} : vector<4x4xbf16>, vector<4x512xbf16>, vector<4x512xf32> -> vector<4x512xf32>
    %161 = arith.addf %154, %160 : vector<4x512xf32>
    %c0_108 = arith.constant 0 : index
    %c145_109 = arith.constant 145 : index
    %162 = vector.load %arg10[%c0_108, %c145_109] : memref<4x768xbf16, #tpu.memory_space<vmem>>, vector<4x512xbf16>
    %163 = vector.broadcast %8 : vector<1x512xbf16> to vector<4x512xbf16>
    %164 = arith.mulf %162, %163 : vector<4x512xbf16>
    %c8_110 = arith.constant 8 : index
    %c0_111 = arith.constant 0 : index
    %c0_112 = arith.constant 0 : index
    %165 = vector.load %arg6[%c8_110, %c0_111, %c0_112] : memref<9x4x4xbf16, #tpu.memory_space<vmem>>, vector<1x4x4xbf16>
    %166 = vector.shape_cast %165 : vector<1x4x4xbf16> to vector<4x4xbf16>
    %cst_113 = arith.constant dense<0.000000e+00> : vector<4x512xf32>
    %167 = tpu.matmul %166, %164, %cst_113 {dimension_numbers = #tpu.dot_dimension_numbers<[1], [0], [0], [1], [0, 0, 1, 1], [], []>} : vector<4x4xbf16>, vector<4x512xbf16>, vector<4x512xf32> -> vector<4x512xf32>
    %168 = arith.addf %161, %167 : vector<4x512xf32>
    %cst_114 = arith.constant dense<0.000000e+00> : vector<4xf32>
    %169 = vector.multi_reduction <add>, %168, %cst_114 [1] : vector<4x512xf32> to vector<4xf32>
    %170 = vector.shape_cast %169 : vector<4xf32> to vector<4x1xf32>
    %cst_115 = arith.constant 0.001953125 : f32
    %171 = vector.broadcast %cst_115 : f32 to vector<4x1xf32>
    %172 = arith.mulf %170, %171 : vector<4x1xf32>
    %173 = arith.mulf %168, %168 : vector<4x512xf32>
    %cst_116 = arith.constant dense<0.000000e+00> : vector<4xf32>
    %174 = vector.multi_reduction <add>, %173, %cst_116 [1] : vector<4x512xf32> to vector<4xf32>
    %175 = vector.shape_cast %174 : vector<4xf32> to vector<4x1xf32>
    %cst_117 = arith.constant 0.001953125 : f32
    %176 = vector.broadcast %cst_117 : f32 to vector<4x1xf32>
    %177 = arith.mulf %175, %176 : vector<4x1xf32>
    %178 = arith.mulf %172, %172 : vector<4x1xf32>
    %179 = arith.subf %177, %178 : vector<4x1xf32>
    %cst_118 = arith.constant 0.000000e+00 : f32
    %180 = vector.broadcast %cst_118 : f32 to vector<4x1xf32>
    %181 = arith.maximumf %179, %180 : vector<4x1xf32>
    %c0_119 = arith.constant 0 : index
    %c0_120 = arith.constant 0 : index
    %182 = vector.load %arg7[%c0_119, %c0_120] : memref<4x1xf32, #tpu.memory_space<vmem>>, vector<4x1xf32>
    %cst_121 = arith.constant 9.99999974E-6 : f32
    %183 = vector.broadcast %cst_121 : f32 to vector<4x1xf32>
    %184 = arith.addf %181, %183 : vector<4x1xf32>
    %185 = math.rsqrt %184 : vector<4x1xf32>
    %186 = arith.mulf %182, %185 : vector<4x1xf32>
    %c0_122 = arith.constant 0 : index
    %c0_123 = arith.constant 0 : index
    %187 = vector.load %arg8[%c0_122, %c0_123] : memref<4x1xf32, #tpu.memory_space<vmem>>, vector<4x1xf32>
    %188 = arith.mulf %172, %186 : vector<4x1xf32>
    %189 = arith.subf %187, %188 : vector<4x1xf32>
    %190 = vector.broadcast %186 : vector<4x1xf32> to vector<4x512xf32>
    %191 = arith.mulf %168, %190 : vector<4x512xf32>
    %192 = vector.broadcast %189 : vector<4x1xf32> to vector<4x512xf32>
    %193 = arith.addf %191, %192 : vector<4x512xf32>
    %194 = arith.addf %13, %193 : vector<4x512xf32>
    %c0_124 = arith.constant 0 : index
    %c0_125 = arith.constant 0 : index
    %195 = vector.load %arg9[%c0_124, %c0_125] : memref<4x512xf32, #tpu.memory_space<vmem>>, vector<4x512xf32>
    tpu.vector_store %arg9[%c0_124, %c0_125], %194 {strides = array<i32>} : memref<4x512xf32, #tpu.memory_space<vmem>>, vector<4x512xf32>,
    return
  }
}

</mosaic_0001>

<llo_original>
// kernel: tpu_custom_call.1
$region0: #{tpu_custom_call.1}
  #allocation0 [shape = 'u32[]', space=smem, size = 0x4, offset = 0x4, fixed_abs, tag = 'smem constant byte address 0x4 - core index']
  #allocation1 [shape = 'u32[144,128]{1,0:T(1,128)}', space=vmem, size = 0x12000, scoped, tag = 'internal scratch']
  #allocation2 [shape = 'bf16[4,768]{1,0:T(4,128)(2,1)}', space=vmem, size = 0x1800, scoped, tag = 'scratch operand']
  #allocation3 [shape = 'f32[1]{0:T(128)S(6)}', space=smem, size = 0x200, scoped, tag = 'scoped memory for tpu_custom_call.1']
  %s0 = inlined_call_operand.vmem [shape: f32[4,512], index: 0, kind: input, shape index: {}]
  %s1 = inlined_call_operand.vmem [shape: bf16[4,512], index: 1, kind: input, shape index: {}]
  %s2 = inlined_call_operand.vmem [shape: bf16[9,4,4], index: 2, kind: input, shape index: {}]
  %s3 = inlined_call_operand.vmem [shape: f32[4,1], index: 3, kind: input, shape index: {}]
  %s4 = inlined_call_operand.vmem [shape: f32[4,1], index: 4, kind: input, shape index: {}]
  %s5 = inlined_call_operand.<no memory space> [shape: f32[1], index: 5, kind: input, shape index: {}]
  %s6 = inlined_call_operand.vmem [shape: bf16[9,4,4], index: 6, kind: input, shape index: {}]
  %s7 = inlined_call_operand.vmem [shape: f32[4,1], index: 7, kind: input, shape index: {}]
  %s8 = inlined_call_operand.vmem [shape: f32[4,1], index: 8, kind: input, shape index: {}]
  %s9 = inlined_call_operand.hbm [shape: f32[4,512], index: 9, kind: output, shape index: {}]
  %s10 = sld [smem:[#allocation0]]
  $region46: #{tpu_custom_call.1} parent=0
    _
  %s12 = ssub.s32 1, %s10
  %s13 = scalar_select 0, %s12, %s10
  %14 = sst [smem:[#allocation3]] %s5
  $region1: #{tpu_custom_call.1} parent=0
    #allocation4 [shape = 'u8[8192]{0}', space=vmem, size = 0x2000, scoped, tag = 'output window, operand 0, single buffered']
    #allocation5 [shape = 's32[1]{0}', space=sflag, size = 0x4, scoped, tag = 'scoped memory for tpu_custom_call.1']
    %15 = vsyncpa [#allocation5], 0
    // Predicated region
    $region2: #{tpu_custom_call.1} parent=1 // pred_check
      _
    $region3: #{tpu_custom_call.1} parent=1 // pred_check_branch
      %17 = sbr.rel (0) target = $region5
    $region4: #{tpu_custom_call.1} parent=1 // pred_region
      _
    $region5: #{tpu_custom_call.1} parent=1 // pred_fallthru
      _
    // Predicated region
    $region6: #{tpu_custom_call.1} parent=1 // pred_check
      _
    $region7: #{tpu_custom_call.1} parent=1 // pred_check_branch
      %19 = sbr.rel (0) target = $region9
    $region8: #{tpu_custom_call.1} parent=1 // pred_region
      _
    $region9: #{tpu_custom_call.1} parent=1 // pred_fallthru
      _
    // Predicated region
    $region10: #{tpu_custom_call.1} parent=1 // pred_check
      _
    $region11: #{tpu_custom_call.1} parent=1 // pred_check_branch
      %21 = sbr.rel (0) target = $region13
    $region12: #{tpu_custom_call.1} parent=1 // pred_region
      _
    $region13: #{tpu_custom_call.1} parent=1 // pred_fallthru
      _
    // Predicated region
    $region14: #{tpu_custom_call.1} parent=1 // pred_check
      _
    $region15: #{tpu_custom_call.1} parent=1 // pred_check_branch
      %23 = sbr.rel (0) target = $region17
    $region16: #{tpu_custom_call.1} parent=1 // pred_region
      _
    $region17: #{tpu_custom_call.1} parent=1 // pred_fallthru
      _
    // Predicated region
    $region18: #{tpu_custom_call.1} parent=1 // pred_check
      _
    $region19: #{tpu_custom_call.1} parent=1 // pred_check_branch
      %25 = sbr.rel (0) target = $region21
    $region20: #{tpu_custom_call.1} parent=1 // pred_region
      _
    $region21: #{tpu_custom_call.1} parent=1 // pred_fallthru
      _
    // Predicated region
    $region22: #{tpu_custom_call.1} parent=1 // pred_check
      _
    $region23: #{tpu_custom_call.1} parent=1 // pred_check_branch
      %27 = sbr.rel (0) target = $region25
    $region24: #{tpu_custom_call.1} parent=1 // pred_region
      _
    $region25: #{tpu_custom_call.1} parent=1 // pred_fallthru
      _
    // Predicated region
    $region26: #{tpu_custom_call.1} parent=1 // pred_check
      _
    $region27: #{tpu_custom_call.1} parent=1 // pred_check_branch
      %29 = sbr.rel (0) target = $region29
    $region28: #{tpu_custom_call.1} parent=1 // pred_region
      _
    $region29: #{tpu_custom_call.1} parent=1 // pred_fallthru
      _
    // Predicated region
    $region30: #{tpu_custom_call.1} parent=1 // pred_check
      _
    $region31: #{tpu_custom_call.1} parent=1 // pred_check_branch
      %31 = sbr.rel (0) target = $region33
    $region32: #{tpu_custom_call.1} parent=1 // pred_region
      _
    $region33: #{tpu_custom_call.1} parent=1 // pred_fallthru
      _
    // Predicated region
    $region34: #{tpu_custom_call.1} parent=1 // pred_check
      _
    $region35: #{tpu_custom_call.1} parent=1 // pred_check_branch
      %33 = sbr.rel (0) target = $region37
    $region36: #{tpu_custom_call.1} parent=1 // pred_region
      _
    $region37: #{tpu_custom_call.1} parent=1 // pred_fallthru
      _
    %v35 = vld [vmem:[%s1] sm:$0xff]
    %v37 = vrot.slane %v35, 7
    %v38 = vrot.slane %v37, 2
    %v40 = vmul.bf16 %v35, %v38
    %v42 = vshrl.u32 %v35, 16
    %v44 = vrot.slane %v42, 7
    %v45 = vrot.slane %v44, 2
    %v47 = vmul.bf16 %v35, %v45
    %v48 = vshll.u32 %v35, 16
    %v50 = vrot.slane %v48, 7
    %v51 = vrot.slane %v50, 2
    %v53 = vmul.bf16 %v35, %v51
    %54 = vst [vmem:[#allocation2] sm:$0x3] 0
    %55 = vst [vmem:[#allocation2 + $0xa] sm:$0x3] 0
    %v56 = vld [vmem:[%s0] sm:$0xff]
    %v57 = vld [vmem:[%s0 + $0x8] sm:$0xff]
    %v60 = vcombine.high %v56, %v56
    %v61 = vcombine.high %v57, %v57
    %v64 = vpack.c.bf16 %v56, %v56
    %v65 = vpack.c.bf16 %v60, %v60
    %v66 = vpack.c.bf16 %v57, %v57
    %v67 = vpack.c.bf16 %v61, %v61
    %v72 = vcombine.low %v64, %v65
    %v73 = vcombine.low %v66, %v67
    %v75 = vunpack.c.l.s4 1983009808
    %v76 = vunpack.c.0.s8 %v75
    %v77 = vlaneseq
    %v78 = vshrl.u32 %v77, 7
    %v79 = vsub.s32 %v76, %v78
    %v80 = vrot.slane %v72, %v79
    %v82 = vunpack.c.l.s4 1983009808
    %v83 = vunpack.c.0.s8 %v82
    %v84 = vlaneseq
    %v85 = vshrl.u32 %v84, 7
    %v86 = vsub.s32 %v83, %v85
    %v87 = vrot.slane %v73, %v86
    %v88 = vcombine.low %v80, %v87
    %90 = vst [vmem:[#allocation2 + $0x2] sm:$0xff] %v88
    %v91 = vld [vmem:[#allocation2] sm:$0xff]
    %v92 = vld [vmem:[#allocation2 + $0x8] sm:$0x3]
    %v94 = vcombine.high %v40, %v40
    %v96 = vunpack.c.l.s4 1983009808
    %v97 = vunpack.c.0.s8 %v96
    %v98 = vlaneseq
    %v99 = vshrl.u32 %v98, 7
    %v100 = vsub.s32 %v97, %v99
    %v101 = vrot.slane %v40, %v100
    %v103 = vunpack.c.l.s4 1983009808
    %v104 = vunpack.c.0.s8 %v103
    %v105 = vlaneseq
    %v106 = vshrl.u32 %v105, 7
    %v107 = vsub.s32 %v104, %v106
    %v108 = vrot.slane %v94, %v107
    %v109 = vcombine.high %v101, %v101
    %v110 = vcombine.high %v108, %v108
    %v112 = vpack.i.b16 %v101, %v101
    %v114 = vlaneseq
    %v115 = vshrl.u32 %v114, 7
    %v116 = vsub.s32 0, %v115
    %v117 = vrot.slane %v112, %v116
    %v119 = vpack.i.b16 %v109, %v109
    %v121 = vlaneseq
    %v122 = vshrl.u32 %v121, 7
    %v123 = vsub.s32 0, %v122
    %v124 = vrot.slane %v119, %v123
    %v126 = vpack.i.b16 %v108, %v108
    %v128 = vlaneseq
    %v129 = vshrl.u32 %v128, 7
    %v130 = vsub.s32 0, %v129
    %v131 = vrot.slane %v126, %v130
    %v133 = vpack.i.b16 %v110, %v110
    %v135 = vlaneseq
    %v136 = vshrl.u32 %v135, 7
    %v137 = vsub.s32 0, %v136
    %v138 = vrot.slane %v133, %v137
    %v143 = vcombine.low %v117, %v124
    %v144 = vcombine.low %v131, %v138
    %v146 = vunpack.c.l.s4 1983009808
    %v147 = vunpack.c.0.s8 %v146
    %v148 = vlaneseq
    %v149 = vshrl.u32 %v148, 7
    %v150 = vsub.s32 %v147, %v149
    %v151 = vrot.slane %v143, %v150
    %v153 = vunpack.c.l.s4 1983009808
    %v154 = vunpack.c.0.s8 %v153
    %v155 = vlaneseq
    %v156 = vshrl.u32 %v155, 7
    %v157 = vsub.s32 %v154, %v156
    %v158 = vrot.slane %v144, %v157
    %v159 = vcombine.low %v151, %v158
    %160 = vrot.lane.b32.xlu0 %v159, 111
    %v161 = vpop.permute.xlu0 %160
    %v162 = vrot.slane %v161, 6
    %vm163 = vcmask 908288
    %v164 = vsel %vm163, %v162, %v161
    %v167 = vmul.bf16 %v91, %v164
    %v168 = vmul.bf16 %v92, %v162
    %v169 = vld [vmem:[%s2] sm:$0x3]
    %v170 = vcombine.high %v35, %v35
    %v172 = vunpack.c.l.s4 1983009808
    %v173 = vunpack.c.0.s8 %v172
    %v174 = vlaneseq
    %v175 = vshrl.u32 %v174, 7
    %v176 = vsub.s32 %v173, %v175
    %v177 = vrot.slane %v35, %v176
    %v179 = vunpack.c.l.s4 1983009808
    %v180 = vunpack.c.0.s8 %v179
    %v181 = vlaneseq
    %v182 = vshrl.u32 %v181, 7
    %v183 = vsub.s32 %v180, %v182
    %v184 = vrot.slane %v170, %v183
    %v185 = vcombine.high %v177, %v177
    %v186 = vcombine.high %v184, %v184
    %v188 = vpack.i.b16 %v177, %v177
    %v190 = vlaneseq
    %v191 = vshrl.u32 %v190, 7
    %v192 = vsub.s32 0, %v191
    %v193 = vrot.slane %v188, %v192
    %v195 = vpack.i.b16 %v185, %v185
    %v197 = vlaneseq
    %v198 = vshrl.u32 %v197, 7
    %v199 = vsub.s32 0, %v198
    %v200 = vrot.slane %v195, %v199
    %v202 = vpack.i.b16 %v184, %v184
    %v204 = vlaneseq
    %v205 = vshrl.u32 %v204, 7
    %v206 = vsub.s32 0, %v205
    %v207 = vrot.slane %v202, %v206
    %v209 = vpack.i.b16 %v186, %v186
    %v211 = vlaneseq
    %v212 = vshrl.u32 %v211, 7
    %v213 = vsub.s32 0, %v212
    %v214 = vrot.slane %v209, %v213
    %v219 = vcombine.low %v193, %v200
    %v220 = vcombine.low %v207, %v214
    %v222 = vunpack.c.l.s4 1983009808
    %v223 = vunpack.c.0.s8 %v222
    %v224 = vlaneseq
    %v225 = vshrl.u32 %v224, 7
    %v226 = vsub.s32 %v223, %v225
    %v227 = vrot.slane %v219, %v226
    %v229 = vunpack.c.l.s4 1983009808
    %v230 = vunpack.c.0.s8 %v229
    %v231 = vlaneseq
    %v232 = vshrl.u32 %v231, 7
    %v233 = vsub.s32 %v230, %v232
    %v234 = vrot.slane %v220, %v233
    %v235 = vcombine.low %v227, %v234
    %236 = vrot.lane.b32.xlu0 %v235, 112
    %v237 = vpop.permute.xlu0 %236
    %v238 = vrot.slane %v237, 6
    %vm239 = vcmask 916480
    %v240 = vsel %vm239, %v238, %v237
    %v243 = vmul.bf16 %v91, %v240
    %v244 = vmul.bf16 %v92, %v238
    %s245 = scalar_lea.vmem %s2, 2
    %v246 = vld [vmem:[%s245] sm:$0x3]
    %v249 = vcombine.high %v243, %v243
    %v251 = vunpack.c.l.s4 1983009808
    %v252 = vunpack.c.0.s8 %v251
    %v253 = vlaneseq
    %v254 = vshrl.u32 %v253, 7
    %v255 = vsub.s32 %v252, %v254
    %v256 = vrot.slane %v243, %v255
    %v258 = vunpack.c.l.s4 1983009808
    %v259 = vunpack.c.0.s8 %v258
    %v260 = vlaneseq
    %v261 = vshrl.u32 %v260, 7
    %v262 = vsub.s32 %v259, %v261
    %v263 = vrot.slane %v249, %v262
    %v264 = vcombine.high %v256, %v256
    %v265 = vcombine.high %v263, %v263
    %v267 = vunpack.c.l.s4 1983009808
    %v268 = vunpack.c.0.s8 %v267
    %v269 = vlaneseq
    %v270 = vshrl.u32 %v269, 7
    %v271 = vsub.s32 %v268, %v270
    %v272 = vrot.slane %v244, %v271
    %273 = vrot.lane.b32.xlu0 %v256, 16
    %v274 = vpop.permute.xlu0 %273
    %275 = vrot.lane.b32.xlu0 %v264, 16
    %v276 = vpop.permute.xlu0 %275
    %277 = vrot.lane.b32.xlu0 %v263, 16
    %v278 = vpop.permute.xlu0 %277
    %279 = vrot.lane.b32.xlu0 %v265, 16
    %v280 = vpop.permute.xlu0 %279
    %281 = vrot.lane.b32.xlu0 %v272, 16
    %v282 = vpop.permute.xlu0 %281
    %vm283 = vcmask 130048
    %v284 = vsel %vm283, %v274, %v276
    %v285 = vsel %vm283, %v276, %v278
    %v286 = vsel %vm283, %v278, %v280
    %v287 = vsel %vm283, %v280, %v282
    %vm288 = vcmask 31744
    %v290 = vsel %vm288, %v246, 0
    %vm292 = vcmask 1041408
    %v294 = vsel %vm292, %v284, 0
    %v297 = vsel %vm292, %v285, 0
    %v300 = vsel %vm292, %v286, 0
    %v303 = vsel %vm292, %v287, 0
    %305 = vmatprep.subr.bf16.mxu0 %v297
    %306 = vmatpush1.bf16.msra.mxu0 %v294
    %307 = vmatprep.subr.bf16.mxu0 0
    %308 = vmatpush1.bf16.msra.mxu0 0
    %309 = vmatprep.subr.bf16.mxu0 0
    %310 = vmatpush1.bf16.msra.mxu0 0
    %311 = vmatprep.subr.bf16.mxu0 0
    %312 = vmatpush1.bf16.msra.mxu0 0
    %313 = vmatprep.subr.bf16.mxu0 0
    %314 = vmatpush1.bf16.msra.mxu0 0
    %315 = vmatprep.subr.bf16.mxu0 0
    %316 = vmatpush1.bf16.msra.mxu0 0
    %317 = vmatprep.subr.bf16.mxu0 0
    %318 = vmatpush1.bf16.msra.mxu0 0
    %319 = vmatprep.subr.bf16.mxu0 0
    %320 = vmatpush1.bf16.msra.mxu0 0
    %321 = vmatprep.subr.bf16.mxu0 0
    %322 = vmatpush1.bf16.msra.mxu0 0
    %323 = vmatprep.subr.bf16.mxu0 0
    %324 = vmatpush1.bf16.msra.mxu0 0
    %325 = vmatprep.subr.bf16.mxu0 0
    %326 = vmatpush1.bf16.msra.mxu0 0
    %327 = vmatprep.subr.bf16.mxu0 0
    %328 = vmatpush1.bf16.msra.mxu0 0
    %329 = vmatprep.subr.bf16.mxu0 0
    %330 = vmatpush1.bf16.msra.mxu0 0
    %331 = vmatprep.subr.bf16.mxu0 0
    %332 = vmatpush1.bf16.msra.mxu0 0
    %333 = vmatprep.subr.bf16.mxu0 0
    %334 = vmatpush1.bf16.msra.mxu0 0
    %335 = vmatprep.subr.bf16.mxu0 0
    %336 = vmatpush1.bf16.msra.mxu0 0
    %337 = vmatprep.mubr.bf16.mxu0 0
    %338 = vmatmul.mubr.bf16.gmra.mrb[0].mxu0 %v290
    %v339 = vpop.f32.mrb[0].mxu0
    %v340 = vadd.f32 0.0, %v339
    %v341 = vpop.f32.mrb[0].mxu0
    %v342 = vadd.f32 0.0, %v341
    %v343 = vpop.f32.mrb[0].mxu0
    %v344 = vpop.f32.mrb[0].mxu0
    %345 = vdwg.mxu0
    %346 = vmatprep.subr.bf16.mxu0 %v303
    %347 = vmatpush1.bf16.msra.mxu0 %v300
    %348 = vmatprep.subr.bf16.mxu0 0
    %349 = vmatpush1.bf16.msra.mxu0 0
    %350 = vmatprep.subr.bf16.mxu0 0
    %351 = vmatpush1.bf16.msra.mxu0 0
    %352 = vmatprep.subr.bf16.mxu0 0
    %353 = vmatpush1.bf16.msra.mxu0 0
    %354 = vmatprep.subr.bf16.mxu0 0
    %355 = vmatpush1.bf16.msra.mxu0 0
    %356 = vmatprep.subr.bf16.mxu0 0
    %357 = vmatpush1.bf16.msra.mxu0 0
    %358 = vmatprep.subr.bf16.mxu0 0
    %359 = vmatpush1.bf16.msra.mxu0 0
    %360 = vmatprep.subr.bf16.mxu0 0
    %361 = vmatpush1.bf16.msra.mxu0 0
    %362 = vmatprep.subr.bf16.mxu0 0
    %363 = vmatpush1.bf16.msra.mxu0 0
    %364 = vmatprep.subr.bf16.mxu0 0
    %365 = vmatpush1.bf16.msra.mxu0 0
    %366 = vmatprep.subr.bf16.mxu0 0
    %367 = vmatpush1.bf16.msra.mxu0 0
    %368 = vmatprep.subr.bf16.mxu0 0
    %369 = vmatpush1.bf16.msra.mxu0 0
    %370 = vmatprep.subr.bf16.mxu0 0
    %371 = vmatpush1.bf16.msra.mxu0 0
    %372 = vmatprep.subr.bf16.mxu0 0
    %373 = vmatpush1.bf16.msra.mxu0 0
    %374 = vmatprep.subr.bf16.mxu0 0
    %375 = vmatpush1.bf16.msra.mxu0 0
    %376 = vmatprep.subr.bf16.mxu0 0
    %377 = vmatpush1.bf16.msra.mxu0 0
    %378 = vmatprep.mubr.bf16.mxu0 0
    %379 = vmatmul.mubr.bf16.gmra.mrb[0].mxu0 %v290
    %v380 = vpop.f32.mrb[0].mxu0
    %v381 = vadd.f32 0.0, %v380
    %v382 = vpop.f32.mrb[0].mxu0
    %v383 = vadd.f32 0.0, %v382
    %v384 = vpop.f32.mrb[0].mxu0
    %v385 = vpop.f32.mrb[0].mxu0
    %386 = vdwg.mxu0
    %v389 = vcombine.high %v167, %v167
    %v391 = vunpack.c.l.s4 1983009808
    %v392 = vunpack.c.0.s8 %v391
    %v393 = vlaneseq
    %v394 = vshrl.u32 %v393, 7
    %v395 = vsub.s32 %v392, %v394
    %v396 = vrot.slane %v167, %v395
    %v398 = vunpack.c.l.s4 1983009808
    %v399 = vunpack.c.0.s8 %v398
    %v400 = vlaneseq
    %v401 = vshrl.u32 %v400, 7
    %v402 = vsub.s32 %v399, %v401
    %v403 = vrot.slane %v389, %v402
    %v404 = vcombine.high %v396, %v396
    %v405 = vcombine.high %v403, %v403
    %v407 = vunpack.c.l.s4 1983009808
    %v408 = vunpack.c.0.s8 %v407
    %v409 = vlaneseq
    %v410 = vshrl.u32 %v409, 7
    %v411 = vsub.s32 %v408, %v410
    %v412 = vrot.slane %v168, %v411
    %413 = vrot.lane.b32.xlu0 %v396, 17
    %v414 = vpop.permute.xlu0 %413
    %415 = vrot.lane.b32.xlu0 %v404, 17
    %v416 = vpop.permute.xlu0 %415
    %417 = vrot.lane.b32.xlu0 %v403, 17
    %v418 = vpop.permute.xlu0 %417
    %419 = vrot.lane.b32.xlu0 %v405, 17
    %v420 = vpop.permute.xlu0 %419
    %421 = vrot.lane.b32.xlu0 %v412, 17
    %v422 = vpop.permute.xlu0 %421
    %vm423 = vcmask 138240
    %v424 = vsel %vm423, %v414, %v416
    %v425 = vsel %vm423, %v416, %v418
    %v426 = vsel %vm423, %v418, %v420
    %v427 = vsel %vm423, %v420, %v422
    %v429 = vsel %vm288, %v169, 0
    %v432 = vsel %vm292, %v424, 0
    %v435 = vsel %vm292, %v425, 0
    %v438 = vsel %vm292, %v426, 0
    %v441 = vsel %vm292, %v427, 0
    %443 = vmatprep.subr.bf16.mxu0 %v435
    %444 = vmatpush1.bf16.msra.mxu0 %v432
    %445 = vmatprep.subr.bf16.mxu0 0
    %446 = vmatpush1.bf16.msra.mxu0 0
    %447 = vmatprep.subr.bf16.mxu0 0
    %448 = vmatpush1.bf16.msra.mxu0 0
    %449 = vmatprep.subr.bf16.mxu0 0
    %450 = vmatpush1.bf16.msra.mxu0 0
    %451 = vmatprep.subr.bf16.mxu0 0
    %452 = vmatpush1.bf16.msra.mxu0 0
    %453 = vmatprep.subr.bf16.mxu0 0
    %454 = vmatpush1.bf16.msra.mxu0 0
    %455 = vmatprep.subr.bf16.mxu0 0
    %456 = vmatpush1.bf16.msra.mxu0 0
    %457 = vmatprep.subr.bf16.mxu0 0
    %458 = vmatpush1.bf16.msra.mxu0 0
    %459 = vmatprep.subr.bf16.mxu0 0
    %460 = vmatpush1.bf16.msra.mxu0 0
    %461 = vmatprep.subr.bf16.mxu0 0
    %462 = vmatpush1.bf16.msra.mxu0 0
    %463 = vmatprep.subr.bf16.mxu0 0
    %464 = vmatpush1.bf16.msra.mxu0 0
    %465 = vmatprep.subr.bf16.mxu0 0
    %466 = vmatpush1.bf16.msra.mxu0 0
    %467 = vmatprep.subr.bf16.mxu0 0
    %468 = vmatpush1.bf16.msra.mxu0 0
    %469 = vmatprep.subr.bf16.mxu0 0
    %470 = vmatpush1.bf16.msra.mxu0 0
    %471 = vmatprep.subr.bf16.mxu0 0
    %472 = vmatpush1.bf16.msra.mxu0 0
    %473 = vmatprep.subr.bf16.mxu0 0
    %474 = vmatpush1.bf16.msra.mxu0 0
    %475 = vmatprep.mubr.bf16.mxu0 0
    %476 = vmatmul.mubr.bf16.gmra.mrb[0].mxu0 %v429
    %v477 = vpop.f32.mrb[0].mxu0
    %v478 = vadd.f32 %v340, %v477
    %v479 = vpop.f32.mrb[0].mxu0
    %v480 = vadd.f32 %v342, %v479
    %v481 = vpop.f32.mrb[0].mxu0
    %v482 = vpop.f32.mrb[0].mxu0
    %483 = vdwg.mxu0
    %484 = vmatprep.subr.bf16.mxu0 %v441
    %485 = vmatpush1.bf16.msra.mxu0 %v438
    %486 = vmatprep.subr.bf16.mxu0 0
    %487 = vmatpush1.bf16.msra.mxu0 0
    %488 = vmatprep.subr.bf16.mxu0 0
    %489 = vmatpush1.bf16.msra.mxu0 0
    %490 = vmatprep.subr.bf16.mxu0 0
    %491 = vmatpush1.bf16.msra.mxu0 0
    %492 = vmatprep.subr.bf16.mxu0 0
    %493 = vmatpush1.bf16.msra.mxu0 0
    %494 = vmatprep.subr.bf16.mxu0 0
    %495 = vmatpush1.bf16.msra.mxu0 0
    %496 = vmatprep.subr.bf16.mxu0 0
    %497 = vmatpush1.bf16.msra.mxu0 0
    %498 = vmatprep.subr.bf16.mxu0 0
    %499 = vmatpush1.bf16.msra.mxu0 0
    %500 = vmatprep.subr.bf16.mxu0 0
    %501 = vmatpush1.bf16.msra.mxu0 0
    %502 = vmatprep.subr.bf16.mxu0 0
    %503 = vmatpush1.bf16.msra.mxu0 0
    %504 = vmatprep.subr.bf16.mxu0 0
    %505 = vmatpush1.bf16.msra.mxu0 0
    %506 = vmatprep.subr.bf16.mxu0 0
    %507 = vmatpush1.bf16.msra.mxu0 0
    %508 = vmatprep.subr.bf16.mxu0 0
    %509 = vmatpush1.bf16.msra.mxu0 0
    %510 = vmatprep.subr.bf16.mxu0 0
    %511 = vmatpush1.bf16.msra.mxu0 0
    %512 = vmatprep.subr.bf16.mxu0 0
    %513 = vmatpush1.bf16.msra.mxu0 0
    %514 = vmatprep.subr.bf16.mxu0 0
    %515 = vmatpush1.bf16.msra.mxu0 0
    %516 = vmatprep.mubr.bf16.mxu0 0
    %517 = vmatmul.mubr.bf16.gmra.mrb[0].mxu0 %v429
    %v518 = vpop.f32.mrb[0].mxu0
    %v519 = vadd.f32 %v381, %v518
    %v520 = vpop.f32.mrb[0].mxu0
    %v521 = vadd.f32 %v383, %v520
    %v522 = vpop.f32.mrb[0].mxu0
    %v523 = vpop.f32.mrb[0].mxu0
    %524 = vdwg.mxu0
    %v525 = vld [vmem:[#allocation2] sm:$0xff]
    %v526 = vld [vmem:[#allocation2 + $0x8] sm:$0x3]
    %v528 = vcombine.high %v47, %v47
    %v530 = vunpack.c.l.s4 1983009808
    %v531 = vunpack.c.0.s8 %v530
    %v532 = vlaneseq
    %v533 = vshrl.u32 %v532, 7
    %v534 = vsub.s32 %v531, %v533
    %v535 = vrot.slane %v47, %v534
    %v537 = vunpack.c.l.s4 1983009808
    %v538 = vunpack.c.0.s8 %v537
    %v539 = vlaneseq
    %v540 = vshrl.u32 %v539, 7
    %v541 = vsub.s32 %v538, %v540
    %v542 = vrot.slane %v528, %v541
    %v543 = vcombine.high %v535, %v535
    %v544 = vcombine.high %v542, %v542
    %v546 = vpack.i.b16 %v535, %v535
    %v548 = vlaneseq
    %v549 = vshrl.u32 %v548, 7
    %v550 = vsub.s32 0, %v549
    %v551 = vrot.slane %v546, %v550
    %v553 = vpack.i.b16 %v543, %v543
    %v555 = vlaneseq
    %v556 = vshrl.u32 %v555, 7
    %v557 = vsub.s32 0, %v556
    %v558 = vrot.slane %v553, %v557
    %v560 = vpack.i.b16 %v542, %v542
    %v562 = vlaneseq
    %v563 = vshrl.u32 %v562, 7
    %v564 = vsub.s32 0, %v563
    %v565 = vrot.slane %v560, %v564
    %v567 = vpack.i.b16 %v544, %v544
    %v569 = vlaneseq
    %v570 = vshrl.u32 %v569, 7
    %v571 = vsub.s32 0, %v570
    %v572 = vrot.slane %v567, %v571
    %v577 = vcombine.low %v551, %v558
    %v578 = vcombine.low %v565, %v572
    %v580 = vunpack.c.l.s4 1983009808
    %v581 = vunpack.c.0.s8 %v580
    %v582 = vlaneseq
    %v583 = vshrl.u32 %v582, 7
    %v584 = vsub.s32 %v581, %v583
    %v585 = vrot.slane %v577, %v584
    %v587 = vunpack.c.l.s4 1983009808
    %v588 = vunpack.c.0.s8 %v587
    %v589 = vlaneseq
    %v590 = vshrl.u32 %v589, 7
    %v591 = vsub.s32 %v588, %v590
    %v592 = vrot.slane %v578, %v591
    %v593 = vcombine.low %v585, %v592
    %594 = vrot.lane.b32.xlu0 %v593, 113
    %v595 = vpop.permute.xlu0 %594
    %v596 = vrot.slane %v595, 6
    %vm597 = vcmask 924672
    %v598 = vsel %vm597, %v596, %v595
    %v601 = vmul.bf16 %v525, %v598
    %v602 = vmul.bf16 %v526, %v596
    %s603 = scalar_lea.vmem %s2, 4
    %v604 = vld [vmem:[%s603] sm:$0x3]
    %v607 = vcombine.high %v601, %v601
    %v609 = vunpack.c.l.s4 1983009808
    %v610 = vunpack.c.0.s8 %v609
    %v611 = vlaneseq
    %v612 = vshrl.u32 %v611, 7
    %v613 = vsub.s32 %v610, %v612
    %v614 = vrot.slane %v601, %v613
    %v616 = vunpack.c.l.s4 1983009808
    %v617 = vunpack.c.0.s8 %v616
    %v618 = vlaneseq
    %v619 = vshrl.u32 %v618, 7
    %v620 = vsub.s32 %v617, %v619
    %v621 = vrot.slane %v607, %v620
    %v622 = vcombine.high %v614, %v614
    %v623 = vcombine.high %v621, %v621
    %v625 = vunpack.c.l.s4 1983009808
    %v626 = vunpack.c.0.s8 %v625
    %v627 = vlaneseq
    %v628 = vshrl.u32 %v627, 7
    %v629 = vsub.s32 %v626, %v628
    %v630 = vrot.slane %v602, %v629
    %631 = vrot.lane.b32.xlu0 %v614, 15
    %v632 = vpop.permute.xlu0 %631
    %633 = vrot.lane.b32.xlu0 %v622, 15
    %v634 = vpop.permute.xlu0 %633
    %635 = vrot.lane.b32.xlu0 %v621, 15
    %v636 = vpop.permute.xlu0 %635
    %637 = vrot.lane.b32.xlu0 %v623, 15
    %v638 = vpop.permute.xlu0 %637
    %639 = vrot.lane.b32.xlu0 %v630, 15
    %v640 = vpop.permute.xlu0 %639
    %vm641 = vcmask 121856
    %v642 = vsel %vm641, %v632, %v634
    %v643 = vsel %vm641, %v634, %v636
    %v644 = vsel %vm641, %v636, %v638
    %v645 = vsel %vm641, %v638, %v640
    %v647 = vsel %vm288, %v604, 0
    %v650 = vsel %vm292, %v642, 0
    %v653 = vsel %vm292, %v643, 0
    %v656 = vsel %vm292, %v644, 0
    %v659 = vsel %vm292, %v645, 0
    %661 = vmatprep.subr.bf16.mxu0 %v653
    %662 = vmatpush1.bf16.msra.mxu0 %v650
    %663 = vmatprep.subr.bf16.mxu0 0
    %664 = vmatpush1.bf16.msra.mxu0 0
    %665 = vmatprep.subr.bf16.mxu0 0
    %666 = vmatpush1.bf16.msra.mxu0 0
    %667 = vmatprep.subr.bf16.mxu0 0
    %668 = vmatpush1.bf16.msra.mxu0 0
    %669 = vmatprep.subr.bf16.mxu0 0
    %670 = vmatpush1.bf16.msra.mxu0 0
    %671 = vmatprep.subr.bf16.mxu0 0
    %672 = vmatpush1.bf16.msra.mxu0 0
    %673 = vmatprep.subr.bf16.mxu0 0
    %674 = vmatpush1.bf16.msra.mxu0 0
    %675 = vmatprep.subr.bf16.mxu0 0
    %676 = vmatpush1.bf16.msra.mxu0 0
    %677 = vmatprep.subr.bf16.mxu0 0
    %678 = vmatpush1.bf16.msra.mxu0 0
    %679 = vmatprep.subr.bf16.mxu0 0
    %680 = vmatpush1.bf16.msra.mxu0 0
    %681 = vmatprep.subr.bf16.mxu0 0
    %682 = vmatpush1.bf16.msra.mxu0 0
    %683 = vmatprep.subr.bf16.mxu0 0
    %684 = vmatpush1.bf16.msra.mxu0 0
    %685 = vmatprep.subr.bf16.mxu0 0
    %686 = vmatpush1.bf16.msra.mxu0 0
    %687 = vmatprep.subr.bf16.mxu0 0
    %688 = vmatpush1.bf16.msra.mxu0 0
    %689 = vmatprep.subr.bf16.mxu0 0
    %690 = vmatpush1.bf16.msra.mxu0 0
    %691 = vmatprep.subr.bf16.mxu0 0
    %692 = vmatpush1.bf16.msra.mxu0 0
    %693 = vmatprep.mubr.bf16.mxu0 0
    %694 = vmatmul.mubr.bf16.gmra.mrb[0].mxu0 %v647
    %v695 = vpop.f32.mrb[0].mxu0
    %v696 = vadd.f32 0.0, %v695
    %v697 = vpop.f32.mrb[0].mxu0
    %v698 = vadd.f32 0.0, %v697
    %v699 = vpop.f32.mrb[0].mxu0
    %v700 = vpop.f32.mrb[0].mxu0
    %701 = vdwg.mxu0
    %702 = vmatprep.subr.bf16.mxu0 %v659
    %703 = vmatpush1.bf16.msra.mxu0 %v656
    %704 = vmatprep.subr.bf16.mxu0 0
    %705 = vmatpush1.bf16.msra.mxu0 0
    %706 = vmatprep.subr.bf16.mxu0 0
    %707 = vmatpush1.bf16.msra.mxu0 0
    %708 = vmatprep.subr.bf16.mxu0 0
    %709 = vmatpush1.bf16.msra.mxu0 0
    %710 = vmatprep.subr.bf16.mxu0 0
    %711 = vmatpush1.bf16.msra.mxu0 0
    %712 = vmatprep.subr.bf16.mxu0 0
    %713 = vmatpush1.bf16.msra.mxu0 0
    %714 = vmatprep.subr.bf16.mxu0 0
    %715 = vmatpush1.bf16.msra.mxu0 0
    %716 = vmatprep.subr.bf16.mxu0 0
    %717 = vmatpush1.bf16.msra.mxu0 0
    %718 = vmatprep.subr.bf16.mxu0 0
    %719 = vmatpush1.bf16.msra.mxu0 0
    %720 = vmatprep.subr.bf16.mxu0 0
    %721 = vmatpush1.bf16.msra.mxu0 0
    %722 = vmatprep.subr.bf16.mxu0 0
    %723 = vmatpush1.bf16.msra.mxu0 0
    %724 = vmatprep.subr.bf16.mxu0 0
    %725 = vmatpush1.bf16.msra.mxu0 0
    %726 = vmatprep.subr.bf16.mxu0 0
    %727 = vmatpush1.bf16.msra.mxu0 0
    %728 = vmatprep.subr.bf16.mxu0 0
    %729 = vmatpush1.bf16.msra.mxu0 0
    %730 = vmatprep.subr.bf16.mxu0 0
    %731 = vmatpush1.bf16.msra.mxu0 0
    %732 = vmatprep.subr.bf16.mxu0 0
    %733 = vmatpush1.bf16.msra.mxu0 0
    %734 = vmatprep.mubr.bf16.mxu0 0
    %735 = vmatmul.mubr.bf16.gmra.mrb[0].mxu0 %v647
    %v736 = vpop.f32.mrb[0].mxu0
    %v737 = vadd.f32 0.0, %v736
    %v738 = vpop.f32.mrb[0].mxu0
    %v739 = vadd.f32 0.0, %v738
    %v740 = vpop.f32.mrb[0].mxu0
    %v741 = vpop.f32.mrb[0].mxu0
    %742 = vdwg.mxu0
    %v743 = vadd.f32 %v478, %v696
    %v744 = vadd.f32 %v480, %v698
    %v745 = vadd.f32 %v519, %v737
    %v746 = vadd.f32 %v521, %v739
    %v747 = vld [vmem:[#allocation2] sm:$0xff]
    %v748 = vld [vmem:[#allocation2 + $0x8] sm:$0x3]
    %v749 = vlaneseq
    %v750 = vshrl.u32 %v749, 7
    %v751 = vsub.s32 1, %v750
    %v752 = vrot.slane %v188, %v751
    %v753 = vlaneseq
    %v754 = vshrl.u32 %v753, 7
    %v755 = vsub.s32 1, %v754
    %v756 = vrot.slane %v195, %v755
    %v757 = vlaneseq
    %v758 = vshrl.u32 %v757, 7
    %v759 = vsub.s32 1, %v758
    %v760 = vrot.slane %v202, %v759
    %v761 = vlaneseq
    %v762 = vshrl.u32 %v761, 7
    %v763 = vsub.s32 1, %v762
    %v764 = vrot.slane %v209, %v763
    %v769 = vcombine.low %v752, %v756
    %v770 = vcombine.low %v760, %v764
    %v772 = vunpack.c.l.s4 1983009808
    %v773 = vunpack.c.0.s8 %v772
    %v774 = vlaneseq
    %v775 = vshrl.u32 %v774, 7
    %v776 = vsub.s32 %v773, %v775
    %v777 = vrot.slane %v769, %v776
    %v779 = vunpack.c.l.s4 1983009808
    %v780 = vunpack.c.0.s8 %v779
    %v781 = vlaneseq
    %v782 = vshrl.u32 %v781, 7
    %v783 = vsub.s32 %v780, %v782
    %v784 = vrot.slane %v770, %v783
    %v785 = vcombine.low %v777, %v784
    %786 = vrot.lane.b32.xlu0 %v785, 127
    %v787 = vpop.permute.xlu0 %786
    %v788 = vrot.slane %v787, 6
    %vm789 = vcmask 1039360
    %v790 = vsel %vm789, %v788, %v787
    %v793 = vmul.bf16 %v747, %v790
    %v794 = vmul.bf16 %v748, %v788
    %s795 = scalar_lea.vmem %s2, 6
    %v796 = vld [vmem:[%s795] sm:$0x3]
    %v799 = vcombine.high %v793, %v793
    %v801 = vunpack.c.l.s4 1983009808
    %v802 = vunpack.c.0.s8 %v801
    %v803 = vlaneseq
    %v804 = vshrl.u32 %v803, 7
    %v805 = vsub.s32 %v802, %v804
    %v806 = vrot.slane %v793, %v805
    %v808 = vunpack.c.l.s4 1983009808
    %v809 = vunpack.c.0.s8 %v808
    %v810 = vlaneseq
    %v811 = vshrl.u32 %v810, 7
    %v812 = vsub.s32 %v809, %v811
    %v813 = vrot.slane %v799, %v812
    %v814 = vcombine.high %v806, %v806
    %v815 = vcombine.high %v813, %v813
    %v817 = vunpack.c.l.s4 1983009808
    %v818 = vunpack.c.0.s8 %v817
    %v819 = vlaneseq
    %v820 = vshrl.u32 %v819, 7
    %v821 = vsub.s32 %v818, %v820
    %v822 = vrot.slane %v794, %v821
    %823 = vrot.lane.b32.xlu0 %v806, 1
    %v824 = vpop.permute.xlu0 %823
    %825 = vrot.lane.b32.xlu0 %v814, 1
    %v826 = vpop.permute.xlu0 %825
    %827 = vrot.lane.b32.xlu0 %v813, 1
    %v828 = vpop.permute.xlu0 %827
    %829 = vrot.lane.b32.xlu0 %v815, 1
    %v830 = vpop.permute.xlu0 %829
    %831 = vrot.lane.b32.xlu0 %v822, 1
    %v832 = vpop.permute.xlu0 %831
    %vm833 = vcmask 7168
    %v834 = vsel %vm833, %v824, %v826
    %v835 = vsel %vm833, %v826, %v828
    %v836 = vsel %vm833, %v828, %v830
    %v837 = vsel %vm833, %v830, %v832
    %v839 = vsel %vm288, %v796, 0
    %v842 = vsel %vm292, %v834, 0
    %v845 = vsel %vm292, %v835, 0
    %v848 = vsel %vm292, %v836, 0
    %v851 = vsel %vm292, %v837, 0
    %853 = vmatprep.subr.bf16.mxu0 %v845
    %854 = vmatpush1.bf16.msra.mxu0 %v842
    %855 = vmatprep.subr.bf16.mxu0 0
    %856 = vmatpush1.bf16.msra.mxu0 0
    %857 = vmatprep.subr.bf16.mxu0 0
    %858 = vmatpush1.bf16.msra.mxu0 0
    %859 = vmatprep.subr.bf16.mxu0 0
    %860 = vmatpush1.bf16.msra.mxu0 0
    %861 = vmatprep.subr.bf16.mxu0 0
    %862 = vmatpush1.bf16.msra.mxu0 0
    %863 = vmatprep.subr.bf16.mxu0 0
    %864 = vmatpush1.bf16.msra.mxu0 0
    %865 = vmatprep.subr.bf16.mxu0 0
    %866 = vmatpush1.bf16.msra.mxu0 0
    %867 = vmatprep.subr.bf16.mxu0 0
    %868 = vmatpush1.bf16.msra.mxu0 0
    %869 = vmatprep.subr.bf16.mxu0 0
    %870 = vmatpush1.bf16.msra.mxu0 0
    %871 = vmatprep.subr.bf16.mxu0 0
    %872 = vmatpush1.bf16.msra.mxu0 0
    %873 = vmatprep.subr.bf16.mxu0 0
    %874 = vmatpush1.bf16.msra.mxu0 0
    %875 = vmatprep.subr.bf16.mxu0 0
    %876 = vmatpush1.bf16.msra.mxu0 0
    %877 = vmatprep.subr.bf16.mxu0 0
    %878 = vmatpush1.bf16.msra.mxu0 0
    %879 = vmatprep.subr.bf16.mxu0 0
    %880 = vmatpush1.bf16.msra.mxu0 0
    %881 = vmatprep.subr.bf16.mxu0 0
    %882 = vmatpush1.bf16.msra.mxu0 0
    %883 = vmatprep.subr.bf16.mxu0 0
    %884 = vmatpush1.bf16.msra.mxu0 0
    %885 = vmatprep.mubr.bf16.mxu0 0
    %886 = vmatmul.mubr.bf16.gmra.mrb[0].mxu0 %v839
    %v887 = vpop.f32.mrb[0].mxu0
    %v888 = vadd.f32 0.0, %v887
    %v889 = vpop.f32.mrb[0].mxu0
    %v890 = vadd.f32 0.0, %v889
    %v891 = vpop.f32.mrb[0].mxu0
    %v892 = vpop.f32.mrb[0].mxu0
    %893 = vdwg.mxu0
    %894 = vmatprep.subr.bf16.mxu0 %v851
    %895 = vmatpush1.bf16.msra.mxu0 %v848
    %896 = vmatprep.subr.bf16.mxu0 0
    %897 = vmatpush1.bf16.msra.mxu0 0
    %898 = vmatprep.subr.bf16.mxu0 0
    %899 = vmatpush1.bf16.msra.mxu0 0
    %900 = vmatprep.subr.bf16.mxu0 0
    %901 = vmatpush1.bf16.msra.mxu0 0
    %902 = vmatprep.subr.bf16.mxu0 0
    %903 = vmatpush1.bf16.msra.mxu0 0
    %904 = vmatprep.subr.bf16.mxu0 0
    %905 = vmatpush1.bf16.msra.mxu0 0
    %906 = vmatprep.subr.bf16.mxu0 0
    %907 = vmatpush1.bf16.msra.mxu0 0
    %908 = vmatprep.subr.bf16.mxu0 0
    %909 = vmatpush1.bf16.msra.mxu0 0
    %910 = vmatprep.subr.bf16.mxu0 0
    %911 = vmatpush1.bf16.msra.mxu0 0
    %912 = vmatprep.subr.bf16.mxu0 0
    %913 = vmatpush1.bf16.msra.mxu0 0
    %914 = vmatprep.subr.bf16.mxu0 0
    %915 = vmatpush1.bf16.msra.mxu0 0
    %916 = vmatprep.subr.bf16.mxu0 0
    %917 = vmatpush1.bf16.msra.mxu0 0
    %918 = vmatprep.subr.bf16.mxu0 0
    %919 = vmatpush1.bf16.msra.mxu0 0
    %920 = vmatprep.subr.bf16.mxu0 0
    %921 = vmatpush1.bf16.msra.mxu0 0
    %922 = vmatprep.subr.bf16.mxu0 0
    %923 = vmatpush1.bf16.msra.mxu0 0
    %924 = vmatprep.subr.bf16.mxu0 0
    %925 = vmatpush1.bf16.msra.mxu0 0
    %926 = vmatprep.mubr.bf16.mxu0 0
    %927 = vmatmul.mubr.bf16.gmra.mrb[0].mxu0 %v839
    %v928 = vpop.f32.mrb[0].mxu0
    %v929 = vadd.f32 0.0, %v928
    %v930 = vpop.f32.mrb[0].mxu0
    %v931 = vadd.f32 0.0, %v930
    %v932 = vpop.f32.mrb[0].mxu0
    %v933 = vpop.f32.mrb[0].mxu0
    %934 = vdwg.mxu0
    %v935 = vadd.f32 %v743, %v888
    %v936 = vadd.f32 %v744, %v890
    %v937 = vadd.f32 %v745, %v929
    %v938 = vadd.f32 %v746, %v931
    %v939 = vld [vmem:[#allocation2 + $0x2] sm:$0xff]
    %s940 = scalar_lea.vmem %s2, 8
    %v941 = vld [vmem:[%s940] sm:$0x3]
    %v943 = vcombine.high %v939, %v939
    %v945 = vunpack.c.l.s4 1983009808
    %v946 = vunpack.c.0.s8 %v945
    %v947 = vlaneseq
    %v948 = vshrl.u32 %v947, 7
    %v949 = vsub.s32 %v946, %v948
    %v950 = vrot.slane %v939, %v949
    %v952 = vunpack.c.l.s4 1983009808
    %v953 = vunpack.c.0.s8 %v952
    %v954 = vlaneseq
    %v955 = vshrl.u32 %v954, 7
    %v956 = vsub.s32 %v953, %v955
    %v957 = vrot.slane %v943, %v956
    %v958 = vcombine.high %v950, %v950
    %v959 = vcombine.high %v957, %v957
    %v961 = vsel %vm288, %v941, 0
    %v964 = vsel %vm292, %v950, 0
    %v967 = vsel %vm292, %v958, 0
    %v970 = vsel %vm292, %v957, 0
    %v973 = vsel %vm292, %v959, 0
    %975 = vmatprep.subr.bf16.mxu0 %v967
    %976 = vmatpush1.bf16.msra.mxu0 %v964
    %977 = vmatprep.subr.bf16.mxu0 0
    %978 = vmatpush1.bf16.msra.mxu0 0
    %979 = vmatprep.subr.bf16.mxu0 0
    %980 = vmatpush1.bf16.msra.mxu0 0
    %981 = vmatprep.subr.bf16.mxu0 0
    %982 = vmatpush1.bf16.msra.mxu0 0
    %983 = vmatprep.subr.bf16.mxu0 0
    %984 = vmatpush1.bf16.msra.mxu0 0
    %985 = vmatprep.subr.bf16.mxu0 0
    %986 = vmatpush1.bf16.msra.mxu0 0
    %987 = vmatprep.subr.bf16.mxu0 0
    %988 = vmatpush1.bf16.msra.mxu0 0
    %989 = vmatprep.subr.bf16.mxu0 0
    %990 = vmatpush1.bf16.msra.mxu0 0
    %991 = vmatprep.subr.bf16.mxu0 0
    %992 = vmatpush1.bf16.msra.mxu0 0
    %993 = vmatprep.subr.bf16.mxu0 0
    %994 = vmatpush1.bf16.msra.mxu0 0
    %995 = vmatprep.subr.bf16.mxu0 0
    %996 = vmatpush1.bf16.msra.mxu0 0
    %997 = vmatprep.subr.bf16.mxu0 0
    %998 = vmatpush1.bf16.msra.mxu0 0
    %999 = vmatprep.subr.bf16.mxu0 0
    %1000 = vmatpush1.bf16.msra.mxu0 0
    %1001 = vmatprep.subr.bf16.mxu0 0
    %1002 = vmatpush1.bf16.msra.mxu0 0
    %1003 = vmatprep.subr.bf16.mxu0 0
    %1004 = vmatpush1.bf16.msra.mxu0 0
    %1005 = vmatprep.subr.bf16.mxu0 0
    %1006 = vmatpush1.bf16.msra.mxu0 0
    %1007 = vmatprep.mubr.bf16.mxu0 0
    %1008 = vmatmul.mubr.bf16.gmra.mrb[0].mxu0 %v961
    %v1009 = vpop.f32.mrb[0].mxu0
    %v1010 = vadd.f32 0.0, %v1009
    %v1011 = vpop.f32.mrb[0].mxu0
    %v1012 = vadd.f32 0.0, %v1011
    %v1013 = vpop.f32.mrb[0].mxu0
    %v1014 = vpop.f32.mrb[0].mxu0
    %1015 = vdwg.mxu0
    %1016 = vmatprep.subr.bf16.mxu0 %v973
    %1017 = vmatpush1.bf16.msra.mxu0 %v970
    %1018 = vmatprep.subr.bf16.mxu0 0
    %1019 = vmatpush1.bf16.msra.mxu0 0
    %1020 = vmatprep.subr.bf16.mxu0 0
    %1021 = vmatpush1.bf16.msra.mxu0 0
    %1022 = vmatprep.subr.bf16.mxu0 0
    %1023 = vmatpush1.bf16.msra.mxu0 0
    %1024 = vmatprep.subr.bf16.mxu0 0
    %1025 = vmatpush1.bf16.msra.mxu0 0
    %1026 = vmatprep.subr.bf16.mxu0 0
    %1027 = vmatpush1.bf16.msra.mxu0 0
    %1028 = vmatprep.subr.bf16.mxu0 0
    %1029 = vmatpush1.bf16.msra.mxu0 0
    %1030 = vmatprep.subr.bf16.mxu0 0
    %1031 = vmatpush1.bf16.msra.mxu0 0
    %1032 = vmatprep.subr.bf16.mxu0 0
    %1033 = vmatpush1.bf16.msra.mxu0 0
    %1034 = vmatprep.subr.bf16.mxu0 0
    %1035 = vmatpush1.bf16.msra.mxu0 0
    %1036 = vmatprep.subr.bf16.mxu0 0
    %1037 = vmatpush1.bf16.msra.mxu0 0
    %1038 = vmatprep.subr.bf16.mxu0 0
    %1039 = vmatpush1.bf16.msra.mxu0 0
    %1040 = vmatprep.subr.bf16.mxu0 0
    %1041 = vmatpush1.bf16.msra.mxu0 0
    %1042 = vmatprep.subr.bf16.mxu0 0
    %1043 = vmatpush1.bf16.msra.mxu0 0
    %1044 = vmatprep.subr.bf16.mxu0 0
    %1045 = vmatpush1.bf16.msra.mxu0 0
    %1046 = vmatprep.subr.bf16.mxu0 0
    %1047 = vmatpush1.bf16.msra.mxu0 0
    %1048 = vmatprep.mubr.bf16.mxu0 0
    %1049 = vmatmul.mubr.bf16.gmra.mrb[0].mxu0 %v961
    %v1050 = vpop.f32.mrb[0].mxu0
    %v1051 = vadd.f32 0.0, %v1050
    %v1052 = vpop.f32.mrb[0].mxu0
    %v1053 = vadd.f32 0.0, %v1052
    %v1054 = vpop.f32.mrb[0].mxu0
    %v1055 = vpop.f32.mrb[0].mxu0
    %1056 = vdwg.mxu0
    %v1057 = vadd.f32 %v935, %v1010
    %v1058 = vadd.f32 %v936, %v1012
    %v1059 = vadd.f32 %v937, %v1051
    %v1060 = vadd.f32 %v938, %v1053
    %v1061 = vld [vmem:[#allocation2 + $0x2] sm:$0xff]
    %v1062 = vld [vmem:[#allocation2 + $0xa] sm:$0x3]
    %v1063 = vshrl.u32 %v177, 16
    %v1064 = vpack.i.b16 %v1063, %v1063
    %v1066 = vlaneseq
    %v1067 = vshrl.u32 %v1066, 7
    %v1068 = vsub.s32 1, %v1067
    %v1069 = vrot.slane %v1064, %v1068
    %v1070 = vshrl.u32 %v185, 16
    %v1071 = vpack.i.b16 %v1070, %v1070
    %v1073 = vlaneseq
    %v1074 = vshrl.u32 %v1073, 7
    %v1075 = vsub.s32 1, %v1074
    %v1076 = vrot.slane %v1071, %v1075
    %v1077 = vshrl.u32 %v184, 16
    %v1078 = vpack.i.b16 %v1077, %v1077
    %v1080 = vlaneseq
    %v1081 = vshrl.u32 %v1080, 7
    %v1082 = vsub.s32 1, %v1081
    %v1083 = vrot.slane %v1078, %v1082
    %v1084 = vshrl.u32 %v186, 16
    %v1085 = vpack.i.b16 %v1084, %v1084
    %v1087 = vlaneseq
    %v1088 = vshrl.u32 %v1087, 7
    %v1089 = vsub.s32 1, %v1088
    %v1090 = vrot.slane %v1085, %v1089
    %v1095 = vcombine.low %v1069, %v1076
    %v1096 = vcombine.low %v1083, %v1090
    %v1098 = vunpack.c.l.s4 1983009808
    %v1099 = vunpack.c.0.s8 %v1098
    %v1100 = vlaneseq
    %v1101 = vshrl.u32 %v1100, 7
    %v1102 = vsub.s32 %v1099, %v1101
    %v1103 = vrot.slane %v1095, %v1102
    %v1105 = vunpack.c.l.s4 1983009808
    %v1106 = vunpack.c.0.s8 %v1105
    %v1107 = vlaneseq
    %v1108 = vshrl.u32 %v1107, 7
    %v1109 = vsub.s32 %v1106, %v1108
    %v1110 = vrot.slane %v1096, %v1109
    %v1111 = vcombine.low %v1103, %v1110
    %1112 = vrot.lane.b32.xlu0 %v1111, 1
    %v1113 = vpop.permute.xlu0 %1112
    %v1114 = vrot.slane %v1113, 6
    %v1115 = vsel %vm833, %v1114, %v1113
    %v1118 = vmul.bf16 %v1061, %v1115
    %v1119 = vmul.bf16 %v1062, %v1114
    %s1120 = scalar_lea.vmem %s2, 10
    %v1121 = vld [vmem:[%s1120] sm:$0x3]
    %v1124 = vcombine.high %v1118, %v1118
    %v1126 = vunpack.c.l.s4 1983009808
    %v1127 = vunpack.c.0.s8 %v1126
    %v1128 = vlaneseq
    %v1129 = vshrl.u32 %v1128, 7
    %v1130 = vsub.s32 %v1127, %v1129
    %v1131 = vrot.slane %v1118, %v1130
    %v1133 = vunpack.c.l.s4 1983009808
    %v1134 = vunpack.c.0.s8 %v1133
    %v1135 = vlaneseq
    %v1136 = vshrl.u32 %v1135, 7
    %v1137 = vsub.s32 %v1134, %v1136
    %v1138 = vrot.slane %v1124, %v1137
    %v1139 = vcombine.high %v1131, %v1131
    %v1140 = vcombine.high %v1138, %v1138
    %v1142 = vunpack.c.l.s4 1983009808
    %v1143 = vunpack.c.0.s8 %v1142
    %v1144 = vlaneseq
    %v1145 = vshrl.u32 %v1144, 7
    %v1146 = vsub.s32 %v1143, %v1145
    %v1147 = vrot.slane %v1119, %v1146
    %1148 = vrot.lane.b32.xlu0 %v1131, 127
    %v1149 = vpop.permute.xlu0 %1148
    %1150 = vrot.lane.b32.xlu0 %v1139, 127
    %v1151 = vpop.permute.xlu0 %1150
    %1152 = vrot.lane.b32.xlu0 %v1138, 127
    %v1153 = vpop.permute.xlu0 %1152
    %1154 = vrot.lane.b32.xlu0 %v1140, 127
    %v1155 = vpop.permute.xlu0 %1154
    %1156 = vrot.lane.b32.xlu0 %v1147, 127
    %v1157 = vpop.permute.xlu0 %1156
    %v1158 = vsel %vm789, %v1149, %v1151
    %v1159 = vsel %vm789, %v1151, %v1153
    %v1160 = vsel %vm789, %v1153, %v1155
    %v1161 = vsel %vm789, %v1155, %v1157
    %v1163 = vsel %vm288, %v1121, 0
    %v1166 = vsel %vm292, %v1158, 0
    %v1169 = vsel %vm292, %v1159, 0
    %v1172 = vsel %vm292, %v1160, 0
    %v1175 = vsel %vm292, %v1161, 0
    %1177 = vmatprep.subr.bf16.mxu0 %v1169
    %1178 = vmatpush1.bf16.msra.mxu0 %v1166
    %1179 = vmatprep.subr.bf16.mxu0 0
    %1180 = vmatpush1.bf16.msra.mxu0 0
    %1181 = vmatprep.subr.bf16.mxu0 0
    %1182 = vmatpush1.bf16.msra.mxu0 0
    %1183 = vmatprep.subr.bf16.mxu0 0
    %1184 = vmatpush1.bf16.msra.mxu0 0
    %1185 = vmatprep.subr.bf16.mxu0 0
    %1186 = vmatpush1.bf16.msra.mxu0 0
    %1187 = vmatprep.subr.bf16.mxu0 0
    %1188 = vmatpush1.bf16.msra.mxu0 0
    %1189 = vmatprep.subr.bf16.mxu0 0
    %1190 = vmatpush1.bf16.msra.mxu0 0
    %1191 = vmatprep.subr.bf16.mxu0 0
    %1192 = vmatpush1.bf16.msra.mxu0 0
    %1193 = vmatprep.subr.bf16.mxu0 0
    %1194 = vmatpush1.bf16.msra.mxu0 0
    %1195 = vmatprep.subr.bf16.mxu0 0
    %1196 = vmatpush1.bf16.msra.mxu0 0
    %1197 = vmatprep.subr.bf16.mxu0 0
    %1198 = vmatpush1.bf16.msra.mxu0 0
    %1199 = vmatprep.subr.bf16.mxu0 0
    %1200 = vmatpush1.bf16.msra.mxu0 0
    %1201 = vmatprep.subr.bf16.mxu0 0
    %1202 = vmatpush1.bf16.msra.mxu0 0
    %1203 = vmatprep.subr.bf16.mxu0 0
    %1204 = vmatpush1.bf16.msra.mxu0 0
    %1205 = vmatprep.subr.bf16.mxu0 0
    %1206 = vmatpush1.bf16.msra.mxu0 0
    %1207 = vmatprep.subr.bf16.mxu0 0
    %1208 = vmatpush1.bf16.msra.mxu0 0
    %1209 = vmatprep.mubr.bf16.mxu0 0
    %1210 = vmatmul.mubr.bf16.gmra.mrb[0].mxu0 %v1163
    %v1211 = vpop.f32.mrb[0].mxu0
    %v1212 = vadd.f32 0.0, %v1211
    %v1213 = vpop.f32.mrb[0].mxu0
    %v1214 = vadd.f32 0.0, %v1213
    %v1215 = vpop.f32.mrb[0].mxu0
    %v1216 = vpop.f32.mrb[0].mxu0
    %1217 = vdwg.mxu0
    %1218 = vmatprep.subr.bf16.mxu0 %v1175
    %1219 = vmatpush1.bf16.msra.mxu0 %v1172
    %1220 = vmatprep.subr.bf16.mxu0 0
    %1221 = vmatpush1.bf16.msra.mxu0 0
    %1222 = vmatprep.subr.bf16.mxu0 0
    %1223 = vmatpush1.bf16.msra.mxu0 0
    %1224 = vmatprep.subr.bf16.mxu0 0
    %1225 = vmatpush1.bf16.msra.mxu0 0
    %1226 = vmatprep.subr.bf16.mxu0 0
    %1227 = vmatpush1.bf16.msra.mxu0 0
    %1228 = vmatprep.subr.bf16.mxu0 0
    %1229 = vmatpush1.bf16.msra.mxu0 0
    %1230 = vmatprep.subr.bf16.mxu0 0
    %1231 = vmatpush1.bf16.msra.mxu0 0
    %1232 = vmatprep.subr.bf16.mxu0 0
    %1233 = vmatpush1.bf16.msra.mxu0 0
    %1234 = vmatprep.subr.bf16.mxu0 0
    %1235 = vmatpush1.bf16.msra.mxu0 0
    %1236 = vmatprep.subr.bf16.mxu0 0
    %1237 = vmatpush1.bf16.msra.mxu0 0
    %1238 = vmatprep.subr.bf16.mxu0 0
    %1239 = vmatpush1.bf16.msra.mxu0 0
    %1240 = vmatprep.subr.bf16.mxu0 0
    %1241 = vmatpush1.bf16.msra.mxu0 0
    %1242 = vmatprep.subr.bf16.mxu0 0
    %1243 = vmatpush1.bf16.msra.mxu0 0
    %1244 = vmatprep.subr.bf16.mxu0 0
    %1245 = vmatpush1.bf16.msra.mxu0 0
    %1246 = vmatprep.subr.bf16.mxu0 0
    %1247 = vmatpush1.bf16.msra.mxu0 0
    %1248 = vmatprep.subr.bf16.mxu0 0
    %1249 = vmatpush1.bf16.msra.mxu0 0
    %1250 = vmatprep.mubr.bf16.mxu0 0
    %1251 = vmatmul.mubr.bf16.gmra.mrb[0].mxu0 %v1163
    %v1252 = vpop.f32.mrb[0].mxu0
    %v1253 = vadd.f32 0.0, %v1252
    %v1254 = vpop.f32.mrb[0].mxu0
    %v1255 = vadd.f32 0.0, %v1254
    %v1256 = vpop.f32.mrb[0].mxu0
    %v1257 = vpop.f32.mrb[0].mxu0
    %1258 = vdwg.mxu0
    %v1259 = vadd.f32 %v1057, %v1212
    %v1260 = vadd.f32 %v1058, %v1214
    %v1261 = vadd.f32 %v1059, %v1253
    %v1262 = vadd.f32 %v1060, %v1255
    %v1263 = vld [vmem:[#allocation2 + $0x2] sm:$0xff]
    %v1264 = vld [vmem:[#allocation2 + $0xa] sm:$0x3]
    %v1266 = vcombine.high %v53, %v53
    %v1268 = vunpack.c.l.s4 1983009808
    %v1269 = vunpack.c.0.s8 %v1268
    %v1270 = vlaneseq
    %v1271 = vshrl.u32 %v1270, 7
    %v1272 = vsub.s32 %v1269, %v1271
    %v1273 = vrot.slane %v53, %v1272
    %v1275 = vunpack.c.l.s4 1983009808
    %v1276 = vunpack.c.0.s8 %v1275
    %v1277 = vlaneseq
    %v1278 = vshrl.u32 %v1277, 7
    %v1279 = vsub.s32 %v1276, %v1278
    %v1280 = vrot.slane %v1266, %v1279
    %v1281 = vcombine.high %v1273, %v1273
    %v1282 = vcombine.high %v1280, %v1280
    %v1284 = vshrl.u32 %v1273, 16
    %v1285 = vpack.i.b16 %v1284, %v1284
    %v1287 = vlaneseq
    %v1288 = vshrl.u32 %v1287, 7
    %v1289 = vsub.s32 0, %v1288
    %v1290 = vrot.slane %v1285, %v1289
    %v1292 = vshrl.u32 %v1281, 16
    %v1293 = vpack.i.b16 %v1292, %v1292
    %v1295 = vlaneseq
    %v1296 = vshrl.u32 %v1295, 7
    %v1297 = vsub.s32 0, %v1296
    %v1298 = vrot.slane %v1293, %v1297
    %v1300 = vshrl.u32 %v1280, 16
    %v1301 = vpack.i.b16 %v1300, %v1300
    %v1303 = vlaneseq
    %v1304 = vshrl.u32 %v1303, 7
    %v1305 = vsub.s32 0, %v1304
    %v1306 = vrot.slane %v1301, %v1305
    %v1308 = vshrl.u32 %v1282, 16
    %v1309 = vpack.i.b16 %v1308, %v1308
    %v1311 = vlaneseq
    %v1312 = vshrl.u32 %v1311, 7
    %v1313 = vsub.s32 0, %v1312
    %v1314 = vrot.slane %v1309, %v1313
    %v1319 = vcombine.low %v1290, %v1298
    %v1320 = vcombine.low %v1306, %v1314
    %v1322 = vunpack.c.l.s4 1983009808
    %v1323 = vunpack.c.0.s8 %v1322
    %v1324 = vlaneseq
    %v1325 = vshrl.u32 %v1324, 7
    %v1326 = vsub.s32 %v1323, %v1325
    %v1327 = vrot.slane %v1319, %v1326
    %v1329 = vunpack.c.l.s4 1983009808
    %v1330 = vunpack.c.0.s8 %v1329
    %v1331 = vlaneseq
    %v1332 = vshrl.u32 %v1331, 7
    %v1333 = vsub.s32 %v1330, %v1332
    %v1334 = vrot.slane %v1320, %v1333
    %v1335 = vcombine.low %v1327, %v1334
    %1336 = vrot.lane.b32.xlu0 %v1335, 15
    %v1337 = vpop.permute.xlu0 %1336
    %v1338 = vrot.slane %v1337, 6
    %v1339 = vsel %vm641, %v1338, %v1337
    %v1342 = vmul.bf16 %v1263, %v1339
    %v1343 = vmul.bf16 %v1264, %v1338
    %s1344 = scalar_lea.vmem %s2, 12
    %v1345 = vld [vmem:[%s1344] sm:$0x3]
    %v1348 = vcombine.high %v1342, %v1342
    %v1350 = vunpack.c.l.s4 1983009808
    %v1351 = vunpack.c.0.s8 %v1350
    %v1352 = vlaneseq
    %v1353 = vshrl.u32 %v1352, 7
    %v1354 = vsub.s32 %v1351, %v1353
    %v1355 = vrot.slane %v1342, %v1354
    %v1357 = vunpack.c.l.s4 1983009808
    %v1358 = vunpack.c.0.s8 %v1357
    %v1359 = vlaneseq
    %v1360 = vshrl.u32 %v1359, 7
    %v1361 = vsub.s32 %v1358, %v1360
    %v1362 = vrot.slane %v1348, %v1361
    %v1363 = vcombine.high %v1355, %v1355
    %v1364 = vcombine.high %v1362, %v1362
    %v1366 = vunpack.c.l.s4 1983009808
    %v1367 = vunpack.c.0.s8 %v1366
    %v1368 = vlaneseq
    %v1369 = vshrl.u32 %v1368, 7
    %v1370 = vsub.s32 %v1367, %v1369
    %v1371 = vrot.slane %v1343, %v1370
    %1372 = vrot.lane.b32.xlu0 %v1355, 113
    %v1373 = vpop.permute.xlu0 %1372
    %1374 = vrot.lane.b32.xlu0 %v1363, 113
    %v1375 = vpop.permute.xlu0 %1374
    %1376 = vrot.lane.b32.xlu0 %v1362, 113
    %v1377 = vpop.permute.xlu0 %1376
    %1378 = vrot.lane.b32.xlu0 %v1364, 113
    %v1379 = vpop.permute.xlu0 %1378
    %1380 = vrot.lane.b32.xlu0 %v1371, 113
    %v1381 = vpop.permute.xlu0 %1380
    %v1382 = vsel %vm597, %v1373, %v1375
    %v1383 = vsel %vm597, %v1375, %v1377
    %v1384 = vsel %vm597, %v1377, %v1379
    %v1385 = vsel %vm597, %v1379, %v1381
    %v1387 = vsel %vm288, %v1345, 0
    %v1390 = vsel %vm292, %v1382, 0
    %v1393 = vsel %vm292, %v1383, 0
    %v1396 = vsel %vm292, %v1384, 0
    %v1399 = vsel %vm292, %v1385, 0
    %1401 = vmatprep.subr.bf16.mxu0 %v1393
    %1402 = vmatpush1.bf16.msra.mxu0 %v1390
    %1403 = vmatprep.subr.bf16.mxu0 0
    %1404 = vmatpush1.bf16.msra.mxu0 0
    %1405 = vmatprep.subr.bf16.mxu0 0
    %1406 = vmatpush1.bf16.msra.mxu0 0
    %1407 = vmatprep.subr.bf16.mxu0 0
    %1408 = vmatpush1.bf16.msra.mxu0 0
    %1409 = vmatprep.subr.bf16.mxu0 0
    %1410 = vmatpush1.bf16.msra.mxu0 0
    %1411 = vmatprep.subr.bf16.mxu0 0
    %1412 = vmatpush1.bf16.msra.mxu0 0
    %1413 = vmatprep.subr.bf16.mxu0 0
    %1414 = vmatpush1.bf16.msra.mxu0 0
    %1415 = vmatprep.subr.bf16.mxu0 0
    %1416 = vmatpush1.bf16.msra.mxu0 0
    %1417 = vmatprep.subr.bf16.mxu0 0
    %1418 = vmatpush1.bf16.msra.mxu0 0
    %1419 = vmatprep.subr.bf16.mxu0 0
    %1420 = vmatpush1.bf16.msra.mxu0 0
    %1421 = vmatprep.subr.bf16.mxu0 0
    %1422 = vmatpush1.bf16.msra.mxu0 0
    %1423 = vmatprep.subr.bf16.mxu0 0
    %1424 = vmatpush1.bf16.msra.mxu0 0
    %1425 = vmatprep.subr.bf16.mxu0 0
    %1426 = vmatpush1.bf16.msra.mxu0 0
    %1427 = vmatprep.subr.bf16.mxu0 0
    %1428 = vmatpush1.bf16.msra.mxu0 0
    %1429 = vmatprep.subr.bf16.mxu0 0
    %1430 = vmatpush1.bf16.msra.mxu0 0
    %1431 = vmatprep.subr.bf16.mxu0 0
    %1432 = vmatpush1.bf16.msra.mxu0 0
    %1433 = vmatprep.mubr.bf16.mxu0 0
    %1434 = vmatmul.mubr.bf16.gmra.mrb[0].mxu0 %v1387
    %v1435 = vpop.f32.mrb[0].mxu0
    %v1436 = vadd.f32 0.0, %v1435
    %v1437 = vpop.f32.mrb[0].mxu0
    %v1438 = vadd.f32 0.0, %v1437
    %v1439 = vpop.f32.mrb[0].mxu0
    %v1440 = vpop.f32.mrb[0].mxu0
    %1441 = vdwg.mxu0
    %1442 = vmatprep.subr.bf16.mxu0 %v1399
    %1443 = vmatpush1.bf16.msra.mxu0 %v1396
    %1444 = vmatprep.subr.bf16.mxu0 0
    %1445 = vmatpush1.bf16.msra.mxu0 0
    %1446 = vmatprep.subr.bf16.mxu0 0
    %1447 = vmatpush1.bf16.msra.mxu0 0
    %1448 = vmatprep.subr.bf16.mxu0 0
    %1449 = vmatpush1.bf16.msra.mxu0 0
    %1450 = vmatprep.subr.bf16.mxu0 0
    %1451 = vmatpush1.bf16.msra.mxu0 0
    %1452 = vmatprep.subr.bf16.mxu0 0
    %1453 = vmatpush1.bf16.msra.mxu0 0
    %1454 = vmatprep.subr.bf16.mxu0 0
    %1455 = vmatpush1.bf16.msra.mxu0 0
    %1456 = vmatprep.subr.bf16.mxu0 0
    %1457 = vmatpush1.bf16.msra.mxu0 0
    %1458 = vmatprep.subr.bf16.mxu0 0
    %1459 = vmatpush1.bf16.msra.mxu0 0
    %1460 = vmatprep.subr.bf16.mxu0 0
    %1461 = vmatpush1.bf16.msra.mxu0 0
    %1462 = vmatprep.subr.bf16.mxu0 0
    %1463 = vmatpush1.bf16.msra.mxu0 0
    %1464 = vmatprep.subr.bf16.mxu0 0
    %1465 = vmatpush1.bf16.msra.mxu0 0
    %1466 = vmatprep.subr.bf16.mxu0 0
    %1467 = vmatpush1.bf16.msra.mxu0 0
    %1468 = vmatprep.subr.bf16.mxu0 0
    %1469 = vmatpush1.bf16.msra.mxu0 0
    %1470 = vmatprep.subr.bf16.mxu0 0
    %1471 = vmatpush1.bf16.msra.mxu0 0
    %1472 = vmatprep.subr.bf16.mxu0 0
    %1473 = vmatpush1.bf16.msra.mxu0 0
    %1474 = vmatprep.mubr.bf16.mxu0 0
    %1475 = vmatmul.mubr.bf16.gmra.mrb[0].mxu0 %v1387
    %v1476 = vpop.f32.mrb[0].mxu0
    %v1477 = vadd.f32 0.0, %v1476
    %v1478 = vpop.f32.mrb[0].mxu0
    %v1479 = vadd.f32 0.0, %v1478
    %v1480 = vpop.f32.mrb[0].mxu0
    %v1481 = vpop.f32.mrb[0].mxu0
    %1482 = vdwg.mxu0
    %v1483 = vadd.f32 %v1259, %v1436
    %v1484 = vadd.f32 %v1260, %v1438
    %v1485 = vadd.f32 %v1261, %v1477
    %v1486 = vadd.f32 %v1262, %v1479
    %v1487 = vld [vmem:[#allocation2 + $0x2] sm:$0xff]
    %v1488 = vld [vmem:[#allocation2 + $0xa] sm:$0x3]
    %v1489 = vlaneseq
    %v1490 = vshrl.u32 %v1489, 7
    %v1491 = vsub.s32 0, %v1490
    %v1492 = vrot.slane %v1064, %v1491
    %v1493 = vlaneseq
    %v1494 = vshrl.u32 %v1493, 7
    %v1495 = vsub.s32 0, %v1494
    %v1496 = vrot.slane %v1071, %v1495
    %v1497 = vlaneseq
    %v1498 = vshrl.u32 %v1497, 7
    %v1499 = vsub.s32 0, %v1498
    %v1500 = vrot.slane %v1078, %v1499
    %v1501 = vlaneseq
    %v1502 = vshrl.u32 %v1501, 7
    %v1503 = vsub.s32 0, %v1502
    %v1504 = vrot.slane %v1085, %v1503
    %v1509 = vcombine.low %v1492, %v1496
    %v1510 = vcombine.low %v1500, %v1504
    %v1512 = vunpack.c.l.s4 1983009808
    %v1513 = vunpack.c.0.s8 %v1512
    %v1514 = vlaneseq
    %v1515 = vshrl.u32 %v1514, 7
    %v1516 = vsub.s32 %v1513, %v1515
    %v1517 = vrot.slane %v1509, %v1516
    %v1519 = vunpack.c.l.s4 1983009808
    %v1520 = vunpack.c.0.s8 %v1519
    %v1521 = vlaneseq
    %v1522 = vshrl.u32 %v1521, 7
    %v1523 = vsub.s32 %v1520, %v1522
    %v1524 = vrot.slane %v1510, %v1523
    %v1525 = vcombine.low %v1517, %v1524
    %1526 = vrot.lane.b32.xlu0 %v1525, 16
    %v1527 = vpop.permute.xlu0 %1526
    %v1528 = vrot.slane %v1527, 6
    %v1529 = vsel %vm283, %v1528, %v1527
    %v1532 = vmul.bf16 %v1487, %v1529
    %v1533 = vmul.bf16 %v1488, %v1528
    %s1534 = scalar_lea.vmem %s2, 14
    %v1535 = vld [vmem:[%s1534] sm:$0x3]
    %v1538 = vcombine.high %v1532, %v1532
    %v1540 = vunpack.c.l.s4 1983009808
    %v1541 = vunpack.c.0.s8 %v1540
    %v1542 = vlaneseq
    %v1543 = vshrl.u32 %v1542, 7
    %v1544 = vsub.s32 %v1541, %v1543
    %v1545 = vrot.slane %v1532, %v1544
    %v1547 = vunpack.c.l.s4 1983009808
    %v1548 = vunpack.c.0.s8 %v1547
    %v1549 = vlaneseq
    %v1550 = vshrl.u32 %v1549, 7
    %v1551 = vsub.s32 %v1548, %v1550
    %v1552 = vrot.slane %v1538, %v1551
    %v1553 = vcombine.high %v1545, %v1545
    %v1554 = vcombine.high %v1552, %v1552
    %v1556 = vunpack.c.l.s4 1983009808
    %v1557 = vunpack.c.0.s8 %v1556
    %v1558 = vlaneseq
    %v1559 = vshrl.u32 %v1558, 7
    %v1560 = vsub.s32 %v1557, %v1559
    %v1561 = vrot.slane %v1533, %v1560
    %1562 = vrot.lane.b32.xlu0 %v1545, 112
    %v1563 = vpop.permute.xlu0 %1562
    %1564 = vrot.lane.b32.xlu0 %v1553, 112
    %v1565 = vpop.permute.xlu0 %1564
    %1566 = vrot.lane.b32.xlu0 %v1552, 112
    %v1567 = vpop.permute.xlu0 %1566
    %1568 = vrot.lane.b32.xlu0 %v1554, 112
    %v1569 = vpop.permute.xlu0 %1568
    %1570 = vrot.lane.b32.xlu0 %v1561, 112
    %v1571 = vpop.permute.xlu0 %1570
    %v1572 = vsel %vm239, %v1563, %v1565
    %v1573 = vsel %vm239, %v1565, %v1567
    %v1574 = vsel %vm239, %v1567, %v1569
    %v1575 = vsel %vm239, %v1569, %v1571
    %v1577 = vsel %vm288, %v1535, 0
    %v1580 = vsel %vm292, %v1572, 0
    %v1583 = vsel %vm292, %v1573, 0
    %v1586 = vsel %vm292, %v1574, 0
    %v1589 = vsel %vm292, %v1575, 0
    %1591 = vmatprep.subr.bf16.mxu0 %v1583
    %1592 = vmatpush1.bf16.msra.mxu0 %v1580
    %1593 = vmatprep.subr.bf16.mxu0 0
    %1594 = vmatpush1.bf16.msra.mxu0 0
    %1595 = vmatprep.subr.bf16.mxu0 0
    %1596 = vmatpush1.bf16.msra.mxu0 0
    %1597 = vmatprep.subr.bf16.mxu0 0
    %1598 = vmatpush1.bf16.msra.mxu0 0
    %1599 = vmatprep.subr.bf16.mxu0 0
    %1600 = vmatpush1.bf16.msra.mxu0 0
    %1601 = vmatprep.subr.bf16.mxu0 0
    %1602 = vmatpush1.bf16.msra.mxu0 0
    %1603 = vmatprep.subr.bf16.mxu0 0
    %1604 = vmatpush1.bf16.msra.mxu0 0
    %1605 = vmatprep.subr.bf16.mxu0 0
    %1606 = vmatpush1.bf16.msra.mxu0 0
    %1607 = vmatprep.subr.bf16.mxu0 0
    %1608 = vmatpush1.bf16.msra.mxu0 0
    %1609 = vmatprep.subr.bf16.mxu0 0
    %1610 = vmatpush1.bf16.msra.mxu0 0
    %1611 = vmatprep.subr.bf16.mxu0 0
    %1612 = vmatpush1.bf16.msra.mxu0 0
    %1613 = vmatprep.subr.bf16.mxu0 0
    %1614 = vmatpush1.bf16.msra.mxu0 0
    %1615 = vmatprep.subr.bf16.mxu0 0
    %1616 = vmatpush1.bf16.msra.mxu0 0
    %1617 = vmatprep.subr.bf16.mxu0 0
    %1618 = vmatpush1.bf16.msra.mxu0 0
    %1619 = vmatprep.subr.bf16.mxu0 0
    %1620 = vmatpush1.bf16.msra.mxu0 0
    %1621 = vmatprep.subr.bf16.mxu0 0
    %1622 = vmatpush1.bf16.msra.mxu0 0
    %1623 = vmatprep.mubr.bf16.mxu0 0
    %1624 = vmatmul.mubr.bf16.gmra.mrb[0].mxu0 %v1577
    %v1625 = vpop.f32.mrb[0].mxu0
    %v1626 = vadd.f32 0.0, %v1625
    %v1627 = vpop.f32.mrb[0].mxu0
    %v1628 = vadd.f32 0.0, %v1627
    %v1629 = vpop.f32.mrb[0].mxu0
    %v1630 = vpop.f32.mrb[0].mxu0
    %1631 = vdwg.mxu0
    %1632 = vmatprep.subr.bf16.mxu0 %v1589
    %1633 = vmatpush1.bf16.msra.mxu0 %v1586
    %1634 = vmatprep.subr.bf16.mxu0 0
    %1635 = vmatpush1.bf16.msra.mxu0 0
    %1636 = vmatprep.subr.bf16.mxu0 0
    %1637 = vmatpush1.bf16.msra.mxu0 0
    %1638 = vmatprep.subr.bf16.mxu0 0
    %1639 = vmatpush1.bf16.msra.mxu0 0
    %1640 = vmatprep.subr.bf16.mxu0 0
    %1641 = vmatpush1.bf16.msra.mxu0 0
    %1642 = vmatprep.subr.bf16.mxu0 0
    %1643 = vmatpush1.bf16.msra.mxu0 0
    %1644 = vmatprep.subr.bf16.mxu0 0
    %1645 = vmatpush1.bf16.msra.mxu0 0
    %1646 = vmatprep.subr.bf16.mxu0 0
    %1647 = vmatpush1.bf16.msra.mxu0 0
    %1648 = vmatprep.subr.bf16.mxu0 0
    %1649 = vmatpush1.bf16.msra.mxu0 0
    %1650 = vmatprep.subr.bf16.mxu0 0
    %1651 = vmatpush1.bf16.msra.mxu0 0
    %1652 = vmatprep.subr.bf16.mxu0 0
    %1653 = vmatpush1.bf16.msra.mxu0 0
    %1654 = vmatprep.subr.bf16.mxu0 0
    %1655 = vmatpush1.bf16.msra.mxu0 0
    %1656 = vmatprep.subr.bf16.mxu0 0
    %1657 = vmatpush1.bf16.msra.mxu0 0
    %1658 = vmatprep.subr.bf16.mxu0 0
    %1659 = vmatpush1.bf16.msra.mxu0 0
    %1660 = vmatprep.subr.bf16.mxu0 0
    %1661 = vmatpush1.bf16.msra.mxu0 0
    %1662 = vmatprep.subr.bf16.mxu0 0
    %1663 = vmatpush1.bf16.msra.mxu0 0
    %1664 = vmatprep.mubr.bf16.mxu0 0
    %1665 = vmatmul.mubr.bf16.gmra.mrb[0].mxu0 %v1577
    %v1666 = vpop.f32.mrb[0].mxu0
    %v1667 = vadd.f32 0.0, %v1666
    %v1668 = vpop.f32.mrb[0].mxu0
    %v1669 = vadd.f32 0.0, %v1668
    %v1670 = vpop.f32.mrb[0].mxu0
    %v1671 = vpop.f32.mrb[0].mxu0
    %1672 = vdwg.mxu0
    %v1673 = vadd.f32 %v1483, %v1626
    %v1674 = vadd.f32 %v1484, %v1628
    %v1675 = vadd.f32 %v1485, %v1667
    %v1676 = vadd.f32 %v1486, %v1669
    %v1677 = vld [vmem:[#allocation2 + $0x2] sm:$0xff]
    %v1678 = vld [vmem:[#allocation2 + $0xa] sm:$0x3]
    %v1679 = vshrl.u32 %v101, 16
    %v1680 = vpack.i.b16 %v1679, %v1679
    %v1682 = vlaneseq
    %v1683 = vshrl.u32 %v1682, 7
    %v1684 = vsub.s32 0, %v1683
    %v1685 = vrot.slane %v1680, %v1684
    %v1686 = vshrl.u32 %v109, 16
    %v1687 = vpack.i.b16 %v1686, %v1686
    %v1689 = vlaneseq
    %v1690 = vshrl.u32 %v1689, 7
    %v1691 = vsub.s32 0, %v1690
    %v1692 = vrot.slane %v1687, %v1691
    %v1693 = vshrl.u32 %v108, 16
    %v1694 = vpack.i.b16 %v1693, %v1693
    %v1696 = vlaneseq
    %v1697 = vshrl.u32 %v1696, 7
    %v1698 = vsub.s32 0, %v1697
    %v1699 = vrot.slane %v1694, %v1698
    %v1700 = vshrl.u32 %v110, 16
    %v1701 = vpack.i.b16 %v1700, %v1700
    %v1703 = vlaneseq
    %v1704 = vshrl.u32 %v1703, 7
    %v1705 = vsub.s32 0, %v1704
    %v1706 = vrot.slane %v1701, %v1705
    %v1711 = vcombine.low %v1685, %v1692
    %v1712 = vcombine.low %v1699, %v1706
    %v1714 = vunpack.c.l.s4 1983009808
    %v1715 = vunpack.c.0.s8 %v1714
    %v1716 = vlaneseq
    %v1717 = vshrl.u32 %v1716, 7
    %v1718 = vsub.s32 %v1715, %v1717
    %v1719 = vrot.slane %v1711, %v1718
    %v1721 = vunpack.c.l.s4 1983009808
    %v1722 = vunpack.c.0.s8 %v1721
    %v1723 = vlaneseq
    %v1724 = vshrl.u32 %v1723, 7
    %v1725 = vsub.s32 %v1722, %v1724
    %v1726 = vrot.slane %v1712, %v1725
    %v1727 = vcombine.low %v1719, %v1726
    %1728 = vrot.lane.b32.xlu0 %v1727, 17
    %v1729 = vpop.permute.xlu0 %1728
    %v1730 = vrot.slane %v1729, 6
    %v1731 = vsel %vm423, %v1730, %v1729
    %v1734 = vmul.bf16 %v1677, %v1731
    %v1735 = vmul.bf16 %v1678, %v1730
    %s1736 = scalar_lea.vmem %s2, 16
    %v1737 = vld [vmem:[%s1736] sm:$0x3]
    %v1740 = vcombine.high %v1734, %v1734
    %v1742 = vunpack.c.l.s4 1983009808
    %v1743 = vunpack.c.0.s8 %v1742
    %v1744 = vlaneseq
    %v1745 = vshrl.u32 %v1744, 7
    %v1746 = vsub.s32 %v1743, %v1745
    %v1747 = vrot.slane %v1734, %v1746
    %v1749 = vunpack.c.l.s4 1983009808
    %v1750 = vunpack.c.0.s8 %v1749
    %v1751 = vlaneseq
    %v1752 = vshrl.u32 %v1751, 7
    %v1753 = vsub.s32 %v1750, %v1752
    %v1754 = vrot.slane %v1740, %v1753
    %v1755 = vcombine.high %v1747, %v1747
    %v1756 = vcombine.high %v1754, %v1754
    %v1758 = vunpack.c.l.s4 1983009808
    %v1759 = vunpack.c.0.s8 %v1758
    %v1760 = vlaneseq
    %v1761 = vshrl.u32 %v1760, 7
    %v1762 = vsub.s32 %v1759, %v1761
    %v1763 = vrot.slane %v1735, %v1762
    %1764 = vrot.lane.b32.xlu0 %v1747, 111
    %v1765 = vpop.permute.xlu0 %1764
    %1766 = vrot.lane.b32.xlu0 %v1755, 111
    %v1767 = vpop.permute.xlu0 %1766
    %1768 = vrot.lane.b32.xlu0 %v1754, 111
    %v1769 = vpop.permute.xlu0 %1768
    %1770 = vrot.lane.b32.xlu0 %v1756, 111
    %v1771 = vpop.permute.xlu0 %1770
    %1772 = vrot.lane.b32.xlu0 %v1763, 111
    %v1773 = vpop.permute.xlu0 %1772
    %v1774 = vsel %vm163, %v1765, %v1767
    %v1775 = vsel %vm163, %v1767, %v1769
    %v1776 = vsel %vm163, %v1769, %v1771
    %v1777 = vsel %vm163, %v1771, %v1773
    %v1779 = vsel %vm288, %v1737, 0
    %v1782 = vsel %vm292, %v1774, 0
    %v1785 = vsel %vm292, %v1775, 0
    %v1788 = vsel %vm292, %v1776, 0
    %v1791 = vsel %vm292, %v1777, 0
    %1793 = vmatprep.subr.bf16.mxu0 %v1785
    %1794 = vmatpush1.bf16.msra.mxu0 %v1782
    %1795 = vmatprep.subr.bf16.mxu0 0
    %1796 = vmatpush1.bf16.msra.mxu0 0
    %1797 = vmatprep.subr.bf16.mxu0 0
    %1798 = vmatpush1.bf16.msra.mxu0 0
    %1799 = vmatprep.subr.bf16.mxu0 0
    %1800 = vmatpush1.bf16.msra.mxu0 0
    %1801 = vmatprep.subr.bf16.mxu0 0
    %1802 = vmatpush1.bf16.msra.mxu0 0
    %1803 = vmatprep.subr.bf16.mxu0 0
    %1804 = vmatpush1.bf16.msra.mxu0 0
    %1805 = vmatprep.subr.bf16.mxu0 0
    %1806 = vmatpush1.bf16.msra.mxu0 0
    %1807 = vmatprep.subr.bf16.mxu0 0
    %1808 = vmatpush1.bf16.msra.mxu0 0
    %1809 = vmatprep.subr.bf16.mxu0 0
    %1810 = vmatpush1.bf16.msra.mxu0 0
    %1811 = vmatprep.subr.bf16.mxu0 0
    %1812 = vmatpush1.bf16.msra.mxu0 0
    %1813 = vmatprep.subr.bf16.mxu0 0
    %1814 = vmatpush1.bf16.msra.mxu0 0
    %1815 = vmatprep.subr.bf16.mxu0 0
    %1816 = vmatpush1.bf16.msra.mxu0 0
    %1817 = vmatprep.subr.bf16.mxu0 0
    %1818 = vmatpush1.bf16.msra.mxu0 0
    %1819 = vmatprep.subr.bf16.mxu0 0
    %1820 = vmatpush1.bf16.msra.mxu0 0
    %1821 = vmatprep.subr.bf16.mxu0 0
    %1822 = vmatpush1.bf16.msra.mxu0 0
    %1823 = vmatprep.subr.bf16.mxu0 0
    %1824 = vmatpush1.bf16.msra.mxu0 0
    %1825 = vmatprep.mubr.bf16.mxu0 0
    %1826 = vmatmul.mubr.bf16.gmra.mrb[0].mxu0 %v1779
    %v1827 = vpop.f32.mrb[0].mxu0
    %v1828 = vadd.f32 0.0, %v1827
    %v1829 = vpop.f32.mrb[0].mxu0
    %v1830 = vadd.f32 0.0, %v1829
    %v1831 = vpop.f32.mrb[0].mxu0
    %v1832 = vpop.f32.mrb[0].mxu0
    %1833 = vdwg.mxu0
    %1834 = vmatprep.subr.bf16.mxu0 %v1791
    %1835 = vmatpush1.bf16.msra.mxu0 %v1788
    %1836 = vmatprep.subr.bf16.mxu0 0
    %1837 = vmatpush1.bf16.msra.mxu0 0
    %1838 = vmatprep.subr.bf16.mxu0 0
    %1839 = vmatpush1.bf16.msra.mxu0 0
    %1840 = vmatprep.subr.bf16.mxu0 0
    %1841 = vmatpush1.bf16.msra.mxu0 0
    %1842 = vmatprep.subr.bf16.mxu0 0
    %1843 = vmatpush1.bf16.msra.mxu0 0
    %1844 = vmatprep.subr.bf16.mxu0 0
    %1845 = vmatpush1.bf16.msra.mxu0 0
    %1846 = vmatprep.subr.bf16.mxu0 0
    %1847 = vmatpush1.bf16.msra.mxu0 0
    %1848 = vmatprep.subr.bf16.mxu0 0
    %1849 = vmatpush1.bf16.msra.mxu0 0
    %1850 = vmatprep.subr.bf16.mxu0 0
    %1851 = vmatpush1.bf16.msra.mxu0 0
    %1852 = vmatprep.subr.bf16.mxu0 0
    %1853 = vmatpush1.bf16.msra.mxu0 0
    %1854 = vmatprep.subr.bf16.mxu0 0
    %1855 = vmatpush1.bf16.msra.mxu0 0
    %1856 = vmatprep.subr.bf16.mxu0 0
    %1857 = vmatpush1.bf16.msra.mxu0 0
    %1858 = vmatprep.subr.bf16.mxu0 0
    %1859 = vmatpush1.bf16.msra.mxu0 0
    %1860 = vmatprep.subr.bf16.mxu0 0
    %1861 = vmatpush1.bf16.msra.mxu0 0
    %1862 = vmatprep.subr.bf16.mxu0 0
    %1863 = vmatpush1.bf16.msra.mxu0 0
    %1864 = vmatprep.subr.bf16.mxu0 0
    %1865 = vmatpush1.bf16.msra.mxu0 0
    %1866 = vmatprep.mubr.bf16.mxu0 0
    %1867 = vmatmul.mubr.bf16.gmra.mrb[0].mxu0 %v1779
    %v1868 = vpop.f32.mrb[0].mxu0
    %v1869 = vadd.f32 0.0, %v1868
    %v1870 = vpop.f32.mrb[0].mxu0
    %v1871 = vadd.f32 0.0, %v1870
    %v1872 = vpop.f32.mrb[0].mxu0
    %v1873 = vpop.f32.mrb[0].mxu0
    %1874 = vdwg.mxu0
    %v1875 = vadd.f32 %v1673, %v1828
    %v1876 = vadd.f32 %v1674, %v1830
    %v1877 = vadd.f32 %v1675, %v1869
    %v1878 = vadd.f32 %v1676, %v1871
    %vm1879 = vcmask 1043456
    %v1880 = vsel %vm1879, %v1875, 0.0
    %v1881 = vsel %vm1879, %v1876, 0.0
    %v1882 = vadd.f32 %v1880, %v1881
    %v1883 = vsel %vm1879, %v1877, 0.0
    %v1884 = vadd.f32 %v1882, %v1883
    %v1885 = vsel %vm1879, %v1878, 0.0
    %v1886 = vadd.f32 %v1884, %v1885
    %1887 = vadd.xlane.f32.xlu0 %v1886
    %v1888 = vpop.xlane.xlu0 %1887
    %v1889 = vmul.f32 %v1888, 0.001953125
    %v1890 = vmul.f32 %v1875, %v1875
    %v1891 = vmul.f32 %v1876, %v1876
    %v1892 = vmul.f32 %v1877, %v1877
    %v1893 = vmul.f32 %v1878, %v1878
    %v1894 = vsel %vm1879, %v1890, 0.0
    %v1895 = vsel %vm1879, %v1891, 0.0
    %v1896 = vadd.f32 %v1894, %v1895
    %v1897 = vsel %vm1879, %v1892, 0.0
    %v1898 = vadd.f32 %v1896, %v1897
    %v1899 = vsel %vm1879, %v1893, 0.0
    %v1900 = vadd.f32 %v1898, %v1899
    %1901 = vadd.xlane.f32.xlu0 %v1900
    %v1902 = vpop.xlane.xlu0 %1901
    %v1903 = vmul.f32 %v1902, 0.001953125
    %v1904 = vmul.f32 %v1889, %v1889
    %v1905 = vsub.f32 %v1903, %v1904
    %v1906 = vmax.f32 %v1905, 0.0
    %v1907 = vld [vmem:[%s3] sm:$0xf]
    %v1908 = vadd.f32 %v1906, 1e-05
    %v1909 = vrsqrt.pop %v1908
    %v1910 = vmul.f32 %v1907, %v1909
    %v1911 = vld [vmem:[%s4] sm:$0xf]
    %v1912 = vmul.f32 %v1889, %v1910
    %v1913 = vsub.f32 %v1911, %v1912
    %1915 = vset.pattern.permute.xlu0 0
    %1916 = vperm.xlu0 %1915, %v1910
    %v1917 = vpop.permute.xlu0 %1916
    %v1919 = vmul.f32 %v1875, %v1917
    %v1920 = vmul.f32 %v1876, %v1917
    %v1921 = vmul.f32 %v1877, %v1917
    %v1922 = vmul.f32 %v1878, %v1917
    %1924 = vset.pattern.permute.xlu0 0
    %1925 = vperm.xlu0 %1924, %v1913
    %v1926 = vpop.permute.xlu0 %1925
    %v1928 = vadd.f32 %v1919, %v1926
    %v1929 = vadd.f32 %v1920, %v1926
    %v1930 = vadd.f32 %v1921, %v1926
    %v1931 = vadd.f32 %v1922, %v1926
    %s1932 = sld [smem:[#allocation3]]
    %vm1933 = vcmp.ge.f32.partialorder %v1928, 0.0
    %vm1934 = vcmp.ge.f32.partialorder %v1929, 0.0
    %vm1935 = vcmp.ge.f32.partialorder %v1930, 0.0
    %vm1936 = vcmp.ge.f32.partialorder %v1931, 0.0
    %v1937 = vstv %s1932
    %v1938 = vmul.f32 %v1937, %v1928
    %v1939 = vmul.f32 %v1937, %v1929
    %v1940 = vmul.f32 %v1937, %v1930
    %v1941 = vmul.f32 %v1937, %v1931
    %v1942 = vsel %vm1933, %v1928, %v1938
    %v1943 = vsel %vm1934, %v1929, %v1939
    %v1944 = vsel %vm1935, %v1930, %v1940
    %v1945 = vsel %vm1936, %v1931, %v1941
    %v1946 = vpack.c.bf16 %v1942, %v1942
    %v1947 = vpack.c.bf16 %v1943, %v1943
    %v1948 = vpack.c.bf16 %v1944, %v1944
    %v1949 = vpack.c.bf16 %v1945, %v1945
    %v1954 = vcombine.low %v1946, %v1947
    %v1955 = vcombine.low %v1948, %v1949
    %v1957 = vunpack.c.l.s4 1983009808
    %v1958 = vunpack.c.0.s8 %v1957
    %v1959 = vlaneseq
    %v1960 = vshrl.u32 %v1959, 7
    %v1961 = vsub.s32 %v1958, %v1960
    %v1962 = vrot.slane %v1954, %v1961
    %v1964 = vunpack.c.l.s4 1983009808
    %v1965 = vunpack.c.0.s8 %v1964
    %v1966 = vlaneseq
    %v1967 = vshrl.u32 %v1966, 7
    %v1968 = vsub.s32 %v1965, %v1967
    %v1969 = vrot.slane %v1955, %v1968
    %v1970 = vcombine.low %v1962, %v1969
    %1972 = vst [vmem:[#allocation2 + $0x2] sm:$0xff] %v1970
    %v1973 = vld [vmem:[#allocation2] sm:$0xff]
    %v1974 = vld [vmem:[#allocation2 + $0x8] sm:$0x3]
    %v1975 = vmul.bf16 %v1973, %v164
    %v1976 = vmul.bf16 %v1974, %v162
    %v1977 = vld [vmem:[%s6] sm:$0x3]
    %v1978 = vmul.bf16 %v1973, %v240
    %v1979 = vmul.bf16 %v1974, %v238
    %s1980 = scalar_lea.vmem %s6, 2
    %v1981 = vld [vmem:[%s1980] sm:$0x3]
    %v1984 = vcombine.high %v1978, %v1978
    %v1986 = vunpack.c.l.s4 1983009808
    %v1987 = vunpack.c.0.s8 %v1986
    %v1988 = vlaneseq
    %v1989 = vshrl.u32 %v1988, 7
    %v1990 = vsub.s32 %v1987, %v1989
    %v1991 = vrot.slane %v1978, %v1990
    %v1993 = vunpack.c.l.s4 1983009808
    %v1994 = vunpack.c.0.s8 %v1993
    %v1995 = vlaneseq
    %v1996 = vshrl.u32 %v1995, 7
    %v1997 = vsub.s32 %v1994, %v1996
    %v1998 = vrot.slane %v1984, %v1997
    %v1999 = vcombine.high %v1991, %v1991
    %v2000 = vcombine.high %v1998, %v1998
    %v2002 = vunpack.c.l.s4 1983009808
    %v2003 = vunpack.c.0.s8 %v2002
    %v2004 = vlaneseq
    %v2005 = vshrl.u32 %v2004, 7
    %v2006 = vsub.s32 %v2003, %v2005
    %v2007 = vrot.slane %v1979, %v2006
    %2008 = vrot.lane.b32.xlu0 %v1991, 16
    %v2009 = vpop.permute.xlu0 %2008
    %2010 = vrot.lane.b32.xlu0 %v1999, 16
    %v2011 = vpop.permute.xlu0 %2010
    %2012 = vrot.lane.b32.xlu0 %v1998, 16
    %v2013 = vpop.permute.xlu0 %2012
    %2014 = vrot.lane.b32.xlu0 %v2000, 16
    %v2015 = vpop.permute.xlu0 %2014
    %2016 = vrot.lane.b32.xlu0 %v2007, 16
    %v2017 = vpop.permute.xlu0 %2016
    %v2018 = vsel %vm283, %v2009, %v2011
    %v2019 = vsel %vm283, %v2011, %v2013
    %v2020 = vsel %vm283, %v2013, %v2015
    %v2021 = vsel %vm283, %v2015, %v2017
    %v2023 = vsel %vm288, %v1981, 0
    %v2026 = vsel %vm292, %v2018, 0
    %v2029 = vsel %vm292, %v2019, 0
    %v2032 = vsel %vm292, %v2020, 0
    %v2035 = vsel %vm292, %v2021, 0
    %2037 = vmatprep.subr.bf16.mxu0 %v2029
    %2038 = vmatpush1.bf16.msra.mxu0 %v2026
    %2039 = vmatprep.subr.bf16.mxu0 0
    %2040 = vmatpush1.bf16.msra.mxu0 0
    %2041 = vmatprep.subr.bf16.mxu0 0
    %2042 = vmatpush1.bf16.msra.mxu0 0
    %2043 = vmatprep.subr.bf16.mxu0 0
    %2044 = vmatpush1.bf16.msra.mxu0 0
    %2045 = vmatprep.subr.bf16.mxu0 0
    %2046 = vmatpush1.bf16.msra.mxu0 0
    %2047 = vmatprep.subr.bf16.mxu0 0
    %2048 = vmatpush1.bf16.msra.mxu0 0
    %2049 = vmatprep.subr.bf16.mxu0 0
    %2050 = vmatpush1.bf16.msra.mxu0 0
    %2051 = vmatprep.subr.bf16.mxu0 0
    %2052 = vmatpush1.bf16.msra.mxu0 0
    %2053 = vmatprep.subr.bf16.mxu0 0
    %2054 = vmatpush1.bf16.msra.mxu0 0
    %2055 = vmatprep.subr.bf16.mxu0 0
    %2056 = vmatpush1.bf16.msra.mxu0 0
    %2057 = vmatprep.subr.bf16.mxu0 0
    %2058 = vmatpush1.bf16.msra.mxu0 0
    %2059 = vmatprep.subr.bf16.mxu0 0
    %2060 = vmatpush1.bf16.msra.mxu0 0
    %2061 = vmatprep.subr.bf16.mxu0 0
    %2062 = vmatpush1.bf16.msra.mxu0 0
    %2063 = vmatprep.subr.bf16.mxu0 0
    %2064 = vmatpush1.bf16.msra.mxu0 0
    %2065 = vmatprep.subr.bf16.mxu0 0
    %2066 = vmatpush1.bf16.msra.mxu0 0
    %2067 = vmatprep.subr.bf16.mxu0 0
    %2068 = vmatpush1.bf16.msra.mxu0 0
    %2069 = vmatprep.mubr.bf16.mxu0 0
    %2070 = vmatmul.mubr.bf16.gmra.mrb[0].mxu0 %v2023
    %v2071 = vpop.f32.mrb[0].mxu0
    %v2072 = vadd.f32 0.0, %v2071
    %v2073 = vpop.f32.mrb[0].mxu0
    %v2074 = vadd.f32 0.0, %v2073
    %v2075 = vpop.f32.mrb[0].mxu0
    %v2076 = vpop.f32.mrb[0].mxu0
    %2077 = vdwg.mxu0
    %2078 = vmatprep.subr.bf16.mxu0 %v2035
    %2079 = vmatpush1.bf16.msra.mxu0 %v2032
    %2080 = vmatprep.subr.bf16.mxu0 0
    %2081 = vmatpush1.bf16.msra.mxu0 0
    %2082 = vmatprep.subr.bf16.mxu0 0
    %2083 = vmatpush1.bf16.msra.mxu0 0
    %2084 = vmatprep.subr.bf16.mxu0 0
    %2085 = vmatpush1.bf16.msra.mxu0 0
    %2086 = vmatprep.subr.bf16.mxu0 0
    %2087 = vmatpush1.bf16.msra.mxu0 0
    %2088 = vmatprep.subr.bf16.mxu0 0
    %2089 = vmatpush1.bf16.msra.mxu0 0
    %2090 = vmatprep.subr.bf16.mxu0 0
    %2091 = vmatpush1.bf16.msra.mxu0 0
    %2092 = vmatprep.subr.bf16.mxu0 0
    %2093 = vmatpush1.bf16.msra.mxu0 0
    %2094 = vmatprep.subr.bf16.mxu0 0
    %2095 = vmatpush1.bf16.msra.mxu0 0
    %2096 = vmatprep.subr.bf16.mxu0 0
    %2097 = vmatpush1.bf16.msra.mxu0 0
    %2098 = vmatprep.subr.bf16.mxu0 0
    %2099 = vmatpush1.bf16.msra.mxu0 0
    %2100 = vmatprep.subr.bf16.mxu0 0
    %2101 = vmatpush1.bf16.msra.mxu0 0
    %2102 = vmatprep.subr.bf16.mxu0 0
    %2103 = vmatpush1.bf16.msra.mxu0 0
    %2104 = vmatprep.subr.bf16.mxu0 0
    %2105 = vmatpush1.bf16.msra.mxu0 0
    %2106 = vmatprep.subr.bf16.mxu0 0
    %2107 = vmatpush1.bf16.msra.mxu0 0
    %2108 = vmatprep.subr.bf16.mxu0 0
    %2109 = vmatpush1.bf16.msra.mxu0 0
    %2110 = vmatprep.mubr.bf16.mxu0 0
    %2111 = vmatmul.mubr.bf16.gmra.mrb[0].mxu0 %v2023
    %v2112 = vpop.f32.mrb[0].mxu0
    %v2113 = vadd.f32 0.0, %v2112
    %v2114 = vpop.f32.mrb[0].mxu0
    %v2115 = vadd.f32 0.0, %v2114
    %v2116 = vpop.f32.mrb[0].mxu0
    %v2117 = vpop.f32.mrb[0].mxu0
    %2118 = vdwg.mxu0
    %v2121 = vcombine.high %v1975, %v1975
    %v2123 = vunpack.c.l.s4 1983009808
    %v2124 = vunpack.c.0.s8 %v2123
    %v2125 = vlaneseq
    %v2126 = vshrl.u32 %v2125, 7
    %v2127 = vsub.s32 %v2124, %v2126
    %v2128 = vrot.slane %v1975, %v2127
    %v2130 = vunpack.c.l.s4 1983009808
    %v2131 = vunpack.c.0.s8 %v2130
    %v2132 = vlaneseq
    %v2133 = vshrl.u32 %v2132, 7
    %v2134 = vsub.s32 %v2131, %v2133
    %v2135 = vrot.slane %v2121, %v2134
    %v2136 = vcombine.high %v2128, %v2128
    %v2137 = vcombine.high %v2135, %v2135
    %v2139 = vunpack.c.l.s4 1983009808
    %v2140 = vunpack.c.0.s8 %v2139
    %v2141 = vlaneseq
    %v2142 = vshrl.u32 %v2141, 7
    %v2143 = vsub.s32 %v2140, %v2142
    %v2144 = vrot.slane %v1976, %v2143
    %2145 = vrot.lane.b32.xlu0 %v2128, 17
    %v2146 = vpop.permute.xlu0 %2145
    %2147 = vrot.lane.b32.xlu0 %v2136, 17
    %v2148 = vpop.permute.xlu0 %2147
    %2149 = vrot.lane.b32.xlu0 %v2135, 17
    %v2150 = vpop.permute.xlu0 %2149
    %2151 = vrot.lane.b32.xlu0 %v2137, 17
    %v2152 = vpop.permute.xlu0 %2151
    %2153 = vrot.lane.b32.xlu0 %v2144, 17
    %v2154 = vpop.permute.xlu0 %2153
    %v2155 = vsel %vm423, %v2146, %v2148
    %v2156 = vsel %vm423, %v2148, %v2150
    %v2157 = vsel %vm423, %v2150, %v2152
    %v2158 = vsel %vm423, %v2152, %v2154
    %v2160 = vsel %vm288, %v1977, 0
    %v2163 = vsel %vm292, %v2155, 0
    %v2166 = vsel %vm292, %v2156, 0
    %v2169 = vsel %vm292, %v2157, 0
    %v2172 = vsel %vm292, %v2158, 0
    %2174 = vmatprep.subr.bf16.mxu0 %v2166
    %2175 = vmatpush1.bf16.msra.mxu0 %v2163
    %2176 = vmatprep.subr.bf16.mxu0 0
    %2177 = vmatpush1.bf16.msra.mxu0 0
    %2178 = vmatprep.subr.bf16.mxu0 0
    %2179 = vmatpush1.bf16.msra.mxu0 0
    %2180 = vmatprep.subr.bf16.mxu0 0
    %2181 = vmatpush1.bf16.msra.mxu0 0
    %2182 = vmatprep.subr.bf16.mxu0 0
    %2183 = vmatpush1.bf16.msra.mxu0 0
    %2184 = vmatprep.subr.bf16.mxu0 0
    %2185 = vmatpush1.bf16.msra.mxu0 0
    %2186 = vmatprep.subr.bf16.mxu0 0
    %2187 = vmatpush1.bf16.msra.mxu0 0
    %2188 = vmatprep.subr.bf16.mxu0 0
    %2189 = vmatpush1.bf16.msra.mxu0 0
    %2190 = vmatprep.subr.bf16.mxu0 0
    %2191 = vmatpush1.bf16.msra.mxu0 0
    %2192 = vmatprep.subr.bf16.mxu0 0
    %2193 = vmatpush1.bf16.msra.mxu0 0
    %2194 = vmatprep.subr.bf16.mxu0 0
    %2195 = vmatpush1.bf16.msra.mxu0 0
    %2196 = vmatprep.subr.bf16.mxu0 0
    %2197 = vmatpush1.bf16.msra.mxu0 0
    %2198 = vmatprep.subr.bf16.mxu0 0
    %2199 = vmatpush1.bf16.msra.mxu0 0
    %2200 = vmatprep.subr.bf16.mxu0 0
    %2201 = vmatpush1.bf16.msra.mxu0 0
    %2202 = vmatprep.subr.bf16.mxu0 0
    %2203 = vmatpush1.bf16.msra.mxu0 0
    %2204 = vmatprep.subr.bf16.mxu0 0
    %2205 = vmatpush1.bf16.msra.mxu0 0
    %2206 = vmatprep.mubr.bf16.mxu0 0
    %2207 = vmatmul.mubr.bf16.gmra.mrb[0].mxu0 %v2160
    %v2208 = vpop.f32.mrb[0].mxu0
    %v2209 = vadd.f32 %v2072, %v2208
    %v2210 = vpop.f32.mrb[0].mxu0
    %v2211 = vadd.f32 %v2074, %v2210
    %v2212 = vpop.f32.mrb[0].mxu0
    %v2213 = vpop.f32.mrb[0].mxu0
    %2214 = vdwg.mxu0
    %2215 = vmatprep.subr.bf16.mxu0 %v2172
    %2216 = vmatpush1.bf16.msra.mxu0 %v2169
    %2217 = vmatprep.subr.bf16.mxu0 0
    %2218 = vmatpush1.bf16.msra.mxu0 0
    %2219 = vmatprep.subr.bf16.mxu0 0
    %2220 = vmatpush1.bf16.msra.mxu0 0
    %2221 = vmatprep.subr.bf16.mxu0 0
    %2222 = vmatpush1.bf16.msra.mxu0 0
    %2223 = vmatprep.subr.bf16.mxu0 0
    %2224 = vmatpush1.bf16.msra.mxu0 0
    %2225 = vmatprep.subr.bf16.mxu0 0
    %2226 = vmatpush1.bf16.msra.mxu0 0
    %2227 = vmatprep.subr.bf16.mxu0 0
    %2228 = vmatpush1.bf16.msra.mxu0 0
    %2229 = vmatprep.subr.bf16.mxu0 0
    %2230 = vmatpush1.bf16.msra.mxu0 0
    %2231 = vmatprep.subr.bf16.mxu0 0
    %2232 = vmatpush1.bf16.msra.mxu0 0
    %2233 = vmatprep.subr.bf16.mxu0 0
    %2234 = vmatpush1.bf16.msra.mxu0 0
    %2235 = vmatprep.subr.bf16.mxu0 0
    %2236 = vmatpush1.bf16.msra.mxu0 0
    %2237 = vmatprep.subr.bf16.mxu0 0
    %2238 = vmatpush1.bf16.msra.mxu0 0
    %2239 = vmatprep.subr.bf16.mxu0 0
    %2240 = vmatpush1.bf16.msra.mxu0 0
    %2241 = vmatprep.subr.bf16.mxu0 0
    %2242 = vmatpush1.bf16.msra.mxu0 0
    %2243 = vmatprep.subr.bf16.mxu0 0
    %2244 = vmatpush1.bf16.msra.mxu0 0
    %2245 = vmatprep.subr.bf16.mxu0 0
    %2246 = vmatpush1.bf16.msra.mxu0 0
    %2247 = vmatprep.mubr.bf16.mxu0 0
    %2248 = vmatmul.mubr.bf16.gmra.mrb[0].mxu0 %v2160
    %v2249 = vpop.f32.mrb[0].mxu0
    %v2250 = vadd.f32 %v2113, %v2249
    %v2251 = vpop.f32.mrb[0].mxu0
    %v2252 = vadd.f32 %v2115, %v2251
    %v2253 = vpop.f32.mrb[0].mxu0
    %v2254 = vpop.f32.mrb[0].mxu0
    %2255 = vdwg.mxu0
    %v2256 = vld [vmem:[#allocation2] sm:$0xff]
    %v2257 = vld [vmem:[#allocation2 + $0x8] sm:$0x3]
    %v2258 = vmul.bf16 %v2256, %v598
    %v2259 = vmul.bf16 %v2257, %v596
    %s2260 = scalar_lea.vmem %s6, 4
    %v2261 = vld [vmem:[%s2260] sm:$0x3]
    %v2264 = vcombine.high %v2258, %v2258
    %v2266 = vunpack.c.l.s4 1983009808
    %v2267 = vunpack.c.0.s8 %v2266
    %v2268 = vlaneseq
    %v2269 = vshrl.u32 %v2268, 7
    %v2270 = vsub.s32 %v2267, %v2269
    %v2271 = vrot.slane %v2258, %v2270
    %v2273 = vunpack.c.l.s4 1983009808
    %v2274 = vunpack.c.0.s8 %v2273
    %v2275 = vlaneseq
    %v2276 = vshrl.u32 %v2275, 7
    %v2277 = vsub.s32 %v2274, %v2276
    %v2278 = vrot.slane %v2264, %v2277
    %v2279 = vcombine.high %v2271, %v2271
    %v2280 = vcombine.high %v2278, %v2278
    %v2282 = vunpack.c.l.s4 1983009808
    %v2283 = vunpack.c.0.s8 %v2282
    %v2284 = vlaneseq
    %v2285 = vshrl.u32 %v2284, 7
    %v2286 = vsub.s32 %v2283, %v2285
    %v2287 = vrot.slane %v2259, %v2286
    %2288 = vrot.lane.b32.xlu0 %v2271, 15
    %v2289 = vpop.permute.xlu0 %2288
    %2290 = vrot.lane.b32.xlu0 %v2279, 15
    %v2291 = vpop.permute.xlu0 %2290
    %2292 = vrot.lane.b32.xlu0 %v2278, 15
    %v2293 = vpop.permute.xlu0 %2292
    %2294 = vrot.lane.b32.xlu0 %v2280, 15
    %v2295 = vpop.permute.xlu0 %2294
    %2296 = vrot.lane.b32.xlu0 %v2287, 15
    %v2297 = vpop.permute.xlu0 %2296
    %v2298 = vsel %vm641, %v2289, %v2291
    %v2299 = vsel %vm641, %v2291, %v2293
    %v2300 = vsel %vm641, %v2293, %v2295
    %v2301 = vsel %vm641, %v2295, %v2297
    %v2303 = vsel %vm288, %v2261, 0
    %v2306 = vsel %vm292, %v2298, 0
    %v2309 = vsel %vm292, %v2299, 0
    %v2312 = vsel %vm292, %v2300, 0
    %v2315 = vsel %vm292, %v2301, 0
    %2317 = vmatprep.subr.bf16.mxu0 %v2309
    %2318 = vmatpush1.bf16.msra.mxu0 %v2306
    %2319 = vmatprep.subr.bf16.mxu0 0
    %2320 = vmatpush1.bf16.msra.mxu0 0
    %2321 = vmatprep.subr.bf16.mxu0 0
    %2322 = vmatpush1.bf16.msra.mxu0 0
    %2323 = vmatprep.subr.bf16.mxu0 0
    %2324 = vmatpush1.bf16.msra.mxu0 0
    %2325 = vmatprep.subr.bf16.mxu0 0
    %2326 = vmatpush1.bf16.msra.mxu0 0
    %2327 = vmatprep.subr.bf16.mxu0 0
    %2328 = vmatpush1.bf16.msra.mxu0 0
    %2329 = vmatprep.subr.bf16.mxu0 0
    %2330 = vmatpush1.bf16.msra.mxu0 0
    %2331 = vmatprep.subr.bf16.mxu0 0
    %2332 = vmatpush1.bf16.msra.mxu0 0
    %2333 = vmatprep.subr.bf16.mxu0 0
    %2334 = vmatpush1.bf16.msra.mxu0 0
    %2335 = vmatprep.subr.bf16.mxu0 0
    %2336 = vmatpush1.bf16.msra.mxu0 0
    %2337 = vmatprep.subr.bf16.mxu0 0
    %2338 = vmatpush1.bf16.msra.mxu0 0
    %2339 = vmatprep.subr.bf16.mxu0 0
    %2340 = vmatpush1.bf16.msra.mxu0 0
    %2341 = vmatprep.subr.bf16.mxu0 0
    %2342 = vmatpush1.bf16.msra.mxu0 0
    %2343 = vmatprep.subr.bf16.mxu0 0
    %2344 = vmatpush1.bf16.msra.mxu0 0
    %2345 = vmatprep.subr.bf16.mxu0 0
    %2346 = vmatpush1.bf16.msra.mxu0 0
    %2347 = vmatprep.subr.bf16.mxu0 0
    %2348 = vmatpush1.bf16.msra.mxu0 0
    %2349 = vmatprep.mubr.bf16.mxu0 0
    %2350 = vmatmul.mubr.bf16.gmra.mrb[0].mxu0 %v2303
    %v2351 = vpop.f32.mrb[0].mxu0
    %v2352 = vadd.f32 0.0, %v2351
    %v2353 = vpop.f32.mrb[0].mxu0
    %v2354 = vadd.f32 0.0, %v2353
    %v2355 = vpop.f32.mrb[0].mxu0
    %v2356 = vpop.f32.mrb[0].mxu0
    %2357 = vdwg.mxu0
    %2358 = vmatprep.subr.bf16.mxu0 %v2315
    %2359 = vmatpush1.bf16.msra.mxu0 %v2312
    %2360 = vmatprep.subr.bf16.mxu0 0
    %2361 = vmatpush1.bf16.msra.mxu0 0
    %2362 = vmatprep.subr.bf16.mxu0 0
    %2363 = vmatpush1.bf16.msra.mxu0 0
    %2364 = vmatprep.subr.bf16.mxu0 0
    %2365 = vmatpush1.bf16.msra.mxu0 0
    %2366 = vmatprep.subr.bf16.mxu0 0
    %2367 = vmatpush1.bf16.msra.mxu0 0
    %2368 = vmatprep.subr.bf16.mxu0 0
    %2369 = vmatpush1.bf16.msra.mxu0 0
    %2370 = vmatprep.subr.bf16.mxu0 0
    %2371 = vmatpush1.bf16.msra.mxu0 0
    %2372 = vmatprep.subr.bf16.mxu0 0
    %2373 = vmatpush1.bf16.msra.mxu0 0
    %2374 = vmatprep.subr.bf16.mxu0 0
    %2375 = vmatpush1.bf16.msra.mxu0 0
    %2376 = vmatprep.subr.bf16.mxu0 0
    %2377 = vmatpush1.bf16.msra.mxu0 0
    %2378 = vmatprep.subr.bf16.mxu0 0
    %2379 = vmatpush1.bf16.msra.mxu0 0
    %2380 = vmatprep.subr.bf16.mxu0 0
    %2381 = vmatpush1.bf16.msra.mxu0 0
    %2382 = vmatprep.subr.bf16.mxu0 0
    %2383 = vmatpush1.bf16.msra.mxu0 0
    %2384 = vmatprep.subr.bf16.mxu0 0
    %2385 = vmatpush1.bf16.msra.mxu0 0
    %2386 = vmatprep.subr.bf16.mxu0 0
    %2387 = vmatpush1.bf16.msra.mxu0 0
    %2388 = vmatprep.subr.bf16.mxu0 0
    %2389 = vmatpush1.bf16.msra.mxu0 0
    %2390 = vmatprep.mubr.bf16.mxu0 0
    %2391 = vmatmul.mubr.bf16.gmra.mrb[0].mxu0 %v2303
    %v2392 = vpop.f32.mrb[0].mxu0
    %v2393 = vadd.f32 0.0, %v2392
    %v2394 = vpop.f32.mrb[0].mxu0
    %v2395 = vadd.f32 0.0, %v2394
    %v2396 = vpop.f32.mrb[0].mxu0
    %v2397 = vpop.f32.mrb[0].mxu0
    %2398 = vdwg.mxu0
    %v2399 = vadd.f32 %v2209, %v2352
    %v2400 = vadd.f32 %v2211, %v2354
    %v2401 = vadd.f32 %v2250, %v2393
    %v2402 = vadd.f32 %v2252, %v2395
    %v2403 = vld [vmem:[#allocation2] sm:$0xff]
    %v2404 = vld [vmem:[#allocation2 + $0x8] sm:$0x3]
    %v2405 = vmul.bf16 %v2403, %v790
    %v2406 = vmul.bf16 %v2404, %v788
    %s2407 = scalar_lea.vmem %s6, 6
    %v2408 = vld [vmem:[%s2407] sm:$0x3]
    %v2411 = vcombine.high %v2405, %v2405
    %v2413 = vunpack.c.l.s4 1983009808
    %v2414 = vunpack.c.0.s8 %v2413
    %v2415 = vlaneseq
    %v2416 = vshrl.u32 %v2415, 7
    %v2417 = vsub.s32 %v2414, %v2416
    %v2418 = vrot.slane %v2405, %v2417
    %v2420 = vunpack.c.l.s4 1983009808
    %v2421 = vunpack.c.0.s8 %v2420
    %v2422 = vlaneseq
    %v2423 = vshrl.u32 %v2422, 7
    %v2424 = vsub.s32 %v2421, %v2423
    %v2425 = vrot.slane %v2411, %v2424
    %v2426 = vcombine.high %v2418, %v2418
    %v2427 = vcombine.high %v2425, %v2425
    %v2429 = vunpack.c.l.s4 1983009808
    %v2430 = vunpack.c.0.s8 %v2429
    %v2431 = vlaneseq
    %v2432 = vshrl.u32 %v2431, 7
    %v2433 = vsub.s32 %v2430, %v2432
    %v2434 = vrot.slane %v2406, %v2433
    %2435 = vrot.lane.b32.xlu0 %v2418, 1
    %v2436 = vpop.permute.xlu0 %2435
    %2437 = vrot.lane.b32.xlu0 %v2426, 1
    %v2438 = vpop.permute.xlu0 %2437
    %2439 = vrot.lane.b32.xlu0 %v2425, 1
    %v2440 = vpop.permute.xlu0 %2439
    %2441 = vrot.lane.b32.xlu0 %v2427, 1
    %v2442 = vpop.permute.xlu0 %2441
    %2443 = vrot.lane.b32.xlu0 %v2434, 1
    %v2444 = vpop.permute.xlu0 %2443
    %v2445 = vsel %vm833, %v2436, %v2438
    %v2446 = vsel %vm833, %v2438, %v2440
    %v2447 = vsel %vm833, %v2440, %v2442
    %v2448 = vsel %vm833, %v2442, %v2444
    %v2450 = vsel %vm288, %v2408, 0
    %v2453 = vsel %vm292, %v2445, 0
    %v2456 = vsel %vm292, %v2446, 0
    %v2459 = vsel %vm292, %v2447, 0
    %v2462 = vsel %vm292, %v2448, 0
    %2464 = vmatprep.subr.bf16.mxu0 %v2456
    %2465 = vmatpush1.bf16.msra.mxu0 %v2453
    %2466 = vmatprep.subr.bf16.mxu0 0
    %2467 = vmatpush1.bf16.msra.mxu0 0
    %2468 = vmatprep.subr.bf16.mxu0 0
    %2469 = vmatpush1.bf16.msra.mxu0 0
    %2470 = vmatprep.subr.bf16.mxu0 0
    %2471 = vmatpush1.bf16.msra.mxu0 0
    %2472 = vmatprep.subr.bf16.mxu0 0
    %2473 = vmatpush1.bf16.msra.mxu0 0
    %2474 = vmatprep.subr.bf16.mxu0 0
    %2475 = vmatpush1.bf16.msra.mxu0 0
    %2476 = vmatprep.subr.bf16.mxu0 0
    %2477 = vmatpush1.bf16.msra.mxu0 0
    %2478 = vmatprep.subr.bf16.mxu0 0
    %2479 = vmatpush1.bf16.msra.mxu0 0
    %2480 = vmatprep.subr.bf16.mxu0 0
    %2481 = vmatpush1.bf16.msra.mxu0 0
    %2482 = vmatprep.subr.bf16.mxu0 0
    %2483 = vmatpush1.bf16.msra.mxu0 0
    %2484 = vmatprep.subr.bf16.mxu0 0
    %2485 = vmatpush1.bf16.msra.mxu0 0
    %2486 = vmatprep.subr.bf16.mxu0 0
    %2487 = vmatpush1.bf16.msra.mxu0 0
    %2488 = vmatprep.subr.bf16.mxu0 0
    %2489 = vmatpush1.bf16.msra.mxu0 0
    %2490 = vmatprep.subr.bf16.mxu0 0
    %2491 = vmatpush1.bf16.msra.mxu0 0
    %2492 = vmatprep.subr.bf16.mxu0 0
    %2493 = vmatpush1.bf16.msra.mxu0 0
    %2494 = vmatprep.subr.bf16.mxu0 0
    %2495 = vmatpush1.bf16.msra.mxu0 0
    %2496 = vmatprep.mubr.bf16.mxu0 0
    %2497 = vmatmul.mubr.bf16.gmra.mrb[0].mxu0 %v2450
    %v2498 = vpop.f32.mrb[0].mxu0
    %v2499 = vadd.f32 0.0, %v2498
    %v2500 = vpop.f32.mrb[0].mxu0
    %v2501 = vadd.f32 0.0, %v2500
    %v2502 = vpop.f32.mrb[0].mxu0
    %v2503 = vpop.f32.mrb[0].mxu0
    %2504 = vdwg.mxu0
    %2505 = vmatprep.subr.bf16.mxu0 %v2462
    %2506 = vmatpush1.bf16.msra.mxu0 %v2459
    %2507 = vmatprep.subr.bf16.mxu0 0
    %2508 = vmatpush1.bf16.msra.mxu0 0
    %2509 = vmatprep.subr.bf16.mxu0 0
    %2510 = vmatpush1.bf16.msra.mxu0 0
    %2511 = vmatprep.subr.bf16.mxu0 0
    %2512 = vmatpush1.bf16.msra.mxu0 0
    %2513 = vmatprep.subr.bf16.mxu0 0
    %2514 = vmatpush1.bf16.msra.mxu0 0
    %2515 = vmatprep.subr.bf16.mxu0 0
    %2516 = vmatpush1.bf16.msra.mxu0 0
    %2517 = vmatprep.subr.bf16.mxu0 0
    %2518 = vmatpush1.bf16.msra.mxu0 0
    %2519 = vmatprep.subr.bf16.mxu0 0
    %2520 = vmatpush1.bf16.msra.mxu0 0
    %2521 = vmatprep.subr.bf16.mxu0 0
    %2522 = vmatpush1.bf16.msra.mxu0 0
    %2523 = vmatprep.subr.bf16.mxu0 0
    %2524 = vmatpush1.bf16.msra.mxu0 0
    %2525 = vmatprep.subr.bf16.mxu0 0
    %2526 = vmatpush1.bf16.msra.mxu0 0
    %2527 = vmatprep.subr.bf16.mxu0 0
    %2528 = vmatpush1.bf16.msra.mxu0 0
    %2529 = vmatprep.subr.bf16.mxu0 0
    %2530 = vmatpush1.bf16.msra.mxu0 0
    %2531 = vmatprep.subr.bf16.mxu0 0
    %2532 = vmatpush1.bf16.msra.mxu0 0
    %2533 = vmatprep.subr.bf16.mxu0 0
    %2534 = vmatpush1.bf16.msra.mxu0 0
    %2535 = vmatprep.subr.bf16.mxu0 0
    %2536 = vmatpush1.bf16.msra.mxu0 0
    %2537 = vmatprep.mubr.bf16.mxu0 0
    %2538 = vmatmul.mubr.bf16.gmra.mrb[0].mxu0 %v2450
    %v2539 = vpop.f32.mrb[0].mxu0
    %v2540 = vadd.f32 0.0, %v2539
    %v2541 = vpop.f32.mrb[0].mxu0
    %v2542 = vadd.f32 0.0, %v2541
    %v2543 = vpop.f32.mrb[0].mxu0
    %v2544 = vpop.f32.mrb[0].mxu0
    %2545 = vdwg.mxu0
    %v2546 = vadd.f32 %v2399, %v2499
    %v2547 = vadd.f32 %v2400, %v2501
    %v2548 = vadd.f32 %v2401, %v2540
    %v2549 = vadd.f32 %v2402, %v2542
    %v2550 = vld [vmem:[#allocation2 + $0x2] sm:$0xff]
    %s2551 = scalar_lea.vmem %s6, 8
    %v2552 = vld [vmem:[%s2551] sm:$0x3]
    %v2554 = vcombine.high %v2550, %v2550
    %v2556 = vunpack.c.l.s4 1983009808
    %v2557 = vunpack.c.0.s8 %v2556
    %v2558 = vlaneseq
    %v2559 = vshrl.u32 %v2558, 7
    %v2560 = vsub.s32 %v2557, %v2559
    %v2561 = vrot.slane %v2550, %v2560
    %v2563 = vunpack.c.l.s4 1983009808
    %v2564 = vunpack.c.0.s8 %v2563
    %v2565 = vlaneseq
    %v2566 = vshrl.u32 %v2565, 7
    %v2567 = vsub.s32 %v2564, %v2566
    %v2568 = vrot.slane %v2554, %v2567
    %v2569 = vcombine.high %v2561, %v2561
    %v2570 = vcombine.high %v2568, %v2568
    %v2572 = vsel %vm288, %v2552, 0
    %v2575 = vsel %vm292, %v2561, 0
    %v2578 = vsel %vm292, %v2569, 0
    %v2581 = vsel %vm292, %v2568, 0
    %v2584 = vsel %vm292, %v2570, 0
    %2586 = vmatprep.subr.bf16.mxu0 %v2578
    %2587 = vmatpush1.bf16.msra.mxu0 %v2575
    %2588 = vmatprep.subr.bf16.mxu0 0
    %2589 = vmatpush1.bf16.msra.mxu0 0
    %2590 = vmatprep.subr.bf16.mxu0 0
    %2591 = vmatpush1.bf16.msra.mxu0 0
    %2592 = vmatprep.subr.bf16.mxu0 0
    %2593 = vmatpush1.bf16.msra.mxu0 0
    %2594 = vmatprep.subr.bf16.mxu0 0
    %2595 = vmatpush1.bf16.msra.mxu0 0
    %2596 = vmatprep.subr.bf16.mxu0 0
    %2597 = vmatpush1.bf16.msra.mxu0 0
    %2598 = vmatprep.subr.bf16.mxu0 0
    %2599 = vmatpush1.bf16.msra.mxu0 0
    %2600 = vmatprep.subr.bf16.mxu0 0
    %2601 = vmatpush1.bf16.msra.mxu0 0
    %2602 = vmatprep.subr.bf16.mxu0 0
    %2603 = vmatpush1.bf16.msra.mxu0 0
    %2604 = vmatprep.subr.bf16.mxu0 0
    %2605 = vmatpush1.bf16.msra.mxu0 0
    %2606 = vmatprep.subr.bf16.mxu0 0
    %2607 = vmatpush1.bf16.msra.mxu0 0
    %2608 = vmatprep.subr.bf16.mxu0 0
    %2609 = vmatpush1.bf16.msra.mxu0 0
    %2610 = vmatprep.subr.bf16.mxu0 0
    %2611 = vmatpush1.bf16.msra.mxu0 0
    %2612 = vmatprep.subr.bf16.mxu0 0
    %2613 = vmatpush1.bf16.msra.mxu0 0
    %2614 = vmatprep.subr.bf16.mxu0 0
    %2615 = vmatpush1.bf16.msra.mxu0 0
    %2616 = vmatprep.subr.bf16.mxu0 0
    %2617 = vmatpush1.bf16.msra.mxu0 0
    %2618 = vmatprep.mubr.bf16.mxu0 0
    %2619 = vmatmul.mubr.bf16.gmra.mrb[0].mxu0 %v2572
    %v2620 = vpop.f32.mrb[0].mxu0
    %v2621 = vadd.f32 0.0, %v2620
    %v2622 = vpop.f32.mrb[0].mxu0
    %v2623 = vadd.f32 0.0, %v2622
    %v2624 = vpop.f32.mrb[0].mxu0
    %v2625 = vpop.f32.mrb[0].mxu0
    %2626 = vdwg.mxu0
    %2627 = vmatprep.subr.bf16.mxu0 %v2584
    %2628 = vmatpush1.bf16.msra.mxu0 %v2581
    %2629 = vmatprep.subr.bf16.mxu0 0
    %2630 = vmatpush1.bf16.msra.mxu0 0
    %2631 = vmatprep.subr.bf16.mxu0 0
    %2632 = vmatpush1.bf16.msra.mxu0 0
    %2633 = vmatprep.subr.bf16.mxu0 0
    %2634 = vmatpush1.bf16.msra.mxu0 0
    %2635 = vmatprep.subr.bf16.mxu0 0
    %2636 = vmatpush1.bf16.msra.mxu0 0
    %2637 = vmatprep.subr.bf16.mxu0 0
    %2638 = vmatpush1.bf16.msra.mxu0 0
    %2639 = vmatprep.subr.bf16.mxu0 0
    %2640 = vmatpush1.bf16.msra.mxu0 0
    %2641 = vmatprep.subr.bf16.mxu0 0
    %2642 = vmatpush1.bf16.msra.mxu0 0
    %2643 = vmatprep.subr.bf16.mxu0 0
    %2644 = vmatpush1.bf16.msra.mxu0 0
    %2645 = vmatprep.subr.bf16.mxu0 0
    %2646 = vmatpush1.bf16.msra.mxu0 0
    %2647 = vmatprep.subr.bf16.mxu0 0
    %2648 = vmatpush1.bf16.msra.mxu0 0
    %2649 = vmatprep.subr.bf16.mxu0 0
    %2650 = vmatpush1.bf16.msra.mxu0 0
    %2651 = vmatprep.subr.bf16.mxu0 0
    %2652 = vmatpush1.bf16.msra.mxu0 0
    %2653 = vmatprep.subr.bf16.mxu0 0
    %2654 = vmatpush1.bf16.msra.mxu0 0
    %2655 = vmatprep.subr.bf16.mxu0 0
    %2656 = vmatpush1.bf16.msra.mxu0 0
    %2657 = vmatprep.subr.bf16.mxu0 0
    %2658 = vmatpush1.bf16.msra.mxu0 0
    %2659 = vmatprep.mubr.bf16.mxu0 0
    %2660 = vmatmul.mubr.bf16.gmra.mrb[0].mxu0 %v2572
    %v2661 = vpop.f32.mrb[0].mxu0
    %v2662 = vadd.f32 0.0, %v2661
    %v2663 = vpop.f32.mrb[0].mxu0
    %v2664 = vadd.f32 0.0, %v2663
    %v2665 = vpop.f32.mrb[0].mxu0
    %v2666 = vpop.f32.mrb[0].mxu0
    %2667 = vdwg.mxu0
    %v2668 = vadd.f32 %v2546, %v2621
    %v2669 = vadd.f32 %v2547, %v2623
    %v2670 = vadd.f32 %v2548, %v2662
    %v2671 = vadd.f32 %v2549, %v2664
    %v2672 = vld [vmem:[#allocation2 + $0x2] sm:$0xff]
    %v2673 = vld [vmem:[#allocation2 + $0xa] sm:$0x3]
    %v2674 = vmul.bf16 %v2672, %v1115
    %v2675 = vmul.bf16 %v2673, %v1114
    %s2676 = scalar_lea.vmem %s6, 10
    %v2677 = vld [vmem:[%s2676] sm:$0x3]
    %v2680 = vcombine.high %v2674, %v2674
    %v2682 = vunpack.c.l.s4 1983009808
    %v2683 = vunpack.c.0.s8 %v2682
    %v2684 = vlaneseq
    %v2685 = vshrl.u32 %v2684, 7
    %v2686 = vsub.s32 %v2683, %v2685
    %v2687 = vrot.slane %v2674, %v2686
    %v2689 = vunpack.c.l.s4 1983009808
    %v2690 = vunpack.c.0.s8 %v2689
    %v2691 = vlaneseq
    %v2692 = vshrl.u32 %v2691, 7
    %v2693 = vsub.s32 %v2690, %v2692
    %v2694 = vrot.slane %v2680, %v2693
    %v2695 = vcombine.high %v2687, %v2687
    %v2696 = vcombine.high %v2694, %v2694
    %v2698 = vunpack.c.l.s4 1983009808
    %v2699 = vunpack.c.0.s8 %v2698
    %v2700 = vlaneseq
    %v2701 = vshrl.u32 %v2700, 7
    %v2702 = vsub.s32 %v2699, %v2701
    %v2703 = vrot.slane %v2675, %v2702
    %2704 = vrot.lane.b32.xlu0 %v2687, 127
    %v2705 = vpop.permute.xlu0 %2704
    %2706 = vrot.lane.b32.xlu0 %v2695, 127
    %v2707 = vpop.permute.xlu0 %2706
    %2708 = vrot.lane.b32.xlu0 %v2694, 127
    %v2709 = vpop.permute.xlu0 %2708
    %2710 = vrot.lane.b32.xlu0 %v2696, 127
    %v2711 = vpop.permute.xlu0 %2710
    %2712 = vrot.lane.b32.xlu0 %v2703, 127
    %v2713 = vpop.permute.xlu0 %2712
    %v2714 = vsel %vm789, %v2705, %v2707
    %v2715 = vsel %vm789, %v2707, %v2709
    %v2716 = vsel %vm789, %v2709, %v2711
    %v2717 = vsel %vm789, %v2711, %v2713
    %v2719 = vsel %vm288, %v2677, 0
    %v2722 = vsel %vm292, %v2714, 0
    %v2725 = vsel %vm292, %v2715, 0
    %v2728 = vsel %vm292, %v2716, 0
    %v2731 = vsel %vm292, %v2717, 0
    %2733 = vmatprep.subr.bf16.mxu0 %v2725
    %2734 = vmatpush1.bf16.msra.mxu0 %v2722
    %2735 = vmatprep.subr.bf16.mxu0 0
    %2736 = vmatpush1.bf16.msra.mxu0 0
    %2737 = vmatprep.subr.bf16.mxu0 0
    %2738 = vmatpush1.bf16.msra.mxu0 0
    %2739 = vmatprep.subr.bf16.mxu0 0
    %2740 = vmatpush1.bf16.msra.mxu0 0
    %2741 = vmatprep.subr.bf16.mxu0 0
    %2742 = vmatpush1.bf16.msra.mxu0 0
    %2743 = vmatprep.subr.bf16.mxu0 0
    %2744 = vmatpush1.bf16.msra.mxu0 0
    %2745 = vmatprep.subr.bf16.mxu0 0
    %2746 = vmatpush1.bf16.msra.mxu0 0
    %2747 = vmatprep.subr.bf16.mxu0 0
    %2748 = vmatpush1.bf16.msra.mxu0 0
    %2749 = vmatprep.subr.bf16.mxu0 0
    %2750 = vmatpush1.bf16.msra.mxu0 0
    %2751 = vmatprep.subr.bf16.mxu0 0
    %2752 = vmatpush1.bf16.msra.mxu0 0
    %2753 = vmatprep.subr.bf16.mxu0 0
    %2754 = vmatpush1.bf16.msra.mxu0 0
    %2755 = vmatprep.subr.bf16.mxu0 0
    %2756 = vmatpush1.bf16.msra.mxu0 0
    %2757 = vmatprep.subr.bf16.mxu0 0
    %2758 = vmatpush1.bf16.msra.mxu0 0
    %2759 = vmatprep.subr.bf16.mxu0 0
    %2760 = vmatpush1.bf16.msra.mxu0 0
    %2761 = vmatprep.subr.bf16.mxu0 0
    %2762 = vmatpush1.bf16.msra.mxu0 0
    %2763 = vmatprep.subr.bf16.mxu0 0
    %2764 = vmatpush1.bf16.msra.mxu0 0
    %2765 = vmatprep.mubr.bf16.mxu0 0
    %2766 = vmatmul.mubr.bf16.gmra.mrb[0].mxu0 %v2719
    %v2767 = vpop.f32.mrb[0].mxu0
    %v2768 = vadd.f32 0.0, %v2767
    %v2769 = vpop.f32.mrb[0].mxu0
    %v2770 = vadd.f32 0.0, %v2769
    %v2771 = vpop.f32.mrb[0].mxu0
    %v2772 = vpop.f32.mrb[0].mxu0
    %2773 = vdwg.mxu0
    %2774 = vmatprep.subr.bf16.mxu0 %v2731
    %2775 = vmatpush1.bf16.msra.mxu0 %v2728
    %2776 = vmatprep.subr.bf16.mxu0 0
    %2777 = vmatpush1.bf16.msra.mxu0 0
    %2778 = vmatprep.subr.bf16.mxu0 0
    %2779 = vmatpush1.bf16.msra.mxu0 0
    %2780 = vmatprep.subr.bf16.mxu0 0
    %2781 = vmatpush1.bf16.msra.mxu0 0
    %2782 = vmatprep.subr.bf16.mxu0 0
    %2783 = vmatpush1.bf16.msra.mxu0 0
    %2784 = vmatprep.subr.bf16.mxu0 0
    %2785 = vmatpush1.bf16.msra.mxu0 0
    %2786 = vmatprep.subr.bf16.mxu0 0
    %2787 = vmatpush1.bf16.msra.mxu0 0
    %2788 = vmatprep.subr.bf16.mxu0 0
    %2789 = vmatpush1.bf16.msra.mxu0 0
    %2790 = vmatprep.subr.bf16.mxu0 0
    %2791 = vmatpush1.bf16.msra.mxu0 0
    %2792 = vmatprep.subr.bf16.mxu0 0
    %2793 = vmatpush1.bf16.msra.mxu0 0
    %2794 = vmatprep.subr.bf16.mxu0 0
    %2795 = vmatpush1.bf16.msra.mxu0 0
    %2796 = vmatprep.subr.bf16.mxu0 0
    %2797 = vmatpush1.bf16.msra.mxu0 0
    %2798 = vmatprep.subr.bf16.mxu0 0
    %2799 = vmatpush1.bf16.msra.mxu0 0
    %2800 = vmatprep.subr.bf16.mxu0 0
    %2801 = vmatpush1.bf16.msra.mxu0 0
    %2802 = vmatprep.subr.bf16.mxu0 0
    %2803 = vmatpush1.bf16.msra.mxu0 0
    %2804 = vmatprep.subr.bf16.mxu0 0
    %2805 = vmatpush1.bf16.msra.mxu0 0
    %2806 = vmatprep.mubr.bf16.mxu0 0
    %2807 = vmatmul.mubr.bf16.gmra.mrb[0].mxu0 %v2719
    %v2808 = vpop.f32.mrb[0].mxu0
    %v2809 = vadd.f32 0.0, %v2808
    %v2810 = vpop.f32.mrb[0].mxu0
    %v2811 = vadd.f32 0.0, %v2810
    %v2812 = vpop.f32.mrb[0].mxu0
    %v2813 = vpop.f32.mrb[0].mxu0
    %2814 = vdwg.mxu0
    %v2815 = vadd.f32 %v2668, %v2768
    %v2816 = vadd.f32 %v2669, %v2770
    %v2817 = vadd.f32 %v2670, %v2809
    %v2818 = vadd.f32 %v2671, %v2811
    %v2819 = vld [vmem:[#allocation2 + $0x2] sm:$0xff]
    %v2820 = vld [vmem:[#allocation2 + $0xa] sm:$0x3]
    %v2821 = vmul.bf16 %v2819, %v1339
    %v2822 = vmul.bf16 %v2820, %v1338
    %s2823 = scalar_lea.vmem %s6, 12
    %v2824 = vld [vmem:[%s2823] sm:$0x3]
    %v2827 = vcombine.high %v2821, %v2821
    %v2829 = vunpack.c.l.s4 1983009808
    %v2830 = vunpack.c.0.s8 %v2829
    %v2831 = vlaneseq
    %v2832 = vshrl.u32 %v2831, 7
    %v2833 = vsub.s32 %v2830, %v2832
    %v2834 = vrot.slane %v2821, %v2833
    %v2836 = vunpack.c.l.s4 1983009808
    %v2837 = vunpack.c.0.s8 %v2836
    %v2838 = vlaneseq
    %v2839 = vshrl.u32 %v2838, 7
    %v2840 = vsub.s32 %v2837, %v2839
    %v2841 = vrot.slane %v2827, %v2840
    %v2842 = vcombine.high %v2834, %v2834
    %v2843 = vcombine.high %v2841, %v2841
    %v2845 = vunpack.c.l.s4 1983009808
    %v2846 = vunpack.c.0.s8 %v2845
    %v2847 = vlaneseq
    %v2848 = vshrl.u32 %v2847, 7
    %v2849 = vsub.s32 %v2846, %v2848
    %v2850 = vrot.slane %v2822, %v2849
    %2851 = vrot.lane.b32.xlu0 %v2834, 113
    %v2852 = vpop.permute.xlu0 %2851
    %2853 = vrot.lane.b32.xlu0 %v2842, 113
    %v2854 = vpop.permute.xlu0 %2853
    %2855 = vrot.lane.b32.xlu0 %v2841, 113
    %v2856 = vpop.permute.xlu0 %2855
    %2857 = vrot.lane.b32.xlu0 %v2843, 113
    %v2858 = vpop.permute.xlu0 %2857
    %2859 = vrot.lane.b32.xlu0 %v2850, 113
    %v2860 = vpop.permute.xlu0 %2859
    %v2861 = vsel %vm597, %v2852, %v2854
    %v2862 = vsel %vm597, %v2854, %v2856
    %v2863 = vsel %vm597, %v2856, %v2858
    %v2864 = vsel %vm597, %v2858, %v2860
    %v2866 = vsel %vm288, %v2824, 0
    %v2869 = vsel %vm292, %v2861, 0
    %v2872 = vsel %vm292, %v2862, 0
    %v2875 = vsel %vm292, %v2863, 0
    %v2878 = vsel %vm292, %v2864, 0
    %2880 = vmatprep.subr.bf16.mxu0 %v2872
    %2881 = vmatpush1.bf16.msra.mxu0 %v2869
    %2882 = vmatprep.subr.bf16.mxu0 0
    %2883 = vmatpush1.bf16.msra.mxu0 0
    %2884 = vmatprep.subr.bf16.mxu0 0
    %2885 = vmatpush1.bf16.msra.mxu0 0
    %2886 = vmatprep.subr.bf16.mxu0 0
    %2887 = vmatpush1.bf16.msra.mxu0 0
    %2888 = vmatprep.subr.bf16.mxu0 0
    %2889 = vmatpush1.bf16.msra.mxu0 0
    %2890 = vmatprep.subr.bf16.mxu0 0
    %2891 = vmatpush1.bf16.msra.mxu0 0
    %2892 = vmatprep.subr.bf16.mxu0 0
    %2893 = vmatpush1.bf16.msra.mxu0 0
    %2894 = vmatprep.subr.bf16.mxu0 0
    %2895 = vmatpush1.bf16.msra.mxu0 0
    %2896 = vmatprep.subr.bf16.mxu0 0
    %2897 = vmatpush1.bf16.msra.mxu0 0
    %2898 = vmatprep.subr.bf16.mxu0 0
    %2899 = vmatpush1.bf16.msra.mxu0 0
    %2900 = vmatprep.subr.bf16.mxu0 0
    %2901 = vmatpush1.bf16.msra.mxu0 0
    %2902 = vmatprep.subr.bf16.mxu0 0
    %2903 = vmatpush1.bf16.msra.mxu0 0
    %2904 = vmatprep.subr.bf16.mxu0 0
    %2905 = vmatpush1.bf16.msra.mxu0 0
    %2906 = vmatprep.subr.bf16.mxu0 0
    %2907 = vmatpush1.bf16.msra.mxu0 0
    %2908 = vmatprep.subr.bf16.mxu0 0
    %2909 = vmatpush1.bf16.msra.mxu0 0
    %2910 = vmatprep.subr.bf16.mxu0 0
    %2911 = vmatpush1.bf16.msra.mxu0 0
    %2912 = vmatprep.mubr.bf16.mxu0 0
    %2913 = vmatmul.mubr.bf16.gmra.mrb[0].mxu0 %v2866
    %v2914 = vpop.f32.mrb[0].mxu0
    %v2915 = vadd.f32 0.0, %v2914
    %v2916 = vpop.f32.mrb[0].mxu0
    %v2917 = vadd.f32 0.0, %v2916
    %v2918 = vpop.f32.mrb[0].mxu0
    %v2919 = vpop.f32.mrb[0].mxu0
    %2920 = vdwg.mxu0
    %2921 = vmatprep.subr.bf16.mxu0 %v2878
    %2922 = vmatpush1.bf16.msra.mxu0 %v2875
    %2923 = vmatprep.subr.bf16.mxu0 0
    %2924 = vmatpush1.bf16.msra.mxu0 0
    %2925 = vmatprep.subr.bf16.mxu0 0
    %2926 = vmatpush1.bf16.msra.mxu0 0
    %2927 = vmatprep.subr.bf16.mxu0 0
    %2928 = vmatpush1.bf16.msra.mxu0 0
    %2929 = vmatprep.subr.bf16.mxu0 0
    %2930 = vmatpush1.bf16.msra.mxu0 0
    %2931 = vmatprep.subr.bf16.mxu0 0
    %2932 = vmatpush1.bf16.msra.mxu0 0
    %2933 = vmatprep.subr.bf16.mxu0 0
    %2934 = vmatpush1.bf16.msra.mxu0 0
    %2935 = vmatprep.subr.bf16.mxu0 0
    %2936 = vmatpush1.bf16.msra.mxu0 0
    %2937 = vmatprep.subr.bf16.mxu0 0
    %2938 = vmatpush1.bf16.msra.mxu0 0
    %2939 = vmatprep.subr.bf16.mxu0 0
    %2940 = vmatpush1.bf16.msra.mxu0 0
    %2941 = vmatprep.subr.bf16.mxu0 0
    %2942 = vmatpush1.bf16.msra.mxu0 0
    %2943 = vmatprep.subr.bf16.mxu0 0
    %2944 = vmatpush1.bf16.msra.mxu0 0
    %2945 = vmatprep.subr.bf16.mxu0 0
    %2946 = vmatpush1.bf16.msra.mxu0 0
    %2947 = vmatprep.subr.bf16.mxu0 0
    %2948 = vmatpush1.bf16.msra.mxu0 0
    %2949 = vmatprep.subr.bf16.mxu0 0
    %2950 = vmatpush1.bf16.msra.mxu0 0
    %2951 = vmatprep.subr.bf16.mxu0 0
    %2952 = vmatpush1.bf16.msra.mxu0 0
    %2953 = vmatprep.mubr.bf16.mxu0 0
    %2954 = vmatmul.mubr.bf16.gmra.mrb[0].mxu0 %v2866
    %v2955 = vpop.f32.mrb[0].mxu0
    %v2956 = vadd.f32 0.0, %v2955
    %v2957 = vpop.f32.mrb[0].mxu0
    %v2958 = vadd.f32 0.0, %v2957
    %v2959 = vpop.f32.mrb[0].mxu0
    %v2960 = vpop.f32.mrb[0].mxu0
    %2961 = vdwg.mxu0
    %v2962 = vadd.f32 %v2815, %v2915
    %v2963 = vadd.f32 %v2816, %v2917
    %v2964 = vadd.f32 %v2817, %v2956
    %v2965 = vadd.f32 %v2818, %v2958
    %v2966 = vld [vmem:[#allocation2 + $0x2] sm:$0xff]
    %v2967 = vld [vmem:[#allocation2 + $0xa] sm:$0x3]
    %v2968 = vmul.bf16 %v2966, %v1529
    %v2969 = vmul.bf16 %v2967, %v1528
    %s2970 = scalar_lea.vmem %s6, 14
    %v2971 = vld [vmem:[%s2970] sm:$0x3]
    %v2974 = vcombine.high %v2968, %v2968
    %v2976 = vunpack.c.l.s4 1983009808
    %v2977 = vunpack.c.0.s8 %v2976
    %v2978 = vlaneseq
    %v2979 = vshrl.u32 %v2978, 7
    %v2980 = vsub.s32 %v2977, %v2979
    %v2981 = vrot.slane %v2968, %v2980
    %v2983 = vunpack.c.l.s4 1983009808
    %v2984 = vunpack.c.0.s8 %v2983
    %v2985 = vlaneseq
    %v2986 = vshrl.u32 %v2985, 7
    %v2987 = vsub.s32 %v2984, %v2986
    %v2988 = vrot.slane %v2974, %v2987
    %v2989 = vcombine.high %v2981, %v2981
    %v2990 = vcombine.high %v2988, %v2988
    %v2992 = vunpack.c.l.s4 1983009808
    %v2993 = vunpack.c.0.s8 %v2992
    %v2994 = vlaneseq
    %v2995 = vshrl.u32 %v2994, 7
    %v2996 = vsub.s32 %v2993, %v2995
    %v2997 = vrot.slane %v2969, %v2996
    %2998 = vrot.lane.b32.xlu0 %v2981, 112
    %v2999 = vpop.permute.xlu0 %2998
    %3000 = vrot.lane.b32.xlu0 %v2989, 112
    %v3001 = vpop.permute.xlu0 %3000
    %3002 = vrot.lane.b32.xlu0 %v2988, 112
    %v3003 = vpop.permute.xlu0 %3002
    %3004 = vrot.lane.b32.xlu0 %v2990, 112
    %v3005 = vpop.permute.xlu0 %3004
    %3006 = vrot.lane.b32.xlu0 %v2997, 112
    %v3007 = vpop.permute.xlu0 %3006
    %v3008 = vsel %vm239, %v2999, %v3001
    %v3009 = vsel %vm239, %v3001, %v3003
    %v3010 = vsel %vm239, %v3003, %v3005
    %v3011 = vsel %vm239, %v3005, %v3007
    %v3013 = vsel %vm288, %v2971, 0
    %v3016 = vsel %vm292, %v3008, 0
    %v3019 = vsel %vm292, %v3009, 0
    %v3022 = vsel %vm292, %v3010, 0
    %v3025 = vsel %vm292, %v3011, 0
    %3027 = vmatprep.subr.bf16.mxu0 %v3019
    %3028 = vmatpush1.bf16.msra.mxu0 %v3016
    %3029 = vmatprep.subr.bf16.mxu0 0
    %3030 = vmatpush1.bf16.msra.mxu0 0
    %3031 = vmatprep.subr.bf16.mxu0 0
    %3032 = vmatpush1.bf16.msra.mxu0 0
    %3033 = vmatprep.subr.bf16.mxu0 0
    %3034 = vmatpush1.bf16.msra.mxu0 0
    %3035 = vmatprep.subr.bf16.mxu0 0
    %3036 = vmatpush1.bf16.msra.mxu0 0
    %3037 = vmatprep.subr.bf16.mxu0 0
    %3038 = vmatpush1.bf16.msra.mxu0 0
    %3039 = vmatprep.subr.bf16.mxu0 0
    %3040 = vmatpush1.bf16.msra.mxu0 0
    %3041 = vmatprep.subr.bf16.mxu0 0
    %3042 = vmatpush1.bf16.msra.mxu0 0
    %3043 = vmatprep.subr.bf16.mxu0 0
    %3044 = vmatpush1.bf16.msra.mxu0 0
    %3045 = vmatprep.subr.bf16.mxu0 0
    %3046 = vmatpush1.bf16.msra.mxu0 0
    %3047 = vmatprep.subr.bf16.mxu0 0
    %3048 = vmatpush1.bf16.msra.mxu0 0
    %3049 = vmatprep.subr.bf16.mxu0 0
    %3050 = vmatpush1.bf16.msra.mxu0 0
    %3051 = vmatprep.subr.bf16.mxu0 0
    %3052 = vmatpush1.bf16.msra.mxu0 0
    %3053 = vmatprep.subr.bf16.mxu0 0
    %3054 = vmatpush1.bf16.msra.mxu0 0
    %3055 = vmatprep.subr.bf16.mxu0 0
    %3056 = vmatpush1.bf16.msra.mxu0 0
    %3057 = vmatprep.subr.bf16.mxu0 0
    %3058 = vmatpush1.bf16.msra.mxu0 0
    %3059 = vmatprep.mubr.bf16.mxu0 0
    %3060 = vmatmul.mubr.bf16.gmra.mrb[0].mxu0 %v3013
    %v3061 = vpop.f32.mrb[0].mxu0
    %v3062 = vadd.f32 0.0, %v3061
    %v3063 = vpop.f32.mrb[0].mxu0
    %v3064 = vadd.f32 0.0, %v3063
    %v3065 = vpop.f32.mrb[0].mxu0
    %v3066 = vpop.f32.mrb[0].mxu0
    %3067 = vdwg.mxu0
    %3068 = vmatprep.subr.bf16.mxu0 %v3025
    %3069 = vmatpush1.bf16.msra.mxu0 %v3022
    %3070 = vmatprep.subr.bf16.mxu0 0
    %3071 = vmatpush1.bf16.msra.mxu0 0
    %3072 = vmatprep.subr.bf16.mxu0 0
    %3073 = vmatpush1.bf16.msra.mxu0 0
    %3074 = vmatprep.subr.bf16.mxu0 0
    %3075 = vmatpush1.bf16.msra.mxu0 0
    %3076 = vmatprep.subr.bf16.mxu0 0
    %3077 = vmatpush1.bf16.msra.mxu0 0
    %3078 = vmatprep.subr.bf16.mxu0 0
    %3079 = vmatpush1.bf16.msra.mxu0 0
    %3080 = vmatprep.subr.bf16.mxu0 0
    %3081 = vmatpush1.bf16.msra.mxu0 0
    %3082 = vmatprep.subr.bf16.mxu0 0
    %3083 = vmatpush1.bf16.msra.mxu0 0
    %3084 = vmatprep.subr.bf16.mxu0 0
    %3085 = vmatpush1.bf16.msra.mxu0 0
    %3086 = vmatprep.subr.bf16.mxu0 0
    %3087 = vmatpush1.bf16.msra.mxu0 0
    %3088 = vmatprep.subr.bf16.mxu0 0
    %3089 = vmatpush1.bf16.msra.mxu0 0
    %3090 = vmatprep.subr.bf16.mxu0 0
    %3091 = vmatpush1.bf16.msra.mxu0 0
    %3092 = vmatprep.subr.bf16.mxu0 0
    %3093 = vmatpush1.bf16.msra.mxu0 0
    %3094 = vmatprep.subr.bf16.mxu0 0
    %3095 = vmatpush1.bf16.msra.mxu0 0
    %3096 = vmatprep.subr.bf16.mxu0 0
    %3097 = vmatpush1.bf16.msra.mxu0 0
    %3098 = vmatprep.subr.bf16.mxu0 0
    %3099 = vmatpush1.bf16.msra.mxu0 0
    %3100 = vmatprep.mubr.bf16.mxu0 0
    %3101 = vmatmul.mubr.bf16.gmra.mrb[0].mxu0 %v3013
    %v3102 = vpop.f32.mrb[0].mxu0
    %v3103 = vadd.f32 0.0, %v3102
    %v3104 = vpop.f32.mrb[0].mxu0
    %v3105 = vadd.f32 0.0, %v3104
    %v3106 = vpop.f32.mrb[0].mxu0
    %v3107 = vpop.f32.mrb[0].mxu0
    %3108 = vdwg.mxu0
    %v3109 = vadd.f32 %v2962, %v3062
    %v3110 = vadd.f32 %v2963, %v3064
    %v3111 = vadd.f32 %v2964, %v3103
    %v3112 = vadd.f32 %v2965, %v3105
    %v3113 = vld [vmem:[#allocation2 + $0x2] sm:$0xff]
    %v3114 = vld [vmem:[#allocation2 + $0xa] sm:$0x3]
    %v3115 = vmul.bf16 %v3113, %v1731
    %v3116 = vmul.bf16 %v3114, %v1730
    %s3117 = scalar_lea.vmem %s6, 16
    %v3118 = vld [vmem:[%s3117] sm:$0x3]
    %v3121 = vcombine.high %v3115, %v3115
    %v3123 = vunpack.c.l.s4 1983009808
    %v3124 = vunpack.c.0.s8 %v3123
    %v3125 = vlaneseq
    %v3126 = vshrl.u32 %v3125, 7
    %v3127 = vsub.s32 %v3124, %v3126
    %v3128 = vrot.slane %v3115, %v3127
    %v3130 = vunpack.c.l.s4 1983009808
    %v3131 = vunpack.c.0.s8 %v3130
    %v3132 = vlaneseq
    %v3133 = vshrl.u32 %v3132, 7
    %v3134 = vsub.s32 %v3131, %v3133
    %v3135 = vrot.slane %v3121, %v3134
    %v3136 = vcombine.high %v3128, %v3128
    %v3137 = vcombine.high %v3135, %v3135
    %v3139 = vunpack.c.l.s4 1983009808
    %v3140 = vunpack.c.0.s8 %v3139
    %v3141 = vlaneseq
    %v3142 = vshrl.u32 %v3141, 7
    %v3143 = vsub.s32 %v3140, %v3142
    %v3144 = vrot.slane %v3116, %v3143
    %3145 = vrot.lane.b32.xlu0 %v3128, 111
    %v3146 = vpop.permute.xlu0 %3145
    %3147 = vrot.lane.b32.xlu0 %v3136, 111
    %v3148 = vpop.permute.xlu0 %3147
    %3149 = vrot.lane.b32.xlu0 %v3135, 111
    %v3150 = vpop.permute.xlu0 %3149
    %3151 = vrot.lane.b32.xlu0 %v3137, 111
    %v3152 = vpop.permute.xlu0 %3151
    %3153 = vrot.lane.b32.xlu0 %v3144, 111
    %v3154 = vpop.permute.xlu0 %3153
    %v3155 = vsel %vm163, %v3146, %v3148
    %v3156 = vsel %vm163, %v3148, %v3150
    %v3157 = vsel %vm163, %v3150, %v3152
    %v3158 = vsel %vm163, %v3152, %v3154
    %v3160 = vsel %vm288, %v3118, 0
    %v3163 = vsel %vm292, %v3155, 0
    %v3166 = vsel %vm292, %v3156, 0
    %v3169 = vsel %vm292, %v3157, 0
    %v3172 = vsel %vm292, %v3158, 0
    %3174 = vmatprep.subr.bf16.mxu0 %v3166
    %3175 = vmatpush1.bf16.msra.mxu0 %v3163
    %3176 = vmatprep.subr.bf16.mxu0 0
    %3177 = vmatpush1.bf16.msra.mxu0 0
    %3178 = vmatprep.subr.bf16.mxu0 0
    %3179 = vmatpush1.bf16.msra.mxu0 0
    %3180 = vmatprep.subr.bf16.mxu0 0
    %3181 = vmatpush1.bf16.msra.mxu0 0
    %3182 = vmatprep.subr.bf16.mxu0 0
    %3183 = vmatpush1.bf16.msra.mxu0 0
    %3184 = vmatprep.subr.bf16.mxu0 0
    %3185 = vmatpush1.bf16.msra.mxu0 0
    %3186 = vmatprep.subr.bf16.mxu0 0
    %3187 = vmatpush1.bf16.msra.mxu0 0
    %3188 = vmatprep.subr.bf16.mxu0 0
    %3189 = vmatpush1.bf16.msra.mxu0 0
    %3190 = vmatprep.subr.bf16.mxu0 0
    %3191 = vmatpush1.bf16.msra.mxu0 0
    %3192 = vmatprep.subr.bf16.mxu0 0
    %3193 = vmatpush1.bf16.msra.mxu0 0
    %3194 = vmatprep.subr.bf16.mxu0 0
    %3195 = vmatpush1.bf16.msra.mxu0 0
    %3196 = vmatprep.subr.bf16.mxu0 0
    %3197 = vmatpush1.bf16.msra.mxu0 0
    %3198 = vmatprep.subr.bf16.mxu0 0
    %3199 = vmatpush1.bf16.msra.mxu0 0
    %3200 = vmatprep.subr.bf16.mxu0 0
    %3201 = vmatpush1.bf16.msra.mxu0 0
    %3202 = vmatprep.subr.bf16.mxu0 0
    %3203 = vmatpush1.bf16.msra.mxu0 0
    %3204 = vmatprep.subr.bf16.mxu0 0
    %3205 = vmatpush1.bf16.msra.mxu0 0
    %3206 = vmatprep.mubr.bf16.mxu0 0
    %3207 = vmatmul.mubr.bf16.gmra.mrb[0].mxu0 %v3160
    %v3208 = vpop.f32.mrb[0].mxu0
    %v3209 = vadd.f32 0.0, %v3208
    %v3210 = vpop.f32.mrb[0].mxu0
    %v3211 = vadd.f32 0.0, %v3210
    %v3212 = vpop.f32.mrb[0].mxu0
    %v3213 = vpop.f32.mrb[0].mxu0
    %3214 = vdwg.mxu0
    %3215 = vmatprep.subr.bf16.mxu0 %v3172
    %3216 = vmatpush1.bf16.msra.mxu0 %v3169
    %3217 = vmatprep.subr.bf16.mxu0 0
    %3218 = vmatpush1.bf16.msra.mxu0 0
    %3219 = vmatprep.subr.bf16.mxu0 0
    %3220 = vmatpush1.bf16.msra.mxu0 0
    %3221 = vmatprep.subr.bf16.mxu0 0
    %3222 = vmatpush1.bf16.msra.mxu0 0
    %3223 = vmatprep.subr.bf16.mxu0 0
    %3224 = vmatpush1.bf16.msra.mxu0 0
    %3225 = vmatprep.subr.bf16.mxu0 0
    %3226 = vmatpush1.bf16.msra.mxu0 0
    %3227 = vmatprep.subr.bf16.mxu0 0
    %3228 = vmatpush1.bf16.msra.mxu0 0
    %3229 = vmatprep.subr.bf16.mxu0 0
    %3230 = vmatpush1.bf16.msra.mxu0 0
    %3231 = vmatprep.subr.bf16.mxu0 0
    %3232 = vmatpush1.bf16.msra.mxu0 0
    %3233 = vmatprep.subr.bf16.mxu0 0
    %3234 = vmatpush1.bf16.msra.mxu0 0
    %3235 = vmatprep.subr.bf16.mxu0 0
    %3236 = vmatpush1.bf16.msra.mxu0 0
    %3237 = vmatprep.subr.bf16.mxu0 0
    %3238 = vmatpush1.bf16.msra.mxu0 0
    %3239 = vmatprep.subr.bf16.mxu0 0
    %3240 = vmatpush1.bf16.msra.mxu0 0
    %3241 = vmatprep.subr.bf16.mxu0 0
    %3242 = vmatpush1.bf16.msra.mxu0 0
    %3243 = vmatprep.subr.bf16.mxu0 0
    %3244 = vmatpush1.bf16.msra.mxu0 0
    %3245 = vmatprep.subr.bf16.mxu0 0
    %3246 = vmatpush1.bf16.msra.mxu0 0
    %3247 = vmatprep.mubr.bf16.mxu0 0
    %3248 = vmatmul.mubr.bf16.gmra.mrb[0].mxu0 %v3160
    %v3249 = vpop.f32.mrb[0].mxu0
    %v3250 = vadd.f32 0.0, %v3249
    %v3251 = vpop.f32.mrb[0].mxu0
    %v3252 = vadd.f32 0.0, %v3251
    %v3253 = vpop.f32.mrb[0].mxu0
    %v3254 = vpop.f32.mrb[0].mxu0
    %3255 = vdwg.mxu0
    %v3256 = vadd.f32 %v3109, %v3209
    %v3257 = vadd.f32 %v3110, %v3211
    %v3258 = vadd.f32 %v3111, %v3250
    %v3259 = vadd.f32 %v3112, %v3252
    %v3260 = vsel %vm1879, %v3256, 0.0
    %v3261 = vsel %vm1879, %v3257, 0.0
    %v3262 = vadd.f32 %v3260, %v3261
    %v3263 = vsel %vm1879, %v3258, 0.0
    %v3264 = vadd.f32 %v3262, %v3263
    %v3265 = vsel %vm1879, %v3259, 0.0
    %v3266 = vadd.f32 %v3264, %v3265
    %3267 = vadd.xlane.f32.xlu0 %v3266
    %v3268 = vpop.xlane.xlu0 %3267
    %v3269 = vmul.f32 %v3268, 0.001953125
    %v3270 = vmul.f32 %v3256, %v3256
    %v3271 = vmul.f32 %v3257, %v3257
    %v3272 = vmul.f32 %v3258, %v3258
    %v3273 = vmul.f32 %v3259, %v3259
    %v3274 = vsel %vm1879, %v3270, 0.0
    %v3275 = vsel %vm1879, %v3271, 0.0
    %v3276 = vadd.f32 %v3274, %v3275
    %v3277 = vsel %vm1879, %v3272, 0.0
    %v3278 = vadd.f32 %v3276, %v3277
    %v3279 = vsel %vm1879, %v3273, 0.0
    %v3280 = vadd.f32 %v3278, %v3279
    %3281 = vadd.xlane.f32.xlu0 %v3280
    %v3282 = vpop.xlane.xlu0 %3281
    %v3283 = vmul.f32 %v3282, 0.001953125
    %v3284 = vmul.f32 %v3269, %v3269
    %v3285 = vsub.f32 %v3283, %v3284
    %v3286 = vmax.f32 %v3285, 0.0
    %v3287 = vld [vmem:[%s7] sm:$0xf]
    %v3288 = vadd.f32 %v3286, 1e-05
    %v3289 = vrsqrt.pop %v3288
    %v3290 = vmul.f32 %v3287, %v3289
    %v3291 = vld [vmem:[%s8] sm:$0xf]
    %v3292 = vmul.f32 %v3269, %v3290
    %v3293 = vsub.f32 %v3291, %v3292
    %3295 = vset.pattern.permute.xlu0 0
    %3296 = vperm.xlu0 %3295, %v3290
    %v3297 = vpop.permute.xlu0 %3296
    %v3299 = vmul.f32 %v3256, %v3297
    %v3300 = vmul.f32 %v3257, %v3297
    %v3301 = vmul.f32 %v3258, %v3297
    %v3302 = vmul.f32 %v3259, %v3297
    %3304 = vset.pattern.permute.xlu0 0
    %3305 = vperm.xlu0 %3304, %v3293
    %v3306 = vpop.permute.xlu0 %3305
    %v3308 = vadd.f32 %v3299, %v3306
    %v3309 = vadd.f32 %v3300, %v3306
    %v3310 = vadd.f32 %v3301, %v3306
    %v3311 = vadd.f32 %v3302, %v3306
    %v3316 = vcombine.low %v3308, %v3309
    %v3317 = vcombine.low %v3310, %v3311
    %v3320 = vadd.f32 %v56, %v3316
    %v3321 = vadd.f32 %v57, %v3317
    %3322 = vst [vmem:[#allocation4] sm:$0xff] %v3320
    %3323 = vst [vmem:[#allocation4 + $0x8] sm:$0xff] %v3321
    // Predicated region
    $region38: #{tpu_custom_call.1} parent=1 // pred_check
      _
    $region39: #{tpu_custom_call.1} parent=1 // pred_check_branch
      %3325 = sbr.rel (0) target = $region41
    $region40: #{tpu_custom_call.1} parent=1 // pred_region
      %s3327 = ssub.s32 256, 256
      %3328 = vsyncadd [#allocation5], %s3327
      %s3330 = sshll.u32 [#allocation4], 4
      %s3331 = int_to_ptr.vmem [resolvable:$true] %s3330
      %3333 = dma.vmem_to_hbm [thread:$0]  %s3331, 256, %s9, [#allocation5]
    $region41: #{tpu_custom_call.1} parent=1 // pred_fallthru
      _
    // Predicated region
    $region42: #{tpu_custom_call.1} parent=1 // pred_check
      _
    $region43: #{tpu_custom_call.1} parent=1 // pred_check_branch
      %3335 = sbr.rel (0) target = $region45
    $region44: #{tpu_custom_call.1} parent=1 // pred_region
      %3336 = dma.done [#allocation5], 256
    $region45: #{tpu_custom_call.1} parent=1 // pred_fallthru
      _
    %3337 = vsyncpa [#allocation5], 1

</llo_original>
